<compile_context>
chip_gen: v6e
topology: v6e:2x2x1
jax: 0.10.0
libtpu: 0.0.40
codegen_flags: <defaults>
</compile_context>

<pallas_src>
import functools

import jax
import jax.numpy as jnp
from jax import lax
from jax.experimental import pallas as pl
from jax.experimental.pallas import tpu as pltpu


# ----------------------------------------------------------------------------
# Fused Fire kernel: one batch element per grid step, channels-on-sublanes.
# ----------------------------------------------------------------------------
def _fire_kernel(x_ref, wsq_ref, bsq_ref, w1_ref, b1_ref, w3_ref, b3_ref,
                 mask_ref, o_ref, sp_ref, *, D, H, W, S, E1, E3, P,
                 use_bypass):
    """Fused Fire forward for one batch element (transposed layout).

    x_ref   : (1, C, M)     NCDHW input, spatial dims flattened (M = D*H*W)
    wsq_ref : (S, C)        BN-folded squeeze 1x1x1 weight (transposed)
    bsq_ref : (S, 1)        BN-folded squeeze bias
    w1_ref  : (E1, S)       BN-folded expand1x1 weight (transposed)
    b1_ref  : (E1, 1)       BN-folded expand1x1 bias
    w3_ref  : (27, E3, S)   BN-folded expand3x3 weight, one (E3, S) per tap
    b3_ref  : (E3, 1)       BN-folded expand3x3 bias
    mask_ref: (27, M)       1.0 where the tap's neighbour is inside the volume
    o_ref   : (1, E, M)     output (E = E1 + E3), still NCDHW-flattened
    sp_ref  : (S, P+M+P)    VMEM scratch: squeeze map with lane-aligned wings
    """
    M = D * H * W
    HW = H * W
    x = x_ref[0]                                              # (C, M)

    # ---- squeeze 1x1x1 conv + folded BN + ReLU (MXU, pixels on lanes) ------
    s = jnp.dot(wsq_ref[...], x, preferred_element_type=jnp.float32)
    s = jnp.maximum(s + bsq_ref[...], 0.0)                    # (S, M)

    # ---- lane-contiguous squeeze map; tap t is the window at P + delta_t ---
    sp_ref[:, :P] = jnp.zeros((S, P), jnp.float32)            # zero wings only
    sp_ref[:, M + P:M + 2 * P] = jnp.zeros((S, P), jnp.float32)
    sp_ref[:, P:P + M] = s

    # ---- expand1x1 path (K = S), straight from the squeeze activation ------
    y1 = jnp.dot(w1_ref[...], s, preferred_element_type=jnp.float32)
    y1 = y1 + b1_ref[...]                                     # (E1, M)

    # ---- expand3x3x3 path: 27 shifted taps, boundary-masked, accumulated ---
    y3 = jnp.zeros((E3, M), jnp.float32)
    t = 0
    for kd in range(3):
        for kh in range(3):
            for kw in range(3):
                if kd == 1 and kh == 1 and kw == 1:
                    tap = s                                   # centre tap
                else:
                    delta = (kd - 1) * HW + (kh - 1) * W + (kw - 1)
                    tap = sp_ref[:, P + delta:P + delta + M]  # (S, M)
                    tap = tap * mask_ref[t:t + 1, :]          # zero OOB taps
                y3 = y3 + jnp.dot(w3_ref[t], tap,
                                  preferred_element_type=jnp.float32)
                t += 1
    y3 = y3 + b3_ref[...]                                     # (E3, M)

    # ---- concat (channel axis = sublanes), bypass, ReLU, store -------------
    if use_bypass:                         # wrapper asserts C == E1 + E3
        y1 = y1 + x[:E1, :]
        y3 = y3 + x[E1:E1 + E3, :]
    out = jnp.concatenate([jnp.maximum(y1, 0.0), jnp.maximum(y3, 0.0)], axis=0)
    o_ref[0] = out.astype(o_ref.dtype)


def fire_fused(x2, wsq_t, bsq, we1_t, be1, we3_t, be3, masks, *, D, H, W, S,
               E1, E3, use_bypass):
    """x2: (N, C, M) NCDHW-flattened input; returns (N, E1+E3, M)."""
    N, C, M = x2.shape
    E = E1 + E3
    max_shift = H * W + W + 1
    P = ((max_shift + 127) // 128) * 128          # lane-aligned wing width

    kernel = functools.partial(_fire_kernel, D=D, H=H, W=W, S=S, E1=E1,
                               E3=E3, P=P, use_bypass=use_bypass)
    return pl.pallas_call(
        kernel,
        out_shape=jax.ShapeDtypeStruct((N, E, M), jnp.float32),
        grid_spec=pltpu.PrefetchScalarGridSpec(
            num_scalar_prefetch=0,
            grid=(N,),
            in_specs=[
                pl.BlockSpec((1, C, M), lambda n: (n, 0, 0)),
                pl.BlockSpec((S, C), lambda n: (0, 0)),
                pl.BlockSpec((S, 1), lambda n: (0, 0)),
                pl.BlockSpec((E1, S), lambda n: (0, 0)),
                pl.BlockSpec((E1, 1), lambda n: (0, 0)),
                pl.BlockSpec((27, E3, S), lambda n: (0, 0, 0)),
                pl.BlockSpec((E3, 1), lambda n: (0, 0)),
                pl.BlockSpec((27, M), lambda n: (0, 0)),
            ],
            out_specs=pl.BlockSpec((1, E, M), lambda n: (n, 0, 0)),
            scratch_shapes=[pltpu.VMEM((S, M + 2 * P), jnp.float32)],
        ),
        compiler_params=pltpu.CompilerParams(
            dimension_semantics=("parallel",),
            vmem_limit_bytes=32 * 1024 * 1024,    # helps v5e's 16 MiB default
        ),
    )(x2, wsq_t, bsq, we1_t, be1, we3_t, be3, masks)


# ----------------------------------------------------------------------------
# Fire module wrapper: parameters, BN folding, layout glue, reference.
# ----------------------------------------------------------------------------
class FirePallas:
    def __init__(self, inplanes, squeeze_planes, expand1x1_planes,
                 expand3x3_planes, use_bypass=False, key=None, eps=1e-5):
        self.use_bypass = use_bypass
        self.eps = eps
        self.C = inplanes
        self.S = squeeze_planes
        self.E1 = expand1x1_planes
        self.E3 = expand3x3_planes
        self.E = expand1x1_planes + expand3x3_planes

        kit = iter(jax.random.split(key, 20))   # 18 consumed; headroom

        def conv_w(shape, fan_in):
            return (jax.random.normal(next(kit), shape, jnp.float32)
                    * (1.0 / jnp.sqrt(fan_in)))

        # Raw (un-folded) parameters — kept for the pure-JAX reference.
        self.wsq = conv_w((inplanes, squeeze_planes), inplanes)          # (C,S)
        self.bsq = 0.1 * jax.random.normal(next(kit), (1, squeeze_planes))
        self.we1 = conv_w((squeeze_planes, expand1x1_planes), squeeze_planes)
        self.be1 = 0.1 * jax.random.normal(next(kit), (1, expand1x1_planes))
        self.we3 = conv_w((3, 3, 3, squeeze_planes, expand3x3_planes),   # DHWIO
                          27 * squeeze_planes)
        self.be3 = 0.1 * jax.random.normal(next(kit), (1, expand3x3_planes))

        def bn_params(c):
            gamma = 1.0 + 0.1 * jax.random.normal(next(kit), (c,))
            beta = 0.1 * jax.random.normal(next(kit), (c,))
            rmean = 0.1 * jax.random.normal(next(kit), (c,))
            rvar = jnp.abs(1.0 + 0.1 * jax.random.normal(next(kit), (c,)))
            scale = gamma / jnp.sqrt(rvar + eps)
            shift = beta - rmean * scale
            return scale.reshape(1, c), shift.reshape(1, c)

        self.sq_scale, self.sq_shift = bn_params(squeeze_planes)
        self.e1_scale, self.e1_shift = bn_params(expand1x1_planes)
        self.e3_scale, self.e3_shift = bn_params(expand3x3_planes)

        # ---- fold eval-mode BN and transpose to the kernel's layout --------
        S, E3 = squeeze_planes, expand3x3_planes
        self.wsq_t = jnp.transpose(self.wsq * self.sq_scale)               # (S,C)
        self.bsq_t = jnp.transpose(self.bsq * self.sq_scale + self.sq_shift)  # (S,1)
        self.we1_t = jnp.transpose(self.we1 * self.e1_scale)               # (E1,S)
        self.be1_t = jnp.transpose(self.be1 * self.e1_scale + self.e1_shift)  # (E1,1)
        w3f = (self.we3 * self.e3_scale).reshape(27, S, E3)   # tap-major rows
        self.we3_t = jnp.transpose(w3f, (0, 2, 1))                         # (27,E3,S)
        self.be3_t = jnp.transpose(self.be3 * self.e3_scale + self.e3_shift)  # (E3,1)

    @staticmethod
    def _tap_masks(D, H, W):
        """(27, D*H*W) float mask: 1.0 where the tap neighbour is in-volume."""
        d = jnp.arange(D).reshape(D, 1, 1)
        h = jnp.arange(H).reshape(1, H, 1)
        w = jnp.arange(W).reshape(1, 1, W)
        rows = []
        for kd in range(3):
            for kh in range(3):
                for kw in range(3):
                    od, oh, ow = kd - 1, kh - 1, kw - 1
                    valid = ((d + od >= 0) & (d + od < D) &
                             (h + oh >= 0) & (h + oh < H) &
                             (w + ow >= 0) & (w + ow < W))
                    rows.append(jnp.broadcast_to(valid, (D, H, W)).reshape(-1))
        return jnp.stack(rows, axis=0).astype(jnp.float32)

    def __call__(self, x_ncdhw):
        x = x_ncdhw.astype(jnp.float32)
        N, C, D, H, W = x.shape
        M = D * H * W
        if self.use_bypass:
            assert C == self.E, "bypass requires inplanes == expand1x1 + expand3x3"
        masks = self._tap_masks(D, H, W)
        out = fire_fused(x.reshape(N, C, M),              # free reshape (NCDHW)
                         self.wsq_t, self.bsq_t,
                         self.we1_t, self.be1_t,
                         self.we3_t, self.be3_t, masks,
                         D=D, H=H, W=W, S=self.S, E1=self.E1, E3=self.E3,
                         use_bypass=self.use_bypass)
        return out.reshape(N, self.E, D, H, W)            # still NCDHW

    # Pure-JAX reference (un-folded eval-mode BN) for verification.
    def reference(self, x_ncdhw):
        hp = lax.Precision.HIGHEST
        x = jnp.transpose(x_ncdhw, (0, 2, 3, 4, 1)).astype(jnp.float32)
        y = jnp.einsum('ndhwc,cs->ndhws', x, self.wsq, precision=hp) + self.bsq
        y = jnp.maximum(y * self.sq_scale + self.sq_shift, 0.0)
        y1 = jnp.einsum('ndhws,se->ndhwe', y, self.we1, precision=hp) + self.be1
        y1 = y1 * self.e1_scale + self.e1_shift
        y3 = lax.conv_general_dilated(
            y, self.we3, window_strides=(1, 1, 1), padding='SAME',
            dimension_numbers=('NDHWC', 'DHWIO', 'NDHWC'),
            precision=hp) + self.be3
        y3 = y3 * self.e3_scale + self.e3_shift
        out = jnp.concatenate([y1, y3], axis=-1)
        if self.use_bypass:
            out = out + x
        out = jnp.maximum(out, 0.0)
        return jnp.transpose(out, (0, 4, 1, 2, 3))


if __name__ == "__main__":
    key = jax.random.PRNGKey(0)
    kx, kp = jax.random.split(key)

    # Small shapes consistent with a 3D Fire block; bypass requires
    # inplanes == expand1x1 + expand3x3.  M = D*H*W = 256 (lane-dense).
    N, C, D, H, W = 2, 16, 4, 8, 8
    fire = FirePallas(inplanes=C, squeeze_planes=4,
                      expand1x1_planes=8, expand3x3_planes=8,
                      use_bypass=True, key=kp)

    x = jax.random.normal(kx, (N, C, D, H, W), jnp.float32)  # NCDHW like torch

    out = jax.block_until_ready(fire(x))
    ref = jax.block_until_ready(fire.reference(x))

    assert out.shape == (N, 16, D, H, W), out.shape
    err = float(jnp.max(jnp.abs(out - ref)))
    # Tolerance leaves headroom for possible bf16-pass MXU defaults on either
    # path while still catching any structural error (wrong tap / mask / bias
    # / BN-fold mistakes show up at >= 1e-1).
    assert err < 2e-2, f"max abs err vs reference = {err}"
    print("KERNEL_OK")
</pallas_src>

<mosaic_0001>
module attributes {stable_mosaic.version = 11 : i64} {
  func.func @_fire_kernel(%arg0: i32, %arg1: memref<1x16x256xf32, #tpu.memory_space<vmem>>, %arg2: memref<4x16xf32, #tpu.memory_space<vmem>>, %arg3: memref<4x1xf32, #tpu.memory_space<vmem>>, %arg4: memref<8x4xf32, #tpu.memory_space<vmem>>, %arg5: memref<8x1xf32, #tpu.memory_space<vmem>>, %arg6: memref<27x8x4xf32, #tpu.memory_space<vmem>>, %arg7: memref<8x1xf32, #tpu.memory_space<vmem>>, %arg8: memref<27x256xf32, #tpu.memory_space<vmem>>, %arg9: memref<1x16x256xf32, #tpu.memory_space<vmem>>, %arg10: memref<4x512xf32, #tpu.memory_space<vmem>>) attributes {dimension_semantics = [#tpu.dimension_semantics<parallel>], iteration_bounds = array<i64: 2>, scalar_prefetch = 0 : i64, scratch_operands = 1 : i64, tpu.core_type = #tpu.core_type<tc>, window_params = [{transform_indices = @transform_0, window_bounds = array<i64: 1, 16, 256>}, {pipeline_mode = #tpu.pipeline_mode<synchronous>, transform_indices = @transform_1, window_bounds = array<i64: 4, 16>}, {pipeline_mode = #tpu.pipeline_mode<synchronous>, transform_indices = @transform_2, window_bounds = array<i64: 4, 1>}, {pipeline_mode = #tpu.pipeline_mode<synchronous>, transform_indices = @transform_3, window_bounds = array<i64: 8, 4>}, {pipeline_mode = #tpu.pipeline_mode<synchronous>, transform_indices = @transform_4, window_bounds = array<i64: 8, 1>}, {pipeline_mode = #tpu.pipeline_mode<synchronous>, transform_indices = @transform_5, window_bounds = array<i64: 27, 8, 4>}, {pipeline_mode = #tpu.pipeline_mode<synchronous>, transform_indices = @transform_6, window_bounds = array<i64: 8, 1>}, {pipeline_mode = #tpu.pipeline_mode<synchronous>, transform_indices = @transform_7, window_bounds = array<i64: 27, 256>}, {transform_indices = @transform_8, window_bounds = array<i64: 1, 16, 256>}]} {
    %c0 = arith.constant 0 : index
    %c0_0 = arith.constant 0 : index
    %c0_1 = arith.constant 0 : index
    %0 = vector.load %arg1[%c0, %c0_0, %c0_1] : memref<1x16x256xf32, #tpu.memory_space<vmem>>, vector<1x16x256xf32>
    %1 = vector.shape_cast %0 : vector<1x16x256xf32> to vector<16x256xf32>
    %c0_2 = arith.constant 0 : index
    %c0_3 = arith.constant 0 : index
    %2 = vector.load %arg2[%c0_2, %c0_3] : memref<4x16xf32, #tpu.memory_space<vmem>>, vector<4x16xf32>
    %cst = arith.constant dense<0.000000e+00> : vector<4x256xf32>
    %3 = tpu.matmul %2, %1, %cst {dimension_numbers = #tpu.dot_dimension_numbers<[1], [0], [0], [1], [0, 0, 1, 1], [], []>} : vector<4x16xf32>, vector<16x256xf32>, vector<4x256xf32> -> vector<4x256xf32>
    %c0_4 = arith.constant 0 : index
    %c0_5 = arith.constant 0 : index
    %4 = vector.load %arg3[%c0_4, %c0_5] : memref<4x1xf32, #tpu.memory_space<vmem>>, vector<4x1xf32>
    %5 = vector.broadcast %4 : vector<4x1xf32> to vector<4x256xf32>
    %6 = arith.addf %3, %5 : vector<4x256xf32>
    %cst_6 = arith.constant 0.000000e+00 : f32
    %7 = vector.broadcast %cst_6 : f32 to vector<4x256xf32>
    %8 = arith.maximumf %6, %7 : vector<4x256xf32>
    %cst_7 = arith.constant 0.000000e+00 : f32
    %9 = vector.broadcast %cst_7 : f32 to vector<4x128xf32>
    %c0_8 = arith.constant 0 : index
    %c0_9 = arith.constant 0 : index
    %10 = vector.load %arg10[%c0_8, %c0_9] : memref<4x512xf32, #tpu.memory_space<vmem>>, vector<4x128xf32>
    tpu.vector_store %arg10[%c0_8, %c0_9], %9 {strides = array<i32>} : memref<4x512xf32, #tpu.memory_space<vmem>>, vector<4x128xf32>,
    %cst_10 = arith.constant 0.000000e+00 : f32
    %11 = vector.broadcast %cst_10 : f32 to vector<4x128xf32>
    %c0_11 = arith.constant 0 : index
    %c384 = arith.constant 384 : index
    %12 = vector.load %arg10[%c0_11, %c384] : memref<4x512xf32, #tpu.memory_space<vmem>>, vector<4x128xf32>
    tpu.vector_store %arg10[%c0_11, %c384], %11 {strides = array<i32>} : memref<4x512xf32, #tpu.memory_space<vmem>>, vector<4x128xf32>,
    %c0_12 = arith.constant 0 : index
    %c128 = arith.constant 128 : index
    %13 = vector.load %arg10[%c0_12, %c128] : memref<4x512xf32, #tpu.memory_space<vmem>>, vector<4x256xf32>
    tpu.vector_store %arg10[%c0_12, %c128], %8 {strides = array<i32>} : memref<4x512xf32, #tpu.memory_space<vmem>>, vector<4x256xf32>,
    %c0_13 = arith.constant 0 : index
    %c0_14 = arith.constant 0 : index
    %14 = vector.load %arg4[%c0_13, %c0_14] : memref<8x4xf32, #tpu.memory_space<vmem>>, vector<8x4xf32>
    %cst_15 = arith.constant dense<0.000000e+00> : vector<8x256xf32>
    %15 = tpu.matmul %14, %8, %cst_15 {dimension_numbers = #tpu.dot_dimension_numbers<[1], [0], [0], [1], [0, 0, 1, 1], [], []>} : vector<8x4xf32>, vector<4x256xf32>, vector<8x256xf32> -> vector<8x256xf32>
    %c0_16 = arith.constant 0 : index
    %c0_17 = arith.constant 0 : index
    %16 = vector.load %arg5[%c0_16, %c0_17] : memref<8x1xf32, #tpu.memory_space<vmem>>, vector<8x1xf32>
    %17 = vector.broadcast %16 : vector<8x1xf32> to vector<8x256xf32>
    %18 = arith.addf %15, %17 : vector<8x256xf32>
    %cst_18 = arith.constant 0.000000e+00 : f32
    %19 = vector.broadcast %cst_18 : f32 to vector<8x256xf32>
    %c0_19 = arith.constant 0 : index
    %c55 = arith.constant 55 : index
    %20 = vector.load %arg10[%c0_19, %c55] : memref<4x512xf32, #tpu.memory_space<vmem>>, vector<4x256xf32>
    %c0_20 = arith.constant 0 : index
    %c0_21 = arith.constant 0 : index
    %21 = vector.load %arg8[%c0_20, %c0_21] : memref<27x256xf32, #tpu.memory_space<vmem>>, vector<1x256xf32>
    %22 = vector.broadcast %21 : vector<1x256xf32> to vector<4x256xf32>
    %23 = arith.mulf %20, %22 : vector<4x256xf32>
    %c0_22 = arith.constant 0 : index
    %c0_23 = arith.constant 0 : index
    %c0_24 = arith.constant 0 : index
    %24 = vector.load %arg6[%c0_22, %c0_23, %c0_24] : memref<27x8x4xf32, #tpu.memory_space<vmem>>, vector<1x8x4xf32>
    %25 = vector.shape_cast %24 : vector<1x8x4xf32> to vector<8x4xf32>
    %cst_25 = arith.constant dense<0.000000e+00> : vector<8x256xf32>
    %26 = tpu.matmul %25, %23, %cst_25 {dimension_numbers = #tpu.dot_dimension_numbers<[1], [0], [0], [1], [0, 0, 1, 1], [], []>} : vector<8x4xf32>, vector<4x256xf32>, vector<8x256xf32> -> vector<8x256xf32>
    %27 = arith.addf %19, %26 : vector<8x256xf32>
    %c0_26 = arith.constant 0 : index
    %c56 = arith.constant 56 : index
    %28 = vector.load %arg10[%c0_26, %c56] : memref<4x512xf32, #tpu.memory_space<vmem>>, vector<4x256xf32>
    %c1 = arith.constant 1 : index
    %c0_27 = arith.constant 0 : index
    %29 = vector.load %arg8[%c1, %c0_27] : memref<27x256xf32, #tpu.memory_space<vmem>>, vector<1x256xf32>
    %30 = vector.broadcast %29 : vector<1x256xf32> to vector<4x256xf32>
    %31 = arith.mulf %28, %30 : vector<4x256xf32>
    %c1_28 = arith.constant 1 : index
    %c0_29 = arith.constant 0 : index
    %c0_30 = arith.constant 0 : index
    %32 = vector.load %arg6[%c1_28, %c0_29, %c0_30] : memref<27x8x4xf32, #tpu.memory_space<vmem>>, vector<1x8x4xf32>
    %33 = vector.shape_cast %32 : vector<1x8x4xf32> to vector<8x4xf32>
    %cst_31 = arith.constant dense<0.000000e+00> : vector<8x256xf32>
    %34 = tpu.matmul %33, %31, %cst_31 {dimension_numbers = #tpu.dot_dimension_numbers<[1], [0], [0], [1], [0, 0, 1, 1], [], []>} : vector<8x4xf32>, vector<4x256xf32>, vector<8x256xf32> -> vector<8x256xf32>
    %35 = arith.addf %27, %34 : vector<8x256xf32>
    %c0_32 = arith.constant 0 : index
    %c57 = arith.constant 57 : index
    %36 = vector.load %arg10[%c0_32, %c57] : memref<4x512xf32, #tpu.memory_space<vmem>>, vector<4x256xf32>
    %c2 = arith.constant 2 : index
    %c0_33 = arith.constant 0 : index
    %37 = vector.load %arg8[%c2, %c0_33] : memref<27x256xf32, #tpu.memory_space<vmem>>, vector<1x256xf32>
    %38 = vector.broadcast %37 : vector<1x256xf32> to vector<4x256xf32>
    %39 = arith.mulf %36, %38 : vector<4x256xf32>
    %c2_34 = arith.constant 2 : index
    %c0_35 = arith.constant 0 : index
    %c0_36 = arith.constant 0 : index
    %40 = vector.load %arg6[%c2_34, %c0_35, %c0_36] : memref<27x8x4xf32, #tpu.memory_space<vmem>>, vector<1x8x4xf32>
    %41 = vector.shape_cast %40 : vector<1x8x4xf32> to vector<8x4xf32>
    %cst_37 = arith.constant dense<0.000000e+00> : vector<8x256xf32>
    %42 = tpu.matmul %41, %39, %cst_37 {dimension_numbers = #tpu.dot_dimension_numbers<[1], [0], [0], [1], [0, 0, 1, 1], [], []>} : vector<8x4xf32>, vector<4x256xf32>, vector<8x256xf32> -> vector<8x256xf32>
    %43 = arith.addf %35, %42 : vector<8x256xf32>
    %c0_38 = arith.constant 0 : index
    %c63 = arith.constant 63 : index
    %44 = vector.load %arg10[%c0_38, %c63] : memref<4x512xf32, #tpu.memory_space<vmem>>, vector<4x256xf32>
    %c3 = arith.constant 3 : index
    %c0_39 = arith.constant 0 : index
    %45 = vector.load %arg8[%c3, %c0_39] : memref<27x256xf32, #tpu.memory_space<vmem>>, vector<1x256xf32>
    %46 = vector.broadcast %45 : vector<1x256xf32> to vector<4x256xf32>
    %47 = arith.mulf %44, %46 : vector<4x256xf32>
    %c3_40 = arith.constant 3 : index
    %c0_41 = arith.constant 0 : index
    %c0_42 = arith.constant 0 : index
    %48 = vector.load %arg6[%c3_40, %c0_41, %c0_42] : memref<27x8x4xf32, #tpu.memory_space<vmem>>, vector<1x8x4xf32>
    %49 = vector.shape_cast %48 : vector<1x8x4xf32> to vector<8x4xf32>
    %cst_43 = arith.constant dense<0.000000e+00> : vector<8x256xf32>
    %50 = tpu.matmul %49, %47, %cst_43 {dimension_numbers = #tpu.dot_dimension_numbers<[1], [0], [0], [1], [0, 0, 1, 1], [], []>} : vector<8x4xf32>, vector<4x256xf32>, vector<8x256xf32> -> vector<8x256xf32>
    %51 = arith.addf %43, %50 : vector<8x256xf32>
    %c0_44 = arith.constant 0 : index
    %c64 = arith.constant 64 : index
    %52 = vector.load %arg10[%c0_44, %c64] : memref<4x512xf32, #tpu.memory_space<vmem>>, vector<4x256xf32>
    %c4 = arith.constant 4 : index
    %c0_45 = arith.constant 0 : index
    %53 = vector.load %arg8[%c4, %c0_45] : memref<27x256xf32, #tpu.memory_space<vmem>>, vector<1x256xf32>
    %54 = vector.broadcast %53 : vector<1x256xf32> to vector<4x256xf32>
    %55 = arith.mulf %52, %54 : vector<4x256xf32>
    %c4_46 = arith.constant 4 : index
    %c0_47 = arith.constant 0 : index
    %c0_48 = arith.constant 0 : index
    %56 = vector.load %arg6[%c4_46, %c0_47, %c0_48] : memref<27x8x4xf32, #tpu.memory_space<vmem>>, vector<1x8x4xf32>
    %57 = vector.shape_cast %56 : vector<1x8x4xf32> to vector<8x4xf32>
    %cst_49 = arith.constant dense<0.000000e+00> : vector<8x256xf32>
    %58 = tpu.matmul %57, %55, %cst_49 {dimension_numbers = #tpu.dot_dimension_numbers<[1], [0], [0], [1], [0, 0, 1, 1], [], []>} : vector<8x4xf32>, vector<4x256xf32>, vector<8x256xf32> -> vector<8x256xf32>
    %59 = arith.addf %51, %58 : vector<8x256xf32>
    %c0_50 = arith.constant 0 : index
    %c65 = arith.constant 65 : index
    %60 = vector.load %arg10[%c0_50, %c65] : memref<4x512xf32, #tpu.memory_space<vmem>>, vector<4x256xf32>
    %c5 = arith.constant 5 : index
    %c0_51 = arith.constant 0 : index
    %61 = vector.load %arg8[%c5, %c0_51] : memref<27x256xf32, #tpu.memory_space<vmem>>, vector<1x256xf32>
    %62 = vector.broadcast %61 : vector<1x256xf32> to vector<4x256xf32>
    %63 = arith.mulf %60, %62 : vector<4x256xf32>
    %c5_52 = arith.constant 5 : index
    %c0_53 = arith.constant 0 : index
    %c0_54 = arith.constant 0 : index
    %64 = vector.load %arg6[%c5_52, %c0_53, %c0_54] : memref<27x8x4xf32, #tpu.memory_space<vmem>>, vector<1x8x4xf32>
    %65 = vector.shape_cast %64 : vector<1x8x4xf32> to vector<8x4xf32>
    %cst_55 = arith.constant dense<0.000000e+00> : vector<8x256xf32>
    %66 = tpu.matmul %65, %63, %cst_55 {dimension_numbers = #tpu.dot_dimension_numbers<[1], [0], [0], [1], [0, 0, 1, 1], [], []>} : vector<8x4xf32>, vector<4x256xf32>, vector<8x256xf32> -> vector<8x256xf32>
    %67 = arith.addf %59, %66 : vector<8x256xf32>
    %c0_56 = arith.constant 0 : index
    %c71 = arith.constant 71 : index
    %68 = vector.load %arg10[%c0_56, %c71] : memref<4x512xf32, #tpu.memory_space<vmem>>, vector<4x256xf32>
    %c6 = arith.constant 6 : index
    %c0_57 = arith.constant 0 : index
    %69 = vector.load %arg8[%c6, %c0_57] : memref<27x256xf32, #tpu.memory_space<vmem>>, vector<1x256xf32>
    %70 = vector.broadcast %69 : vector<1x256xf32> to vector<4x256xf32>
    %71 = arith.mulf %68, %70 : vector<4x256xf32>
    %c6_58 = arith.constant 6 : index
    %c0_59 = arith.constant 0 : index
    %c0_60 = arith.constant 0 : index
    %72 = vector.load %arg6[%c6_58, %c0_59, %c0_60] : memref<27x8x4xf32, #tpu.memory_space<vmem>>, vector<1x8x4xf32>
    %73 = vector.shape_cast %72 : vector<1x8x4xf32> to vector<8x4xf32>
    %cst_61 = arith.constant dense<0.000000e+00> : vector<8x256xf32>
    %74 = tpu.matmul %73, %71, %cst_61 {dimension_numbers = #tpu.dot_dimension_numbers<[1], [0], [0], [1], [0, 0, 1, 1], [], []>} : vector<8x4xf32>, vector<4x256xf32>, vector<8x256xf32> -> vector<8x256xf32>
    %75 = arith.addf %67, %74 : vector<8x256xf32>
    %c0_62 = arith.constant 0 : index
    %c72 = arith.constant 72 : index
    %76 = vector.load %arg10[%c0_62, %c72] : memref<4x512xf32, #tpu.memory_space<vmem>>, vector<4x256xf32>
    %c7 = arith.constant 7 : index
    %c0_63 = arith.constant 0 : index
    %77 = vector.load %arg8[%c7, %c0_63] : memref<27x256xf32, #tpu.memory_space<vmem>>, vector<1x256xf32>
    %78 = vector.broadcast %77 : vector<1x256xf32> to vector<4x256xf32>
    %79 = arith.mulf %76, %78 : vector<4x256xf32>
    %c7_64 = arith.constant 7 : index
    %c0_65 = arith.constant 0 : index
    %c0_66 = arith.constant 0 : index
    %80 = vector.load %arg6[%c7_64, %c0_65, %c0_66] : memref<27x8x4xf32, #tpu.memory_space<vmem>>, vector<1x8x4xf32>
    %81 = vector.shape_cast %80 : vector<1x8x4xf32> to vector<8x4xf32>
    %cst_67 = arith.constant dense<0.000000e+00> : vector<8x256xf32>
    %82 = tpu.matmul %81, %79, %cst_67 {dimension_numbers = #tpu.dot_dimension_numbers<[1], [0], [0], [1], [0, 0, 1, 1], [], []>} : vector<8x4xf32>, vector<4x256xf32>, vector<8x256xf32> -> vector<8x256xf32>
    %83 = arith.addf %75, %82 : vector<8x256xf32>
    %c0_68 = arith.constant 0 : index
    %c73 = arith.constant 73 : index
    %84 = vector.load %arg10[%c0_68, %c73] : memref<4x512xf32, #tpu.memory_space<vmem>>, vector<4x256xf32>
    %c8 = arith.constant 8 : index
    %c0_69 = arith.constant 0 : index
    %85 = vector.load %arg8[%c8, %c0_69] : memref<27x256xf32, #tpu.memory_space<vmem>>, vector<1x256xf32>
    %86 = vector.broadcast %85 : vector<1x256xf32> to vector<4x256xf32>
    %87 = arith.mulf %84, %86 : vector<4x256xf32>
    %c8_70 = arith.constant 8 : index
    %c0_71 = arith.constant 0 : index
    %c0_72 = arith.constant 0 : index
    %88 = vector.load %arg6[%c8_70, %c0_71, %c0_72] : memref<27x8x4xf32, #tpu.memory_space<vmem>>, vector<1x8x4xf32>
    %89 = vector.shape_cast %88 : vector<1x8x4xf32> to vector<8x4xf32>
    %cst_73 = arith.constant dense<0.000000e+00> : vector<8x256xf32>
    %90 = tpu.matmul %89, %87, %cst_73 {dimension_numbers = #tpu.dot_dimension_numbers<[1], [0], [0], [1], [0, 0, 1, 1], [], []>} : vector<8x4xf32>, vector<4x256xf32>, vector<8x256xf32> -> vector<8x256xf32>
    %91 = arith.addf %83, %90 : vector<8x256xf32>
    %c0_74 = arith.constant 0 : index
    %c119 = arith.constant 119 : index
    %92 = vector.load %arg10[%c0_74, %c119] : memref<4x512xf32, #tpu.memory_space<vmem>>, vector<4x256xf32>
    %c9 = arith.constant 9 : index
    %c0_75 = arith.constant 0 : index
    %93 = vector.load %arg8[%c9, %c0_75] : memref<27x256xf32, #tpu.memory_space<vmem>>, vector<1x256xf32>
    %94 = vector.broadcast %93 : vector<1x256xf32> to vector<4x256xf32>
    %95 = arith.mulf %92, %94 : vector<4x256xf32>
    %c9_76 = arith.constant 9 : index
    %c0_77 = arith.constant 0 : index
    %c0_78 = arith.constant 0 : index
    %96 = vector.load %arg6[%c9_76, %c0_77, %c0_78] : memref<27x8x4xf32, #tpu.memory_space<vmem>>, vector<1x8x4xf32>
    %97 = vector.shape_cast %96 : vector<1x8x4xf32> to vector<8x4xf32>
    %cst_79 = arith.constant dense<0.000000e+00> : vector<8x256xf32>
    %98 = tpu.matmul %97, %95, %cst_79 {dimension_numbers = #tpu.dot_dimension_numbers<[1], [0], [0], [1], [0, 0, 1, 1], [], []>} : vector<8x4xf32>, vector<4x256xf32>, vector<8x256xf32> -> vector<8x256xf32>
    %99 = arith.addf %91, %98 : vector<8x256xf32>
    %c0_80 = arith.constant 0 : index
    %c120 = arith.constant 120 : index
    %100 = vector.load %arg10[%c0_80, %c120] : memref<4x512xf32, #tpu.memory_space<vmem>>, vector<4x256xf32>
    %c10 = arith.constant 10 : index
    %c0_81 = arith.constant 0 : index
    %101 = vector.load %arg8[%c10, %c0_81] : memref<27x256xf32, #tpu.memory_space<vmem>>, vector<1x256xf32>
    %102 = vector.broadcast %101 : vector<1x256xf32> to vector<4x256xf32>
    %103 = arith.mulf %100, %102 : vector<4x256xf32>
    %c10_82 = arith.constant 10 : index
    %c0_83 = arith.constant 0 : index
    %c0_84 = arith.constant 0 : index
    %104 = vector.load %arg6[%c10_82, %c0_83, %c0_84] : memref<27x8x4xf32, #tpu.memory_space<vmem>>, vector<1x8x4xf32>
    %105 = vector.shape_cast %104 : vector<1x8x4xf32> to vector<8x4xf32>
    %cst_85 = arith.constant dense<0.000000e+00> : vector<8x256xf32>
    %106 = tpu.matmul %105, %103, %cst_85 {dimension_numbers = #tpu.dot_dimension_numbers<[1], [0], [0], [1], [0, 0, 1, 1], [], []>} : vector<8x4xf32>, vector<4x256xf32>, vector<8x256xf32> -> vector<8x256xf32>
    %107 = arith.addf %99, %106 : vector<8x256xf32>
    %c0_86 = arith.constant 0 : index
    %c121 = arith.constant 121 : index
    %108 = vector.load %arg10[%c0_86, %c121] : memref<4x512xf32, #tpu.memory_space<vmem>>, vector<4x256xf32>
    %c11 = arith.constant 11 : index
    %c0_87 = arith.constant 0 : index
    %109 = vector.load %arg8[%c11, %c0_87] : memref<27x256xf32, #tpu.memory_space<vmem>>, vector<1x256xf32>
    %110 = vector.broadcast %109 : vector<1x256xf32> to vector<4x256xf32>
    %111 = arith.mulf %108, %110 : vector<4x256xf32>
    %c11_88 = arith.constant 11 : index
    %c0_89 = arith.constant 0 : index
    %c0_90 = arith.constant 0 : index
    %112 = vector.load %arg6[%c11_88, %c0_89, %c0_90] : memref<27x8x4xf32, #tpu.memory_space<vmem>>, vector<1x8x4xf32>
    %113 = vector.shape_cast %112 : vector<1x8x4xf32> to vector<8x4xf32>
    %cst_91 = arith.constant dense<0.000000e+00> : vector<8x256xf32>
    %114 = tpu.matmul %113, %111, %cst_91 {dimension_numbers = #tpu.dot_dimension_numbers<[1], [0], [0], [1], [0, 0, 1, 1], [], []>} : vector<8x4xf32>, vector<4x256xf32>, vector<8x256xf32> -> vector<8x256xf32>
    %115 = arith.addf %107, %114 : vector<8x256xf32>
    %c0_92 = arith.constant 0 : index
    %c127 = arith.constant 127 : index
    %116 = vector.load %arg10[%c0_92, %c127] : memref<4x512xf32, #tpu.memory_space<vmem>>, vector<4x256xf32>
    %c12 = arith.constant 12 : index
    %c0_93 = arith.constant 0 : index
    %117 = vector.load %arg8[%c12, %c0_93] : memref<27x256xf32, #tpu.memory_space<vmem>>, vector<1x256xf32>
    %118 = vector.broadcast %117 : vector<1x256xf32> to vector<4x256xf32>
    %119 = arith.mulf %116, %118 : vector<4x256xf32>
    %c12_94 = arith.constant 12 : index
    %c0_95 = arith.constant 0 : index
    %c0_96 = arith.constant 0 : index
    %120 = vector.load %arg6[%c12_94, %c0_95, %c0_96] : memref<27x8x4xf32, #tpu.memory_space<vmem>>, vector<1x8x4xf32>
    %121 = vector.shape_cast %120 : vector<1x8x4xf32> to vector<8x4xf32>
    %cst_97 = arith.constant dense<0.000000e+00> : vector<8x256xf32>
    %122 = tpu.matmul %121, %119, %cst_97 {dimension_numbers = #tpu.dot_dimension_numbers<[1], [0], [0], [1], [0, 0, 1, 1], [], []>} : vector<8x4xf32>, vector<4x256xf32>, vector<8x256xf32> -> vector<8x256xf32>
    %123 = arith.addf %115, %122 : vector<8x256xf32>
    %c13 = arith.constant 13 : index
    %c0_98 = arith.constant 0 : index
    %c0_99 = arith.constant 0 : index
    %124 = vector.load %arg6[%c13, %c0_98, %c0_99] : memref<27x8x4xf32, #tpu.memory_space<vmem>>, vector<1x8x4xf32>
    %125 = vector.shape_cast %124 : vector<1x8x4xf32> to vector<8x4xf32>
    %cst_100 = arith.constant dense<0.000000e+00> : vector<8x256xf32>
    %126 = tpu.matmul %125, %8, %cst_100 {dimension_numbers = #tpu.dot_dimension_numbers<[1], [0], [0], [1], [0, 0, 1, 1], [], []>} : vector<8x4xf32>, vector<4x256xf32>, vector<8x256xf32> -> vector<8x256xf32>
    %127 = arith.addf %123, %126 : vector<8x256xf32>
    %c0_101 = arith.constant 0 : index
    %c129 = arith.constant 129 : index
    %128 = vector.load %arg10[%c0_101, %c129] : memref<4x512xf32, #tpu.memory_space<vmem>>, vector<4x256xf32>
    %c14 = arith.constant 14 : index
    %c0_102 = arith.constant 0 : index
    %129 = vector.load %arg8[%c14, %c0_102] : memref<27x256xf32, #tpu.memory_space<vmem>>, vector<1x256xf32>
    %130 = vector.broadcast %129 : vector<1x256xf32> to vector<4x256xf32>
    %131 = arith.mulf %128, %130 : vector<4x256xf32>
    %c14_103 = arith.constant 14 : index
    %c0_104 = arith.constant 0 : index
    %c0_105 = arith.constant 0 : index
    %132 = vector.load %arg6[%c14_103, %c0_104, %c0_105] : memref<27x8x4xf32, #tpu.memory_space<vmem>>, vector<1x8x4xf32>
    %133 = vector.shape_cast %132 : vector<1x8x4xf32> to vector<8x4xf32>
    %cst_106 = arith.constant dense<0.000000e+00> : vector<8x256xf32>
    %134 = tpu.matmul %133, %131, %cst_106 {dimension_numbers = #tpu.dot_dimension_numbers<[1], [0], [0], [1], [0, 0, 1, 1], [], []>} : vector<8x4xf32>, vector<4x256xf32>, vector<8x256xf32> -> vector<8x256xf32>
    %135 = arith.addf %127, %134 : vector<8x256xf32>
    %c0_107 = arith.constant 0 : index
    %c135 = arith.constant 135 : index
    %136 = vector.load %arg10[%c0_107, %c135] : memref<4x512xf32, #tpu.memory_space<vmem>>, vector<4x256xf32>
    %c15 = arith.constant 15 : index
    %c0_108 = arith.constant 0 : index
    %137 = vector.load %arg8[%c15, %c0_108] : memref<27x256xf32, #tpu.memory_space<vmem>>, vector<1x256xf32>
    %138 = vector.broadcast %137 : vector<1x256xf32> to vector<4x256xf32>
    %139 = arith.mulf %136, %138 : vector<4x256xf32>
    %c15_109 = arith.constant 15 : index
    %c0_110 = arith.constant 0 : index
    %c0_111 = arith.constant 0 : index
    %140 = vector.load %arg6[%c15_109, %c0_110, %c0_111] : memref<27x8x4xf32, #tpu.memory_space<vmem>>, vector<1x8x4xf32>
    %141 = vector.shape_cast %140 : vector<1x8x4xf32> to vector<8x4xf32>
    %cst_112 = arith.constant dense<0.000000e+00> : vector<8x256xf32>
    %142 = tpu.matmul %141, %139, %cst_112 {dimension_numbers = #tpu.dot_dimension_numbers<[1], [0], [0], [1], [0, 0, 1, 1], [], []>} : vector<8x4xf32>, vector<4x256xf32>, vector<8x256xf32> -> vector<8x256xf32>
    %143 = arith.addf %135, %142 : vector<8x256xf32>
    %c0_113 = arith.constant 0 : index
    %c136 = arith.constant 136 : index
    %144 = vector.load %arg10[%c0_113, %c136] : memref<4x512xf32, #tpu.memory_space<vmem>>, vector<4x256xf32>
    %c16 = arith.constant 16 : index
    %c0_114 = arith.constant 0 : index
    %145 = vector.load %arg8[%c16, %c0_114] : memref<27x256xf32, #tpu.memory_space<vmem>>, vector<1x256xf32>
    %146 = vector.broadcast %145 : vector<1x256xf32> to vector<4x256xf32>
    %147 = arith.mulf %144, %146 : vector<4x256xf32>
    %c16_115 = arith.constant 16 : index
    %c0_116 = arith.constant 0 : index
    %c0_117 = arith.constant 0 : index
    %148 = vector.load %arg6[%c16_115, %c0_116, %c0_117] : memref<27x8x4xf32, #tpu.memory_space<vmem>>, vector<1x8x4xf32>
    %149 = vector.shape_cast %148 : vector<1x8x4xf32> to vector<8x4xf32>
    %cst_118 = arith.constant dense<0.000000e+00> : vector<8x256xf32>
    %150 = tpu.matmul %149, %147, %cst_118 {dimension_numbers = #tpu.dot_dimension_numbers<[1], [0], [0], [1], [0, 0, 1, 1], [], []>} : vector<8x4xf32>, vector<4x256xf32>, vector<8x256xf32> -> vector<8x256xf32>
    %151 = arith.addf %143, %150 : vector<8x256xf32>
    %c0_119 = arith.constant 0 : index
    %c137 = arith.constant 137 : index
    %152 = vector.load %arg10[%c0_119, %c137] : memref<4x512xf32, #tpu.memory_space<vmem>>, vector<4x256xf32>
    %c17 = arith.constant 17 : index
    %c0_120 = arith.constant 0 : index
    %153 = vector.load %arg8[%c17, %c0_120] : memref<27x256xf32, #tpu.memory_space<vmem>>, vector<1x256xf32>
    %154 = vector.broadcast %153 : vector<1x256xf32> to vector<4x256xf32>
    %155 = arith.mulf %152, %154 : vector<4x256xf32>
    %c17_121 = arith.constant 17 : index
    %c0_122 = arith.constant 0 : index
    %c0_123 = arith.constant 0 : index
    %156 = vector.load %arg6[%c17_121, %c0_122, %c0_123] : memref<27x8x4xf32, #tpu.memory_space<vmem>>, vector<1x8x4xf32>
    %157 = vector.shape_cast %156 : vector<1x8x4xf32> to vector<8x4xf32>
    %cst_124 = arith.constant dense<0.000000e+00> : vector<8x256xf32>
    %158 = tpu.matmul %157, %155, %cst_124 {dimension_numbers = #tpu.dot_dimension_numbers<[1], [0], [0], [1], [0, 0, 1, 1], [], []>} : vector<8x4xf32>, vector<4x256xf32>, vector<8x256xf32> -> vector<8x256xf32>
    %159 = arith.addf %151, %158 : vector<8x256xf32>
    %c0_125 = arith.constant 0 : index
    %c183 = arith.constant 183 : index
    %160 = vector.load %arg10[%c0_125, %c183] : memref<4x512xf32, #tpu.memory_space<vmem>>, vector<4x256xf32>
    %c18 = arith.constant 18 : index
    %c0_126 = arith.constant 0 : index
    %161 = vector.load %arg8[%c18, %c0_126] : memref<27x256xf32, #tpu.memory_space<vmem>>, vector<1x256xf32>
    %162 = vector.broadcast %161 : vector<1x256xf32> to vector<4x256xf32>
    %163 = arith.mulf %160, %162 : vector<4x256xf32>
    %c18_127 = arith.constant 18 : index
    %c0_128 = arith.constant 0 : index
    %c0_129 = arith.constant 0 : index
    %164 = vector.load %arg6[%c18_127, %c0_128, %c0_129] : memref<27x8x4xf32, #tpu.memory_space<vmem>>, vector<1x8x4xf32>
    %165 = vector.shape_cast %164 : vector<1x8x4xf32> to vector<8x4xf32>
    %cst_130 = arith.constant dense<0.000000e+00> : vector<8x256xf32>
    %166 = tpu.matmul %165, %163, %cst_130 {dimension_numbers = #tpu.dot_dimension_numbers<[1], [0], [0], [1], [0, 0, 1, 1], [], []>} : vector<8x4xf32>, vector<4x256xf32>, vector<8x256xf32> -> vector<8x256xf32>
    %167 = arith.addf %159, %166 : vector<8x256xf32>
    %c0_131 = arith.constant 0 : index
    %c184 = arith.constant 184 : index
    %168 = vector.load %arg10[%c0_131, %c184] : memref<4x512xf32, #tpu.memory_space<vmem>>, vector<4x256xf32>
    %c19 = arith.constant 19 : index
    %c0_132 = arith.constant 0 : index
    %169 = vector.load %arg8[%c19, %c0_132] : memref<27x256xf32, #tpu.memory_space<vmem>>, vector<1x256xf32>
    %170 = vector.broadcast %169 : vector<1x256xf32> to vector<4x256xf32>
    %171 = arith.mulf %168, %170 : vector<4x256xf32>
    %c19_133 = arith.constant 19 : index
    %c0_134 = arith.constant 0 : index
    %c0_135 = arith.constant 0 : index
    %172 = vector.load %arg6[%c19_133, %c0_134, %c0_135] : memref<27x8x4xf32, #tpu.memory_space<vmem>>, vector<1x8x4xf32>
    %173 = vector.shape_cast %172 : vector<1x8x4xf32> to vector<8x4xf32>
    %cst_136 = arith.constant dense<0.000000e+00> : vector<8x256xf32>
    %174 = tpu.matmul %173, %171, %cst_136 {dimension_numbers = #tpu.dot_dimension_numbers<[1], [0], [0], [1], [0, 0, 1, 1], [], []>} : vector<8x4xf32>, vector<4x256xf32>, vector<8x256xf32> -> vector<8x256xf32>
    %175 = arith.addf %167, %174 : vector<8x256xf32>
    %c0_137 = arith.constant 0 : index
    %c185 = arith.constant 185 : index
    %176 = vector.load %arg10[%c0_137, %c185] : memref<4x512xf32, #tpu.memory_space<vmem>>, vector<4x256xf32>
    %c20 = arith.constant 20 : index
    %c0_138 = arith.constant 0 : index
    %177 = vector.load %arg8[%c20, %c0_138] : memref<27x256xf32, #tpu.memory_space<vmem>>, vector<1x256xf32>
    %178 = vector.broadcast %177 : vector<1x256xf32> to vector<4x256xf32>
    %179 = arith.mulf %176, %178 : vector<4x256xf32>
    %c20_139 = arith.constant 20 : index
    %c0_140 = arith.constant 0 : index
    %c0_141 = arith.constant 0 : index
    %180 = vector.load %arg6[%c20_139, %c0_140, %c0_141] : memref<27x8x4xf32, #tpu.memory_space<vmem>>, vector<1x8x4xf32>
    %181 = vector.shape_cast %180 : vector<1x8x4xf32> to vector<8x4xf32>
    %cst_142 = arith.constant dense<0.000000e+00> : vector<8x256xf32>
    %182 = tpu.matmul %181, %179, %cst_142 {dimension_numbers = #tpu.dot_dimension_numbers<[1], [0], [0], [1], [0, 0, 1, 1], [], []>} : vector<8x4xf32>, vector<4x256xf32>, vector<8x256xf32> -> vector<8x256xf32>
    %183 = arith.addf %175, %182 : vector<8x256xf32>
    %c0_143 = arith.constant 0 : index
    %c191 = arith.constant 191 : index
    %184 = vector.load %arg10[%c0_143, %c191] : memref<4x512xf32, #tpu.memory_space<vmem>>, vector<4x256xf32>
    %c21 = arith.constant 21 : index
    %c0_144 = arith.constant 0 : index
    %185 = vector.load %arg8[%c21, %c0_144] : memref<27x256xf32, #tpu.memory_space<vmem>>, vector<1x256xf32>
    %186 = vector.broadcast %185 : vector<1x256xf32> to vector<4x256xf32>
    %187 = arith.mulf %184, %186 : vector<4x256xf32>
    %c21_145 = arith.constant 21 : index
    %c0_146 = arith.constant 0 : index
    %c0_147 = arith.constant 0 : index
    %188 = vector.load %arg6[%c21_145, %c0_146, %c0_147] : memref<27x8x4xf32, #tpu.memory_space<vmem>>, vector<1x8x4xf32>
    %189 = vector.shape_cast %188 : vector<1x8x4xf32> to vector<8x4xf32>
    %cst_148 = arith.constant dense<0.000000e+00> : vector<8x256xf32>
    %190 = tpu.matmul %189, %187, %cst_148 {dimension_numbers = #tpu.dot_dimension_numbers<[1], [0], [0], [1], [0, 0, 1, 1], [], []>} : vector<8x4xf32>, vector<4x256xf32>, vector<8x256xf32> -> vector<8x256xf32>
    %191 = arith.addf %183, %190 : vector<8x256xf32>
    %c0_149 = arith.constant 0 : index
    %c192 = arith.constant 192 : index
    %192 = vector.load %arg10[%c0_149, %c192] : memref<4x512xf32, #tpu.memory_space<vmem>>, vector<4x256xf32>
    %c22 = arith.constant 22 : index
    %c0_150 = arith.constant 0 : index
    %193 = vector.load %arg8[%c22, %c0_150] : memref<27x256xf32, #tpu.memory_space<vmem>>, vector<1x256xf32>
    %194 = vector.broadcast %193 : vector<1x256xf32> to vector<4x256xf32>
    %195 = arith.mulf %192, %194 : vector<4x256xf32>
    %c22_151 = arith.constant 22 : index
    %c0_152 = arith.constant 0 : index
    %c0_153 = arith.constant 0 : index
    %196 = vector.load %arg6[%c22_151, %c0_152, %c0_153] : memref<27x8x4xf32, #tpu.memory_space<vmem>>, vector<1x8x4xf32>
    %197 = vector.shape_cast %196 : vector<1x8x4xf32> to vector<8x4xf32>
    %cst_154 = arith.constant dense<0.000000e+00> : vector<8x256xf32>
    %198 = tpu.matmul %197, %195, %cst_154 {dimension_numbers = #tpu.dot_dimension_numbers<[1], [0], [0], [1], [0, 0, 1, 1], [], []>} : vector<8x4xf32>, vector<4x256xf32>, vector<8x256xf32> -> vector<8x256xf32>
    %199 = arith.addf %191, %198 : vector<8x256xf32>
    %c0_155 = arith.constant 0 : index
    %c193 = arith.constant 193 : index
    %200 = vector.load %arg10[%c0_155, %c193] : memref<4x512xf32, #tpu.memory_space<vmem>>, vector<4x256xf32>
    %c23 = arith.constant 23 : index
    %c0_156 = arith.constant 0 : index
    %201 = vector.load %arg8[%c23, %c0_156] : memref<27x256xf32, #tpu.memory_space<vmem>>, vector<1x256xf32>
    %202 = vector.broadcast %201 : vector<1x256xf32> to vector<4x256xf32>
    %203 = arith.mulf %200, %202 : vector<4x256xf32>
    %c23_157 = arith.constant 23 : index
    %c0_158 = arith.constant 0 : index
    %c0_159 = arith.constant 0 : index
    %204 = vector.load %arg6[%c23_157, %c0_158, %c0_159] : memref<27x8x4xf32, #tpu.memory_space<vmem>>, vector<1x8x4xf32>
    %205 = vector.shape_cast %204 : vector<1x8x4xf32> to vector<8x4xf32>
    %cst_160 = arith.constant dense<0.000000e+00> : vector<8x256xf32>
    %206 = tpu.matmul %205, %203, %cst_160 {dimension_numbers = #tpu.dot_dimension_numbers<[1], [0], [0], [1], [0, 0, 1, 1], [], []>} : vector<8x4xf32>, vector<4x256xf32>, vector<8x256xf32> -> vector<8x256xf32>
    %207 = arith.addf %199, %206 : vector<8x256xf32>
    %c0_161 = arith.constant 0 : index
    %c199 = arith.constant 199 : index
    %208 = vector.load %arg10[%c0_161, %c199] : memref<4x512xf32, #tpu.memory_space<vmem>>, vector<4x256xf32>
    %c24 = arith.constant 24 : index
    %c0_162 = arith.constant 0 : index
    %209 = vector.load %arg8[%c24, %c0_162] : memref<27x256xf32, #tpu.memory_space<vmem>>, vector<1x256xf32>
    %210 = vector.broadcast %209 : vector<1x256xf32> to vector<4x256xf32>
    %211 = arith.mulf %208, %210 : vector<4x256xf32>
    %c24_163 = arith.constant 24 : index
    %c0_164 = arith.constant 0 : index
    %c0_165 = arith.constant 0 : index
    %212 = vector.load %arg6[%c24_163, %c0_164, %c0_165] : memref<27x8x4xf32, #tpu.memory_space<vmem>>, vector<1x8x4xf32>
    %213 = vector.shape_cast %212 : vector<1x8x4xf32> to vector<8x4xf32>
    %cst_166 = arith.constant dense<0.000000e+00> : vector<8x256xf32>
    %214 = tpu.matmul %213, %211, %cst_166 {dimension_numbers = #tpu.dot_dimension_numbers<[1], [0], [0], [1], [0, 0, 1, 1], [], []>} : vector<8x4xf32>, vector<4x256xf32>, vector<8x256xf32> -> vector<8x256xf32>
    %215 = arith.addf %207, %214 : vector<8x256xf32>
    %c0_167 = arith.constant 0 : index
    %c200 = arith.constant 200 : index
    %216 = vector.load %arg10[%c0_167, %c200] : memref<4x512xf32, #tpu.memory_space<vmem>>, vector<4x256xf32>
    %c25 = arith.constant 25 : index
    %c0_168 = arith.constant 0 : index
    %217 = vector.load %arg8[%c25, %c0_168] : memref<27x256xf32, #tpu.memory_space<vmem>>, vector<1x256xf32>
    %218 = vector.broadcast %217 : vector<1x256xf32> to vector<4x256xf32>
    %219 = arith.mulf %216, %218 : vector<4x256xf32>
    %c25_169 = arith.constant 25 : index
    %c0_170 = arith.constant 0 : index
    %c0_171 = arith.constant 0 : index
    %220 = vector.load %arg6[%c25_169, %c0_170, %c0_171] : memref<27x8x4xf32, #tpu.memory_space<vmem>>, vector<1x8x4xf32>
    %221 = vector.shape_cast %220 : vector<1x8x4xf32> to vector<8x4xf32>
    %cst_172 = arith.constant dense<0.000000e+00> : vector<8x256xf32>
    %222 = tpu.matmul %221, %219, %cst_172 {dimension_numbers = #tpu.dot_dimension_numbers<[1], [0], [0], [1], [0, 0, 1, 1], [], []>} : vector<8x4xf32>, vector<4x256xf32>, vector<8x256xf32> -> vector<8x256xf32>
    %223 = arith.addf %215, %222 : vector<8x256xf32>
    %c0_173 = arith.constant 0 : index
    %c201 = arith.constant 201 : index
    %224 = vector.load %arg10[%c0_173, %c201] : memref<4x512xf32, #tpu.memory_space<vmem>>, vector<4x256xf32>
    %c26 = arith.constant 26 : index
    %c0_174 = arith.constant 0 : index
    %225 = vector.load %arg8[%c26, %c0_174] : memref<27x256xf32, #tpu.memory_space<vmem>>, vector<1x256xf32>
    %226 = vector.broadcast %225 : vector<1x256xf32> to vector<4x256xf32>
    %227 = arith.mulf %224, %226 : vector<4x256xf32>
    %c26_175 = arith.constant 26 : index
    %c0_176 = arith.constant 0 : index
    %c0_177 = arith.constant 0 : index
    %228 = vector.load %arg6[%c26_175, %c0_176, %c0_177] : memref<27x8x4xf32, #tpu.memory_space<vmem>>, vector<1x8x4xf32>
    %229 = vector.shape_cast %228 : vector<1x8x4xf32> to vector<8x4xf32>
    %cst_178 = arith.constant dense<0.000000e+00> : vector<8x256xf32>
    %230 = tpu.matmul %229, %227, %cst_178 {dimension_numbers = #tpu.dot_dimension_numbers<[1], [0], [0], [1], [0, 0, 1, 1], [], []>} : vector<8x4xf32>, vector<4x256xf32>, vector<8x256xf32> -> vector<8x256xf32>
    %231 = arith.addf %223, %230 : vector<8x256xf32>
    %c0_179 = arith.constant 0 : index
    %c0_180 = arith.constant 0 : index
    %232 = vector.load %arg7[%c0_179, %c0_180] : memref<8x1xf32, #tpu.memory_space<vmem>>, vector<8x1xf32>
    %233 = vector.broadcast %232 : vector<8x1xf32> to vector<8x256xf32>
    %234 = arith.addf %231, %233 : vector<8x256xf32>
    %235 = vector.extract_strided_slice %1 {offsets = [0, 0], sizes = [8, 256], strides = [1, 1]} : vector<16x256xf32> to vector<8x256xf32>
    %236 = arith.addf %18, %235 : vector<8x256xf32>
    %237 = vector.extract_strided_slice %1 {offsets = [8, 0], sizes = [8, 256], strides = [1, 1]} : vector<16x256xf32> to vector<8x256xf32>
    %238 = arith.addf %234, %237 : vector<8x256xf32>
    %cst_181 = arith.constant 0.000000e+00 : f32
    %239 = vector.broadcast %cst_181 : f32 to vector<8x256xf32>
    %240 = arith.maximumf %236, %239 : vector<8x256xf32>
    %cst_182 = arith.constant 0.000000e+00 : f32
    %241 = vector.broadcast %cst_182 : f32 to vector<8x256xf32>
    %242 = arith.maximumf %238, %241 : vector<8x256xf32>
    %243 = tpu.concatenate %240, %242 in 0 : vector<8x256xf32>, vector<8x256xf32> -> vector<16x256xf32>
    %c0_183 = arith.constant 0 : index
    %c0_184 = arith.constant 0 : index
    %c0_185 = arith.constant 0 : index
    %244 = vector.load %arg9[%c0_183, %c0_184, %c0_185] : memref<1x16x256xf32, #tpu.memory_space<vmem>>, vector<1x16x256xf32>
    %245 = vector.shape_cast %244 : vector<1x16x256xf32> to vector<16x256xf32>
    %246 = vector.shape_cast %243 : vector<16x256xf32> to vector<1x16x256xf32>
    tpu.vector_store %arg9[%c0_183, %c0_184, %c0_185], %246 {strides = array<i32>} : memref<1x16x256xf32, #tpu.memory_space<vmem>>, vector<1x16x256xf32>,
    return
  }
  func.func @transform_0(%arg0: i32) -> (i32, i32, i32) {
    %c0_i32 = arith.constant 0 : i32
    %c0_i32_0 = arith.constant 0 : i32
    %c0_i32_1 = arith.constant 0 : i32
    return %arg0, %c0_i32, %c0_i32_0 : i32, i32, i32
  }
  func.func @transform_1(%arg0: i32) -> (i32, i32) {
    %c0_i32 = arith.constant 0 : i32
    %c0_i32_0 = arith.constant 0 : i32
    %c0_i32_1 = arith.constant 0 : i32
    return %c0_i32, %c0_i32_0 : i32, i32
  }
  func.func @transform_2(%arg0: i32) -> (i32, i32) {
    %c0_i32 = arith.constant 0 : i32
    %c0_i32_0 = arith.constant 0 : i32
    %c0_i32_1 = arith.constant 0 : i32
    return %c0_i32, %c0_i32_0 : i32, i32
  }
  func.func @transform_3(%arg0: i32) -> (i32, i32) {
    %c0_i32 = arith.constant 0 : i32
    %c0_i32_0 = arith.constant 0 : i32
    %c0_i32_1 = arith.constant 0 : i32
    return %c0_i32, %c0_i32_0 : i32, i32
  }
  func.func @transform_4(%arg0: i32) -> (i32, i32) {
    %c0_i32 = arith.constant 0 : i32
    %c0_i32_0 = arith.constant 0 : i32
    %c0_i32_1 = arith.constant 0 : i32
    return %c0_i32, %c0_i32_0 : i32, i32
  }
  func.func @transform_5(%arg0: i32) -> (i32, i32, i32) {
    %c0_i32 = arith.constant 0 : i32
    %c0_i32_0 = arith.constant 0 : i32
    %c0_i32_1 = arith.constant 0 : i32
    %c0_i32_2 = arith.constant 0 : i32
    return %c0_i32, %c0_i32_0, %c0_i32_1 : i32, i32, i32
  }
  func.func @transform_6(%arg0: i32) -> (i32, i32) {
    %c0_i32 = arith.constant 0 : i32
    %c0_i32_0 = arith.constant 0 : i32
    %c0_i32_1 = arith.constant 0 : i32
    return %c0_i32, %c0_i32_0 : i32, i32
  }
  func.func @transform_7(%arg0: i32) -> (i32, i32) {
    %c0_i32 = arith.constant 0 : i32
    %c0_i32_0 = arith.constant 0 : i32
    %c0_i32_1 = arith.constant 0 : i32
    return %c0_i32, %c0_i32_0 : i32, i32
  }
  func.func @transform_8(%arg0: i32) -> (i32, i32, i32) {
    %c0_i32 = arith.constant 0 : i32
    %c0_i32_0 = arith.constant 0 : i32
    %c0_i32_1 = arith.constant 0 : i32
    return %arg0, %c0_i32, %c0_i32_0 : i32, i32, i32
  }
}

</mosaic_0001>

<llo_original>
// kernel: tpu_custom_call.1
$region0: #{tpu_custom_call.1}
  #allocation0 [shape = 'u32[]', space=smem, size = 0x4, offset = 0x4, fixed_abs, tag = 'smem constant byte address 0x4 - core index']
  #allocation1 [shape = 'u32[144,128]{1,0:T(1,128)}', space=vmem, size = 0x12000, scoped, tag = 'internal scratch']
  #allocation2 [shape = 'f32[4,512]{1,0:T(4,128)}', space=vmem, size = 0x2000, scoped, tag = 'scratch operand']
  %s0 = inlined_call_operand.vmem [shape: f32[2,16,256], index: 0, kind: input, shape index: {}]
  %s1 = inlined_call_operand.vmem [shape: f32[4,16], index: 1, kind: input, shape index: {}]
  %s2 = inlined_call_operand.vmem [shape: f32[4,1], index: 2, kind: input, shape index: {}]
  %s3 = inlined_call_operand.vmem [shape: f32[8,4], index: 3, kind: input, shape index: {}]
  %s4 = inlined_call_operand.vmem [shape: f32[8,1], index: 4, kind: input, shape index: {}]
  %s5 = inlined_call_operand.vmem [shape: f32[27,8,4], index: 5, kind: input, shape index: {}]
  %s6 = inlined_call_operand.vmem [shape: f32[8,1], index: 6, kind: input, shape index: {}]
  %s7 = inlined_call_operand.vmem [shape: f32[27,256], index: 7, kind: input, shape index: {}]
  %s8 = inlined_call_operand.hbm [shape: f32[2,16,256], index: 8, kind: output, shape index: {}]
  %s9 = sld [smem:[#allocation0]]
  $region65: #{tpu_custom_call.1} parent=0
    _
  %s11 = ssub.s32 1, %s9
  %s12 = scalar_select 0, %s11, %s9
  $region1: #{tpu_custom_call.1} parent=0
    #allocation3 [shape = 'u8[32768]{0}', space=vmem, size = 0x8000, scoped, tag = 'output window, operand 0']
    #allocation4 [shape = 's32[2]{0}', space=sflag, size = 0x8, scoped, tag = 'scoped memory for tpu_custom_call.1']
    %13 = vsyncpa [#allocation4], 0
    %s14 = scalar_lea.sflag [#allocation4], 1
    %15 = vsyncpa %s14, 0
    loop: start=0, step=1, limit=4
    $region2: #{tpu_custom_call.1} parent=1 // loop_pre_header
      _
    $region3: #{tpu_custom_call.1} parent=1 // loop_header
      %s17 = sphi 0, %s21
      %p18 = scmp.ge.s32.totalorder %s17, 4
      %s27 = sphi 0, %s29
      %s30 = sphi 0, %s27
      %s31 = sphi 0, %s30
      %s47 = sphi 0, %s31
      %s51 = sphi 0, %s51
      %s53 = sphi 0, %s51
      %s54 = sphi 0, %s53
      %s68 = sphi 0, %s54
      %s72 = sphi 0, %s72
      %s74 = sphi 0, %s72
      %s75 = sphi 0, %s74
      %s89 = sphi 0, %s75
      %s93 = sphi 0, %s93
      %s95 = sphi 0, %s93
      %s96 = sphi 0, %s95
      %s110 = sphi 0, %s96
      %s114 = sphi 0, %s114
      %s116 = sphi 0, %s114
      %s117 = sphi 0, %s116
      %s131 = sphi 0, %s117
      %s135 = sphi 0, %s135
      %s137 = sphi 0, %s135
      %s138 = sphi 0, %s137
      %s152 = sphi 0, %s138
      %s156 = sphi 0, %s156
      %s158 = sphi 0, %s156
      %s159 = sphi 0, %s158
      %s173 = sphi 0, %s159
      %s177 = sphi 0, %s177
      %s179 = sphi 0, %s177
      %s180 = sphi 0, %s179
      %s194 = sphi 0, %s180
      %s200 = sphi 0, %s202
      %s203 = sphi 0, %s200
      %s204 = sphi 0, %s203
      %s220 = sphi 0, %s204
    $region4: #{tpu_custom_call.1} parent=1 // loop_header_branch
      %20 = sbr.rel (%p18) target = $region8
    $region5: #{tpu_custom_call.1} parent=1 // loop_body
      %s22 = ssub.s32 %s17, 1
      %s23 = ssub.s32 %s17, 2
      %s24 = sadd.s32 %s17, 1
      %s25 = ssub.s32 %s17, %s24
      %p26 = scmp.eq.s32.totalorder %s25, 0
      %s28 = sadd.s32 %s27, 1
      %s29 = scalar_select %p26, %s27, %s28
      %p32 = pneg %p26
      %p33 = scmp.eq.s32.totalorder %s17, 1
      %p34 = por %p32, %p33
      %p35 = scmp.ne.s32.totalorder %s27, %s30
      %p36 = scmp.eq.s32.totalorder %s17, 0
      %p37 = por %p35, %p36
      %p38 = scmp.ne.s32.totalorder %s27, %s30
      %p39 = scmp.eq.s32.totalorder %s22, 1
      %p40 = por %p38, %p39
      %p41 = scmp.ne.s32.totalorder %s30, %s31
      %p42 = scmp.eq.s32.totalorder %s22, 0
      %p43 = por %p41, %p42
      %p44 = scmp.ne.s32.totalorder %s30, %s31
      %p45 = scmp.eq.s32.totalorder %s23, 1
      %p46 = por %p44, %p45
      %p48 = scmp.ne.s32.totalorder %s31, %s47
      %p49 = scmp.eq.s32.totalorder %s23, 0
      %p50 = por %p48, %p49
      %s52 = sadd.s32 %s51, 1
      %p55 = scmp.eq.s32.totalorder %s17, 1
      %p56 = scmp.ne.s32.totalorder %s51, %s53
      %p57 = scmp.eq.s32.totalorder %s17, 0
      %p58 = por %p56, %p57
      %p59 = scmp.ne.s32.totalorder %s51, %s53
      %p60 = scmp.eq.s32.totalorder %s22, 1
      %p61 = por %p59, %p60
      %p62 = scmp.ne.s32.totalorder %s53, %s54
      %p63 = scmp.eq.s32.totalorder %s22, 0
      %p64 = por %p62, %p63
      %p65 = scmp.ne.s32.totalorder %s53, %s54
      %p66 = scmp.eq.s32.totalorder %s23, 1
      %p67 = por %p65, %p66
      %p69 = scmp.ne.s32.totalorder %s54, %s68
      %p70 = scmp.eq.s32.totalorder %s23, 0
      %p71 = por %p69, %p70
      %s73 = sadd.s32 %s72, 1
      %p76 = scmp.eq.s32.totalorder %s17, 1
      %p77 = scmp.ne.s32.totalorder %s72, %s74
      %p78 = scmp.eq.s32.totalorder %s17, 0
      %p79 = por %p77, %p78
      %p80 = scmp.ne.s32.totalorder %s72, %s74
      %p81 = scmp.eq.s32.totalorder %s22, 1
      %p82 = por %p80, %p81
      %p83 = scmp.ne.s32.totalorder %s74, %s75
      %p84 = scmp.eq.s32.totalorder %s22, 0
      %p85 = por %p83, %p84
      %p86 = scmp.ne.s32.totalorder %s74, %s75
      %p87 = scmp.eq.s32.totalorder %s23, 1
      %p88 = por %p86, %p87
      %p90 = scmp.ne.s32.totalorder %s75, %s89
      %p91 = scmp.eq.s32.totalorder %s23, 0
      %p92 = por %p90, %p91
      %s94 = sadd.s32 %s93, 1
      %p97 = scmp.eq.s32.totalorder %s17, 1
      %p98 = scmp.ne.s32.totalorder %s93, %s95
      %p99 = scmp.eq.s32.totalorder %s17, 0
      %p100 = por %p98, %p99
      %p101 = scmp.ne.s32.totalorder %s93, %s95
      %p102 = scmp.eq.s32.totalorder %s22, 1
      %p103 = por %p101, %p102
      %p104 = scmp.ne.s32.totalorder %s95, %s96
      %p105 = scmp.eq.s32.totalorder %s22, 0
      %p106 = por %p104, %p105
      %p107 = scmp.ne.s32.totalorder %s95, %s96
      %p108 = scmp.eq.s32.totalorder %s23, 1
      %p109 = por %p107, %p108
      %p111 = scmp.ne.s32.totalorder %s96, %s110
      %p112 = scmp.eq.s32.totalorder %s23, 0
      %p113 = por %p111, %p112
      %s115 = sadd.s32 %s114, 1
      %p118 = scmp.eq.s32.totalorder %s17, 1
      %p119 = scmp.ne.s32.totalorder %s114, %s116
      %p120 = scmp.eq.s32.totalorder %s17, 0
      %p121 = por %p119, %p120
      %p122 = scmp.ne.s32.totalorder %s114, %s116
      %p123 = scmp.eq.s32.totalorder %s22, 1
      %p124 = por %p122, %p123
      %p125 = scmp.ne.s32.totalorder %s116, %s117
      %p126 = scmp.eq.s32.totalorder %s22, 0
      %p127 = por %p125, %p126
      %p128 = scmp.ne.s32.totalorder %s116, %s117
      %p129 = scmp.eq.s32.totalorder %s23, 1
      %p130 = por %p128, %p129
      %p132 = scmp.ne.s32.totalorder %s117, %s131
      %p133 = scmp.eq.s32.totalorder %s23, 0
      %p134 = por %p132, %p133
      %s136 = sadd.s32 %s135, 1
      %p139 = scmp.eq.s32.totalorder %s17, 1
      %p140 = scmp.ne.s32.totalorder %s135, %s137
      %p141 = scmp.eq.s32.totalorder %s17, 0
      %p142 = por %p140, %p141
      %p143 = scmp.ne.s32.totalorder %s135, %s137
      %p144 = scmp.eq.s32.totalorder %s22, 1
      %p145 = por %p143, %p144
      %p146 = scmp.ne.s32.totalorder %s137, %s138
      %p147 = scmp.eq.s32.totalorder %s22, 0
      %p148 = por %p146, %p147
      %p149 = scmp.ne.s32.totalorder %s137, %s138
      %p150 = scmp.eq.s32.totalorder %s23, 1
      %p151 = por %p149, %p150
      %p153 = scmp.ne.s32.totalorder %s138, %s152
      %p154 = scmp.eq.s32.totalorder %s23, 0
      %p155 = por %p153, %p154
      %s157 = sadd.s32 %s156, 1
      %p160 = scmp.eq.s32.totalorder %s17, 1
      %p161 = scmp.ne.s32.totalorder %s156, %s158
      %p162 = scmp.eq.s32.totalorder %s17, 0
      %p163 = por %p161, %p162
      %p164 = scmp.ne.s32.totalorder %s156, %s158
      %p165 = scmp.eq.s32.totalorder %s22, 1
      %p166 = por %p164, %p165
      %p167 = scmp.ne.s32.totalorder %s158, %s159
      %p168 = scmp.eq.s32.totalorder %s22, 0
      %p169 = por %p167, %p168
      %p170 = scmp.ne.s32.totalorder %s158, %s159
      %p171 = scmp.eq.s32.totalorder %s23, 1
      %p172 = por %p170, %p171
      %p174 = scmp.ne.s32.totalorder %s159, %s173
      %p175 = scmp.eq.s32.totalorder %s23, 0
      %p176 = por %p174, %p175
      %s178 = sadd.s32 %s177, 1
      %p181 = scmp.eq.s32.totalorder %s17, 1
      %p182 = scmp.ne.s32.totalorder %s177, %s179
      %p183 = scmp.eq.s32.totalorder %s17, 0
      %p184 = por %p182, %p183
      %p185 = scmp.ne.s32.totalorder %s177, %s179
      %p186 = scmp.eq.s32.totalorder %s22, 1
      %p187 = por %p185, %p186
      %p188 = scmp.ne.s32.totalorder %s179, %s180
      %p189 = scmp.eq.s32.totalorder %s22, 0
      %p190 = por %p188, %p189
      %p191 = scmp.ne.s32.totalorder %s179, %s180
      %p192 = scmp.eq.s32.totalorder %s23, 1
      %p193 = por %p191, %p192
      %p195 = scmp.ne.s32.totalorder %s180, %s194
      %p196 = scmp.eq.s32.totalorder %s23, 0
      %p197 = por %p195, %p196
      %s198 = ssub.s32 %s17, %s24
      %p199 = scmp.eq.s32.totalorder %s198, 0
      %s201 = sadd.s32 %s200, 1
      %s202 = scalar_select %p199, %s200, %s201
      %p205 = pneg %p199
      %p206 = scmp.eq.s32.totalorder %s17, 1
      %p207 = por %p205, %p206
      %p208 = scmp.ne.s32.totalorder %s200, %s203
      %p209 = scmp.eq.s32.totalorder %s17, 0
      %p210 = por %p208, %p209
      %p211 = scmp.ne.s32.totalorder %s200, %s203
      %p212 = scmp.eq.s32.totalorder %s22, 1
      %p213 = por %p211, %p212
      %p214 = scmp.ne.s32.totalorder %s203, %s204
      %p215 = scmp.eq.s32.totalorder %s22, 0
      %p216 = por %p214, %p215
      %p217 = scmp.ne.s32.totalorder %s203, %s204
      %p218 = scmp.eq.s32.totalorder %s23, 1
      %p219 = por %p217, %p218
      %p221 = scmp.ne.s32.totalorder %s204, %s220
      %p222 = scmp.eq.s32.totalorder %s23, 0
      %p223 = por %p221, %p222
      %p224 = scmp.le.s32.totalorder 1, %s17
      %p225 = scmp.lt.s32.totalorder %s17, 3
      %p226 = pnand %p224, %p225
      %p227 = pneg %p226
      // Predicated region
      $region9: #{tpu_custom_call.1} parent=5 // pred_check
        _
      $region10: #{tpu_custom_call.1} parent=5 // pred_check_branch
        %229 = sbr.rel (%p226) target = $region12
      $region11: #{tpu_custom_call.1} parent=5 // pred_region
        %s230 = ssub.s32 %s17, 1
        // Predicated region
        $region13: #{tpu_custom_call.1} parent=11 // pred_check
          %p231 = pneg %p64
        $region14: #{tpu_custom_call.1} parent=11 // pred_check_branch
          %233 = sbr.rel (%p231) target = $region16
        $region15: #{tpu_custom_call.1} parent=11 // pred_region
          _
        $region16: #{tpu_custom_call.1} parent=11 // pred_fallthru
          _
        // Predicated region
        $region17: #{tpu_custom_call.1} parent=11 // pred_check
          %p234 = pneg %p85
        $region18: #{tpu_custom_call.1} parent=11 // pred_check_branch
          %236 = sbr.rel (%p234) target = $region20
        $region19: #{tpu_custom_call.1} parent=11 // pred_region
          _
        $region20: #{tpu_custom_call.1} parent=11 // pred_fallthru
          _
        // Predicated region
        $region21: #{tpu_custom_call.1} parent=11 // pred_check
          %p237 = pneg %p106
        $region22: #{tpu_custom_call.1} parent=11 // pred_check_branch
          %239 = sbr.rel (%p237) target = $region24
        $region23: #{tpu_custom_call.1} parent=11 // pred_region
          _
        $region24: #{tpu_custom_call.1} parent=11 // pred_fallthru
          _
        // Predicated region
        $region25: #{tpu_custom_call.1} parent=11 // pred_check
          %p240 = pneg %p127
        $region26: #{tpu_custom_call.1} parent=11 // pred_check_branch
          %242 = sbr.rel (%p240) target = $region28
        $region27: #{tpu_custom_call.1} parent=11 // pred_region
          _
        $region28: #{tpu_custom_call.1} parent=11 // pred_fallthru
          _
        // Predicated region
        $region29: #{tpu_custom_call.1} parent=11 // pred_check
          %p243 = pneg %p148
        $region30: #{tpu_custom_call.1} parent=11 // pred_check_branch
          %245 = sbr.rel (%p243) target = $region32
        $region31: #{tpu_custom_call.1} parent=11 // pred_region
          _
        $region32: #{tpu_custom_call.1} parent=11 // pred_fallthru
          _
        // Predicated region
        $region33: #{tpu_custom_call.1} parent=11 // pred_check
          %p246 = pneg %p169
        $region34: #{tpu_custom_call.1} parent=11 // pred_check_branch
          %248 = sbr.rel (%p246) target = $region36
        $region35: #{tpu_custom_call.1} parent=11 // pred_region
          _
        $region36: #{tpu_custom_call.1} parent=11 // pred_fallthru
          _
        // Predicated region
        $region37: #{tpu_custom_call.1} parent=11 // pred_check
          %p249 = pneg %p190
        $region38: #{tpu_custom_call.1} parent=11 // pred_check_branch
          %251 = sbr.rel (%p249) target = $region40
        $region39: #{tpu_custom_call.1} parent=11 // pred_region
          _
        $region40: #{tpu_custom_call.1} parent=11 // pred_fallthru
          _
      $region12: #{tpu_custom_call.1} parent=5 // pred_fallthru
        _
      %p252 = scmp.lt.s32.totalorder %s17, 2
      // Predicated region
      $region41: #{tpu_custom_call.1} parent=5 // pred_check
        %p253 = pneg %p252
      $region42: #{tpu_custom_call.1} parent=5 // pred_check_branch
        %255 = sbr.rel (%p253) target = $region44
      $region43: #{tpu_custom_call.1} parent=5 // pred_region
        // Predicated region
        $region45: #{tpu_custom_call.1} parent=43 // pred_check
          %p256 = pneg %p37
        $region46: #{tpu_custom_call.1} parent=43 // pred_check_branch
          %258 = sbr.rel (%p256) target = $region48
        $region47: #{tpu_custom_call.1} parent=43 // pred_region
          %p259 = scmp.lt.s32.totalorder %s17, 1
          %s260 = scalar_select %p259, %s17, 1
          %s261 = smul.addr %s260, 4
          %s262 = smul.addr %s261, 8
          %s263 = scalar_lea.vmem %s0, %s262
        $region48: #{tpu_custom_call.1} parent=43 // pred_fallthru
          _
      $region44: #{tpu_custom_call.1} parent=5 // pred_fallthru
        _
      %p264 = scmp.le.s32.totalorder 1, %s17
      %p265 = scmp.lt.s32.totalorder %s17, 3
      %p266 = pnand %p264, %p265
      %p267 = pneg %p266
      // Predicated region
      $region49: #{tpu_custom_call.1} parent=5 // pred_check
        _
      $region50: #{tpu_custom_call.1} parent=5 // pred_check_branch
        %269 = sbr.rel (%p266) target = $region52
      $region51: #{tpu_custom_call.1} parent=5 // pred_region
        %s270 = ssub.s32 %s17, 1
        %p271 = scmp.lt.s32.totalorder %s22, 1
        %s272 = scalar_select %p271, %s22, 1
        %s273 = smul.addr %s272, 4
        %s274 = smul.addr %s273, 8
        %s275 = scalar_lea.vmem %s0, %s274
        %p276 = pneg %p43
        %p277 = pneg %p40
        %p278 = pneg %p64
        %p279 = pneg %p61
        %p280 = pneg %p85
        %p281 = pneg %p82
        %p282 = pneg %p106
        %p283 = pneg %p103
        %p284 = pneg %p127
        %p285 = pneg %p124
        %p286 = pneg %p148
        %p287 = pneg %p145
        %p288 = pneg %p169
        %p289 = pneg %p166
        %p290 = pneg %p190
        %p291 = pneg %p187
        %p292 = pneg %p216
        %p293 = pneg %p213
        %s294 = sand.u32 %s203, 1
        %s295 = scalar_lea.sflag [#allocation4], %s294
        %s296 = sand.u32 %s203, 1
        %s297 = smul.addr %s296, 32
        %s298 = scalar_lea.vmem [#allocation3], %s297
        %p299 = scmp.lt.s32.totalorder %s22, 1
        %s300 = scalar_select %p299, %s22, 1
        %s301 = smul.addr %s300, 4
        %s302 = smul.addr %s301, 8
        %s303 = scalar_lea.vmem %s0, %s302
        %v304 = vld [vmem:[%s303] sm:$0xff]
        %v305 = vld [vmem:[%s303 + $0x8] sm:$0xff]
        %v306 = vld [vmem:[%s303 + $0x10] sm:$0xff]
        %v307 = vld [vmem:[%s303 + $0x18] sm:$0xff]
        %v308 = vld [vmem:[%s1] sm:$0xf]
        %v309 = vld [vmem:[%s2] sm:$0xf]
        %311 = vset.pattern.permute.xlu0 0
        %312 = vperm.xlu0 %311, %v309
        %v313 = vpop.permute.xlu0 %312
        %vm315 = vcmask 130048
        %v317 = vsel %vm315, %v308, 0
        %319 = vmatprep.subr.mxu0 0.0
        %320 = vmatpush1.msra.mxu0 0.0
        %321 = vmatprep.subr.mxu0 0.0
        %322 = vmatpush1.msra.mxu0 0.0
        %323 = vmatprep.subr.mxu0 0.0
        %324 = vmatpush1.msra.mxu0 0.0
        %325 = vmatprep.subr.mxu0 0.0
        %326 = vmatpush1.msra.mxu0 0.0
        %327 = vmatprep.subr.mxu0 0.0
        %328 = vmatpush1.msra.mxu0 0.0
        %329 = vmatprep.subr.mxu0 0.0
        %330 = vmatpush1.msra.mxu0 0.0
        %331 = vmatprep.subr.mxu0 0.0
        %332 = vmatpush1.msra.mxu0 0.0
        %333 = vmatprep.subr.mxu0 0.0
        %334 = vmatpush1.msra.mxu0 0.0
        %335 = vmatprep.subr.mxu0 0.0
        %336 = vmatpush1.msra.mxu0 0.0
        %337 = vmatprep.subr.mxu0 0.0
        %338 = vmatpush1.msra.mxu0 0.0
        %339 = vmatprep.subr.mxu0 0.0
        %340 = vmatpush1.msra.mxu0 0.0
        %341 = vmatprep.subr.mxu0 0.0
        %342 = vmatpush1.msra.mxu0 0.0
        %343 = vmatprep.subr.mxu0 0.0
        %344 = vmatpush1.msra.mxu0 0.0
        %345 = vmatprep.subr.mxu0 0.0
        %346 = vmatpush1.msra.mxu0 0.0
        %347 = vmatprep.subr.mxu0 %v307
        %348 = vmatpush1.msra.mxu0 %v306
        %349 = vmatprep.subr.mxu0 %v305
        %350 = vmatpush1.msra.mxu0 %v304
        %351 = vmatprep.subr.mxu0 0.0
        %352 = vmatpush2.msra.mxu0 0.0
        %353 = vmatprep.subr.mxu0 0.0
        %354 = vmatpush2.msra.mxu0 0.0
        %355 = vmatprep.subr.mxu0 0.0
        %356 = vmatpush2.msra.mxu0 0.0
        %357 = vmatprep.subr.mxu0 0.0
        %358 = vmatpush2.msra.mxu0 0.0
        %359 = vmatprep.subr.mxu0 0.0
        %360 = vmatpush2.msra.mxu0 0.0
        %361 = vmatprep.subr.mxu0 0.0
        %362 = vmatpush2.msra.mxu0 0.0
        %363 = vmatprep.subr.mxu0 0.0
        %364 = vmatpush2.msra.mxu0 0.0
        %365 = vmatprep.subr.mxu0 0.0
        %366 = vmatpush2.msra.mxu0 0.0
        %367 = vmatprep.subr.mxu0 0.0
        %368 = vmatpush2.msra.mxu0 0.0
        %369 = vmatprep.subr.mxu0 0.0
        %370 = vmatpush2.msra.mxu0 0.0
        %371 = vmatprep.subr.mxu0 0.0
        %372 = vmatpush2.msra.mxu0 0.0
        %373 = vmatprep.subr.mxu0 0.0
        %374 = vmatpush2.msra.mxu0 0.0
        %375 = vmatprep.subr.mxu0 0.0
        %376 = vmatpush2.msra.mxu0 0.0
        %377 = vmatprep.subr.mxu0 0.0
        %378 = vmatpush2.msra.mxu0 0.0
        %379 = vmatprep.subr.mxu0 0.0
        %380 = vmatpush2.msra.mxu0 0.0
        %381 = vmatprep.subr.mxu0 0.0
        %382 = vmatpush2.msra.mxu0 0.0
        %383 = vmatprep.mubr.f32.mxu0 0.0
        %384 = vmatmul.mubr.f32.gmra.mxu0 %v317
        %v385 = vpop.f32.mrf.mxu0
        %v386 = vadd.f32 %v313, %v385
        %v387 = vpop.f32.mrf.mxu0
        %v388 = vadd.f32 %v313, %v387
        %389 = vdwg.mxu0
        %v390 = vmax.f32 %v386, 0.0
        %v391 = vmax.f32 %v388, 0.0
        %392 = vst [vmem:[#allocation2] sm:$0xf] 0.0
        %393 = vst [vmem:[#allocation2 + $0xc] sm:$0xf] 0.0
        %v396 = vcombine.low %v390, %v391
        %398 = vst [vmem:[#allocation2 + $0x4] sm:$0xff] %v396
        %v399 = vld [vmem:[%s3] sm:$0xff]
        %v400 = vld [vmem:[%s4] sm:$0xff]
        %402 = vset.pattern.permute.xlu0 0
        %403 = vperm.xlu0 %402, %v400
        %v404 = vpop.permute.xlu0 %403
        %vm406 = vcmask 31744
        %v408 = vsel %vm406, %v399, 0
        %vm410 = vcmask 1043456
        %v411 = vsel %vm410, %v390, 0
        %v413 = vsel %vm410, %v391, 0
        %415 = vmatprep.subr.mxu0 0.0
        %416 = vmatpush1.msra.mxu0 0.0
        %417 = vmatprep.subr.mxu0 0.0
        %418 = vmatpush1.msra.mxu0 0.0
        %419 = vmatprep.subr.mxu0 0.0
        %420 = vmatpush1.msra.mxu0 0.0
        %421 = vmatprep.subr.mxu0 0.0
        %422 = vmatpush1.msra.mxu0 0.0
        %423 = vmatprep.subr.mxu0 0.0
        %424 = vmatpush1.msra.mxu0 0.0
        %425 = vmatprep.subr.mxu0 0.0
        %426 = vmatpush1.msra.mxu0 0.0
        %427 = vmatprep.subr.mxu0 0.0
        %428 = vmatpush1.msra.mxu0 0.0
        %429 = vmatprep.subr.mxu0 0.0
        %430 = vmatpush1.msra.mxu0 0.0
        %431 = vmatprep.subr.mxu0 0.0
        %432 = vmatpush1.msra.mxu0 0.0
        %433 = vmatprep.subr.mxu0 0.0
        %434 = vmatpush1.msra.mxu0 0.0
        %435 = vmatprep.subr.mxu0 0.0
        %436 = vmatpush1.msra.mxu0 0.0
        %437 = vmatprep.subr.mxu0 0.0
        %438 = vmatpush1.msra.mxu0 0.0
        %439 = vmatprep.subr.mxu0 0.0
        %440 = vmatpush1.msra.mxu0 0.0
        %441 = vmatprep.subr.mxu0 0.0
        %442 = vmatpush1.msra.mxu0 0.0
        %443 = vmatprep.subr.mxu0 0.0
        %444 = vmatpush1.msra.mxu0 0.0
        %445 = vmatprep.subr.mxu0 %v413
        %446 = vmatpush1.msra.mxu0 %v411
        %447 = vmatprep.subr.mxu0 0.0
        %448 = vmatpush2.msra.mxu0 0.0
        %449 = vmatprep.subr.mxu0 0.0
        %450 = vmatpush2.msra.mxu0 0.0
        %451 = vmatprep.subr.mxu0 0.0
        %452 = vmatpush2.msra.mxu0 0.0
        %453 = vmatprep.subr.mxu0 0.0
        %454 = vmatpush2.msra.mxu0 0.0
        %455 = vmatprep.subr.mxu0 0.0
        %456 = vmatpush2.msra.mxu0 0.0
        %457 = vmatprep.subr.mxu0 0.0
        %458 = vmatpush2.msra.mxu0 0.0
        %459 = vmatprep.subr.mxu0 0.0
        %460 = vmatpush2.msra.mxu0 0.0
        %461 = vmatprep.subr.mxu0 0.0
        %462 = vmatpush2.msra.mxu0 0.0
        %463 = vmatprep.subr.mxu0 0.0
        %464 = vmatpush2.msra.mxu0 0.0
        %465 = vmatprep.subr.mxu0 0.0
        %466 = vmatpush2.msra.mxu0 0.0
        %467 = vmatprep.subr.mxu0 0.0
        %468 = vmatpush2.msra.mxu0 0.0
        %469 = vmatprep.subr.mxu0 0.0
        %470 = vmatpush2.msra.mxu0 0.0
        %471 = vmatprep.subr.mxu0 0.0
        %472 = vmatpush2.msra.mxu0 0.0
        %473 = vmatprep.subr.mxu0 0.0
        %474 = vmatpush2.msra.mxu0 0.0
        %475 = vmatprep.subr.mxu0 0.0
        %476 = vmatpush2.msra.mxu0 0.0
        %477 = vmatprep.subr.mxu0 0.0
        %478 = vmatpush2.msra.mxu0 0.0
        %479 = vmatprep.mubr.f32.mxu0 0.0
        %480 = vmatmul.mubr.f32.gmra.mxu0 %v408
        %v481 = vpop.f32.mrf.mxu0
        %v482 = vadd.f32 %v404, %v481
        %v483 = vpop.f32.mrf.mxu0
        %v484 = vadd.f32 %v404, %v483
        %485 = vdwg.mxu0
        %v486 = vld [vmem:[#allocation2] sm:$0xff]
        %v487 = vld [vmem:[#allocation2 + $0x8] sm:$0xf]
        %v488 = vld [vmem:[%s7] ss:$8 sm:$0x3]
        %v490 = vlaneseq
        %v491 = vshrl.u32 %v490, 7
        %v492 = vsub.s32 0, %v491
        %v493 = vrot.slane %v488, %v492
        %v494 = vlaneseq
        %v495 = vshrl.u32 %v494, 7
        %v496 = vsub.s32 1, %v495
        %v497 = vrot.slane %v488, %v496
        %v498 = vcombine.low %v493, %v497
        %499 = vrot.lane.b32.xlu0 %v498, 55
        %v500 = vpop.permute.xlu0 %499
        %v501 = vrot.slane %v500, 4
        %vm502 = vcmask 449536
        %v503 = vsel %vm502, %v501, %v500
        %v506 = vmul.f32 %v486, %v503
        %v507 = vmul.f32 %v487, %v501
        %v508 = vld [vmem:[%s5] sm:$0xff]
        %s509 = scalar_lea.vmem %s7, 1
        %v510 = vld [vmem:[%s509] ss:$8 sm:$0x3]
        %v512 = vlaneseq
        %v513 = vshrl.u32 %v512, 7
        %v514 = vsub.s32 0, %v513
        %v515 = vrot.slane %v510, %v514
        %v516 = vlaneseq
        %v517 = vshrl.u32 %v516, 7
        %v518 = vsub.s32 1, %v517
        %v519 = vrot.slane %v510, %v518
        %v520 = vcombine.low %v515, %v519
        %521 = vrot.lane.b32.xlu0 %v520, 56
        %v522 = vpop.permute.xlu0 %521
        %v523 = vrot.slane %v522, 4
        %vm524 = vcmask 457728
        %v525 = vsel %vm524, %v523, %v522
        %v528 = vmul.f32 %v486, %v525
        %v529 = vmul.f32 %v487, %v523
        %s530 = scalar_lea.vmem %s5, 8
        %v531 = vld [vmem:[%s530] sm:$0xff]
        %v534 = vcombine.high %v528, %v528
        %535 = vrot.lane.b32.xlu0 %v528, 72
        %v536 = vpop.permute.xlu0 %535
        %537 = vrot.lane.b32.xlu0 %v534, 72
        %v538 = vpop.permute.xlu0 %537
        %539 = vrot.lane.b32.xlu0 %v529, 72
        %v540 = vpop.permute.xlu0 %539
        %vm541 = vcmask 588800
        %v542 = vsel %vm541, %v536, %v538
        %v543 = vsel %vm541, %v538, %v540
        %v545 = vsel %vm406, %v531, 0
        %v547 = vsel %vm410, %v542, 0
        %v549 = vsel %vm410, %v543, 0
        %551 = vmatprep.subr.mxu0 0.0
        %552 = vmatpush1.msra.mxu0 0.0
        %553 = vmatprep.subr.mxu0 0.0
        %554 = vmatpush1.msra.mxu0 0.0
        %555 = vmatprep.subr.mxu0 0.0
        %556 = vmatpush1.msra.mxu0 0.0
        %557 = vmatprep.subr.mxu0 0.0
        %558 = vmatpush1.msra.mxu0 0.0
        %559 = vmatprep.subr.mxu0 0.0
        %560 = vmatpush1.msra.mxu0 0.0
        %561 = vmatprep.subr.mxu0 0.0
        %562 = vmatpush1.msra.mxu0 0.0
        %563 = vmatprep.subr.mxu0 0.0
        %564 = vmatpush1.msra.mxu0 0.0
        %565 = vmatprep.subr.mxu0 0.0
        %566 = vmatpush1.msra.mxu0 0.0
        %567 = vmatprep.subr.mxu0 0.0
        %568 = vmatpush1.msra.mxu0 0.0
        %569 = vmatprep.subr.mxu0 0.0
        %570 = vmatpush1.msra.mxu0 0.0
        %571 = vmatprep.subr.mxu0 0.0
        %572 = vmatpush1.msra.mxu0 0.0
        %573 = vmatprep.subr.mxu0 0.0
        %574 = vmatpush1.msra.mxu0 0.0
        %575 = vmatprep.subr.mxu0 0.0
        %576 = vmatpush1.msra.mxu0 0.0
        %577 = vmatprep.subr.mxu0 0.0
        %578 = vmatpush1.msra.mxu0 0.0
        %579 = vmatprep.subr.mxu0 0.0
        %580 = vmatpush1.msra.mxu0 0.0
        %581 = vmatprep.subr.mxu0 %v549
        %582 = vmatpush1.msra.mxu0 %v547
        %583 = vmatprep.subr.mxu0 0.0
        %584 = vmatpush2.msra.mxu0 0.0
        %585 = vmatprep.subr.mxu0 0.0
        %586 = vmatpush2.msra.mxu0 0.0
        %587 = vmatprep.subr.mxu0 0.0
        %588 = vmatpush2.msra.mxu0 0.0
        %589 = vmatprep.subr.mxu0 0.0
        %590 = vmatpush2.msra.mxu0 0.0
        %591 = vmatprep.subr.mxu0 0.0
        %592 = vmatpush2.msra.mxu0 0.0
        %593 = vmatprep.subr.mxu0 0.0
        %594 = vmatpush2.msra.mxu0 0.0
        %595 = vmatprep.subr.mxu0 0.0
        %596 = vmatpush2.msra.mxu0 0.0
        %597 = vmatprep.subr.mxu0 0.0
        %598 = vmatpush2.msra.mxu0 0.0
        %599 = vmatprep.subr.mxu0 0.0
        %600 = vmatpush2.msra.mxu0 0.0
        %601 = vmatprep.subr.mxu0 0.0
        %602 = vmatpush2.msra.mxu0 0.0
        %603 = vmatprep.subr.mxu0 0.0
        %604 = vmatpush2.msra.mxu0 0.0
        %605 = vmatprep.subr.mxu0 0.0
        %606 = vmatpush2.msra.mxu0 0.0
        %607 = vmatprep.subr.mxu0 0.0
        %608 = vmatpush2.msra.mxu0 0.0
        %609 = vmatprep.subr.mxu0 0.0
        %610 = vmatpush2.msra.mxu0 0.0
        %611 = vmatprep.subr.mxu0 0.0
        %612 = vmatpush2.msra.mxu0 0.0
        %613 = vmatprep.subr.mxu0 0.0
        %614 = vmatpush2.msra.mxu0 0.0
        %615 = vmatprep.mubr.f32.mxu0 0.0
        %616 = vmatmul.mubr.f32.gmra.mxu0 %v545
        %v617 = vpop.f32.mrf.mxu0
        %v618 = vadd.f32 0.0, %v617
        %v619 = vpop.f32.mrf.mxu0
        %v620 = vadd.f32 0.0, %v619
        %621 = vdwg.mxu0
        %v624 = vcombine.high %v506, %v506
        %625 = vrot.lane.b32.xlu0 %v506, 73
        %v626 = vpop.permute.xlu0 %625
        %627 = vrot.lane.b32.xlu0 %v624, 73
        %v628 = vpop.permute.xlu0 %627
        %629 = vrot.lane.b32.xlu0 %v507, 73
        %v630 = vpop.permute.xlu0 %629
        %vm631 = vcmask 596992
        %v632 = vsel %vm631, %v626, %v628
        %v633 = vsel %vm631, %v628, %v630
        %v635 = vsel %vm406, %v508, 0
        %v637 = vsel %vm410, %v632, 0
        %v639 = vsel %vm410, %v633, 0
        %641 = vmatprep.subr.mxu0 0.0
        %642 = vmatpush1.msra.mxu0 0.0
        %643 = vmatprep.subr.mxu0 0.0
        %644 = vmatpush1.msra.mxu0 0.0
        %645 = vmatprep.subr.mxu0 0.0
        %646 = vmatpush1.msra.mxu0 0.0
        %647 = vmatprep.subr.mxu0 0.0
        %648 = vmatpush1.msra.mxu0 0.0
        %649 = vmatprep.subr.mxu0 0.0
        %650 = vmatpush1.msra.mxu0 0.0
        %651 = vmatprep.subr.mxu0 0.0
        %652 = vmatpush1.msra.mxu0 0.0
        %653 = vmatprep.subr.mxu0 0.0
        %654 = vmatpush1.msra.mxu0 0.0
        %655 = vmatprep.subr.mxu0 0.0
        %656 = vmatpush1.msra.mxu0 0.0
        %657 = vmatprep.subr.mxu0 0.0
        %658 = vmatpush1.msra.mxu0 0.0
        %659 = vmatprep.subr.mxu0 0.0
        %660 = vmatpush1.msra.mxu0 0.0
        %661 = vmatprep.subr.mxu0 0.0
        %662 = vmatpush1.msra.mxu0 0.0
        %663 = vmatprep.subr.mxu0 0.0
        %664 = vmatpush1.msra.mxu0 0.0
        %665 = vmatprep.subr.mxu0 0.0
        %666 = vmatpush1.msra.mxu0 0.0
        %667 = vmatprep.subr.mxu0 0.0
        %668 = vmatpush1.msra.mxu0 0.0
        %669 = vmatprep.subr.mxu0 0.0
        %670 = vmatpush1.msra.mxu0 0.0
        %671 = vmatprep.subr.mxu0 %v639
        %672 = vmatpush1.msra.mxu0 %v637
        %673 = vmatprep.subr.mxu0 0.0
        %674 = vmatpush2.msra.mxu0 0.0
        %675 = vmatprep.subr.mxu0 0.0
        %676 = vmatpush2.msra.mxu0 0.0
        %677 = vmatprep.subr.mxu0 0.0
        %678 = vmatpush2.msra.mxu0 0.0
        %679 = vmatprep.subr.mxu0 0.0
        %680 = vmatpush2.msra.mxu0 0.0
        %681 = vmatprep.subr.mxu0 0.0
        %682 = vmatpush2.msra.mxu0 0.0
        %683 = vmatprep.subr.mxu0 0.0
        %684 = vmatpush2.msra.mxu0 0.0
        %685 = vmatprep.subr.mxu0 0.0
        %686 = vmatpush2.msra.mxu0 0.0
        %687 = vmatprep.subr.mxu0 0.0
        %688 = vmatpush2.msra.mxu0 0.0
        %689 = vmatprep.subr.mxu0 0.0
        %690 = vmatpush2.msra.mxu0 0.0
        %691 = vmatprep.subr.mxu0 0.0
        %692 = vmatpush2.msra.mxu0 0.0
        %693 = vmatprep.subr.mxu0 0.0
        %694 = vmatpush2.msra.mxu0 0.0
        %695 = vmatprep.subr.mxu0 0.0
        %696 = vmatpush2.msra.mxu0 0.0
        %697 = vmatprep.subr.mxu0 0.0
        %698 = vmatpush2.msra.mxu0 0.0
        %699 = vmatprep.subr.mxu0 0.0
        %700 = vmatpush2.msra.mxu0 0.0
        %701 = vmatprep.subr.mxu0 0.0
        %702 = vmatpush2.msra.mxu0 0.0
        %703 = vmatprep.subr.mxu0 0.0
        %704 = vmatpush2.msra.mxu0 0.0
        %705 = vmatprep.mubr.f32.mxu0 0.0
        %706 = vmatmul.mubr.f32.gmra.mxu0 %v635
        %v707 = vpop.f32.mrf.mxu0
        %v708 = vadd.f32 %v618, %v707
        %v709 = vpop.f32.mrf.mxu0
        %v710 = vadd.f32 %v620, %v709
        %711 = vdwg.mxu0
        %v712 = vld [vmem:[#allocation2] sm:$0xff]
        %v713 = vld [vmem:[#allocation2 + $0x8] sm:$0xf]
        %s714 = scalar_lea.vmem %s7, 2
        %v715 = vld [vmem:[%s714] ss:$8 sm:$0x3]
        %v717 = vlaneseq
        %v718 = vshrl.u32 %v717, 7
        %v719 = vsub.s32 0, %v718
        %v720 = vrot.slane %v715, %v719
        %v721 = vlaneseq
        %v722 = vshrl.u32 %v721, 7
        %v723 = vsub.s32 1, %v722
        %v724 = vrot.slane %v715, %v723
        %v725 = vcombine.low %v720, %v724
        %726 = vrot.lane.b32.xlu0 %v725, 57
        %v727 = vpop.permute.xlu0 %726
        %v728 = vrot.slane %v727, 4
        %vm729 = vcmask 465920
        %v730 = vsel %vm729, %v728, %v727
        %v733 = vmul.f32 %v712, %v730
        %v734 = vmul.f32 %v713, %v728
        %s735 = scalar_lea.vmem %s5, 16
        %v736 = vld [vmem:[%s735] sm:$0xff]
        %v739 = vcombine.high %v733, %v733
        %740 = vrot.lane.b32.xlu0 %v733, 71
        %v741 = vpop.permute.xlu0 %740
        %742 = vrot.lane.b32.xlu0 %v739, 71
        %v743 = vpop.permute.xlu0 %742
        %744 = vrot.lane.b32.xlu0 %v734, 71
        %v745 = vpop.permute.xlu0 %744
        %vm746 = vcmask 580608
        %v747 = vsel %vm746, %v741, %v743
        %v748 = vsel %vm746, %v743, %v745
        %v750 = vsel %vm406, %v736, 0
        %v752 = vsel %vm410, %v747, 0
        %v754 = vsel %vm410, %v748, 0
        %756 = vmatprep.subr.mxu0 0.0
        %757 = vmatpush1.msra.mxu0 0.0
        %758 = vmatprep.subr.mxu0 0.0
        %759 = vmatpush1.msra.mxu0 0.0
        %760 = vmatprep.subr.mxu0 0.0
        %761 = vmatpush1.msra.mxu0 0.0
        %762 = vmatprep.subr.mxu0 0.0
        %763 = vmatpush1.msra.mxu0 0.0
        %764 = vmatprep.subr.mxu0 0.0
        %765 = vmatpush1.msra.mxu0 0.0
        %766 = vmatprep.subr.mxu0 0.0
        %767 = vmatpush1.msra.mxu0 0.0
        %768 = vmatprep.subr.mxu0 0.0
        %769 = vmatpush1.msra.mxu0 0.0
        %770 = vmatprep.subr.mxu0 0.0
        %771 = vmatpush1.msra.mxu0 0.0
        %772 = vmatprep.subr.mxu0 0.0
        %773 = vmatpush1.msra.mxu0 0.0
        %774 = vmatprep.subr.mxu0 0.0
        %775 = vmatpush1.msra.mxu0 0.0
        %776 = vmatprep.subr.mxu0 0.0
        %777 = vmatpush1.msra.mxu0 0.0
        %778 = vmatprep.subr.mxu0 0.0
        %779 = vmatpush1.msra.mxu0 0.0
        %780 = vmatprep.subr.mxu0 0.0
        %781 = vmatpush1.msra.mxu0 0.0
        %782 = vmatprep.subr.mxu0 0.0
        %783 = vmatpush1.msra.mxu0 0.0
        %784 = vmatprep.subr.mxu0 0.0
        %785 = vmatpush1.msra.mxu0 0.0
        %786 = vmatprep.subr.mxu0 %v754
        %787 = vmatpush1.msra.mxu0 %v752
        %788 = vmatprep.subr.mxu0 0.0
        %789 = vmatpush2.msra.mxu0 0.0
        %790 = vmatprep.subr.mxu0 0.0
        %791 = vmatpush2.msra.mxu0 0.0
        %792 = vmatprep.subr.mxu0 0.0
        %793 = vmatpush2.msra.mxu0 0.0
        %794 = vmatprep.subr.mxu0 0.0
        %795 = vmatpush2.msra.mxu0 0.0
        %796 = vmatprep.subr.mxu0 0.0
        %797 = vmatpush2.msra.mxu0 0.0
        %798 = vmatprep.subr.mxu0 0.0
        %799 = vmatpush2.msra.mxu0 0.0
        %800 = vmatprep.subr.mxu0 0.0
        %801 = vmatpush2.msra.mxu0 0.0
        %802 = vmatprep.subr.mxu0 0.0
        %803 = vmatpush2.msra.mxu0 0.0
        %804 = vmatprep.subr.mxu0 0.0
        %805 = vmatpush2.msra.mxu0 0.0
        %806 = vmatprep.subr.mxu0 0.0
        %807 = vmatpush2.msra.mxu0 0.0
        %808 = vmatprep.subr.mxu0 0.0
        %809 = vmatpush2.msra.mxu0 0.0
        %810 = vmatprep.subr.mxu0 0.0
        %811 = vmatpush2.msra.mxu0 0.0
        %812 = vmatprep.subr.mxu0 0.0
        %813 = vmatpush2.msra.mxu0 0.0
        %814 = vmatprep.subr.mxu0 0.0
        %815 = vmatpush2.msra.mxu0 0.0
        %816 = vmatprep.subr.mxu0 0.0
        %817 = vmatpush2.msra.mxu0 0.0
        %818 = vmatprep.subr.mxu0 0.0
        %819 = vmatpush2.msra.mxu0 0.0
        %820 = vmatprep.mubr.f32.mxu0 0.0
        %821 = vmatmul.mubr.f32.gmra.mxu0 %v750
        %v822 = vpop.f32.mrf.mxu0
        %v823 = vadd.f32 0.0, %v822
        %v824 = vpop.f32.mrf.mxu0
        %v825 = vadd.f32 0.0, %v824
        %826 = vdwg.mxu0
        %v827 = vadd.f32 %v708, %v823
        %v828 = vadd.f32 %v710, %v825
        %v829 = vld [vmem:[#allocation2] sm:$0xff]
        %v830 = vld [vmem:[#allocation2 + $0x8] sm:$0xf]
        %s831 = scalar_lea.vmem %s7, 3
        %v832 = vld [vmem:[%s831] ss:$8 sm:$0x3]
        %v834 = vlaneseq
        %v835 = vshrl.u32 %v834, 7
        %v836 = vsub.s32 0, %v835
        %v837 = vrot.slane %v832, %v836
        %v838 = vlaneseq
        %v839 = vshrl.u32 %v838, 7
        %v840 = vsub.s32 1, %v839
        %v841 = vrot.slane %v832, %v840
        %v842 = vcombine.low %v837, %v841
        %843 = vrot.lane.b32.xlu0 %v842, 63
        %v844 = vpop.permute.xlu0 %843
        %v845 = vrot.slane %v844, 4
        %vm846 = vcmask 515072
        %v847 = vsel %vm846, %v845, %v844
        %v850 = vmul.f32 %v829, %v847
        %v851 = vmul.f32 %v830, %v845
        %s852 = scalar_lea.vmem %s5, 24
        %v853 = vld [vmem:[%s852] sm:$0xff]
        %v856 = vcombine.high %v850, %v850
        %857 = vrot.lane.b32.xlu0 %v850, 65
        %v858 = vpop.permute.xlu0 %857
        %859 = vrot.lane.b32.xlu0 %v856, 65
        %v860 = vpop.permute.xlu0 %859
        %861 = vrot.lane.b32.xlu0 %v851, 65
        %v862 = vpop.permute.xlu0 %861
        %vm863 = vcmask 531456
        %v864 = vsel %vm863, %v858, %v860
        %v865 = vsel %vm863, %v860, %v862
        %v867 = vsel %vm406, %v853, 0
        %v869 = vsel %vm410, %v864, 0
        %v871 = vsel %vm410, %v865, 0
        %873 = vmatprep.subr.mxu0 0.0
        %874 = vmatpush1.msra.mxu0 0.0
        %875 = vmatprep.subr.mxu0 0.0
        %876 = vmatpush1.msra.mxu0 0.0
        %877 = vmatprep.subr.mxu0 0.0
        %878 = vmatpush1.msra.mxu0 0.0
        %879 = vmatprep.subr.mxu0 0.0
        %880 = vmatpush1.msra.mxu0 0.0
        %881 = vmatprep.subr.mxu0 0.0
        %882 = vmatpush1.msra.mxu0 0.0
        %883 = vmatprep.subr.mxu0 0.0
        %884 = vmatpush1.msra.mxu0 0.0
        %885 = vmatprep.subr.mxu0 0.0
        %886 = vmatpush1.msra.mxu0 0.0
        %887 = vmatprep.subr.mxu0 0.0
        %888 = vmatpush1.msra.mxu0 0.0
        %889 = vmatprep.subr.mxu0 0.0
        %890 = vmatpush1.msra.mxu0 0.0
        %891 = vmatprep.subr.mxu0 0.0
        %892 = vmatpush1.msra.mxu0 0.0
        %893 = vmatprep.subr.mxu0 0.0
        %894 = vmatpush1.msra.mxu0 0.0
        %895 = vmatprep.subr.mxu0 0.0
        %896 = vmatpush1.msra.mxu0 0.0
        %897 = vmatprep.subr.mxu0 0.0
        %898 = vmatpush1.msra.mxu0 0.0
        %899 = vmatprep.subr.mxu0 0.0
        %900 = vmatpush1.msra.mxu0 0.0
        %901 = vmatprep.subr.mxu0 0.0
        %902 = vmatpush1.msra.mxu0 0.0
        %903 = vmatprep.subr.mxu0 %v871
        %904 = vmatpush1.msra.mxu0 %v869
        %905 = vmatprep.subr.mxu0 0.0
        %906 = vmatpush2.msra.mxu0 0.0
        %907 = vmatprep.subr.mxu0 0.0
        %908 = vmatpush2.msra.mxu0 0.0
        %909 = vmatprep.subr.mxu0 0.0
        %910 = vmatpush2.msra.mxu0 0.0
        %911 = vmatprep.subr.mxu0 0.0
        %912 = vmatpush2.msra.mxu0 0.0
        %913 = vmatprep.subr.mxu0 0.0
        %914 = vmatpush2.msra.mxu0 0.0
        %915 = vmatprep.subr.mxu0 0.0
        %916 = vmatpush2.msra.mxu0 0.0
        %917 = vmatprep.subr.mxu0 0.0
        %918 = vmatpush2.msra.mxu0 0.0
        %919 = vmatprep.subr.mxu0 0.0
        %920 = vmatpush2.msra.mxu0 0.0
        %921 = vmatprep.subr.mxu0 0.0
        %922 = vmatpush2.msra.mxu0 0.0
        %923 = vmatprep.subr.mxu0 0.0
        %924 = vmatpush2.msra.mxu0 0.0
        %925 = vmatprep.subr.mxu0 0.0
        %926 = vmatpush2.msra.mxu0 0.0
        %927 = vmatprep.subr.mxu0 0.0
        %928 = vmatpush2.msra.mxu0 0.0
        %929 = vmatprep.subr.mxu0 0.0
        %930 = vmatpush2.msra.mxu0 0.0
        %931 = vmatprep.subr.mxu0 0.0
        %932 = vmatpush2.msra.mxu0 0.0
        %933 = vmatprep.subr.mxu0 0.0
        %934 = vmatpush2.msra.mxu0 0.0
        %935 = vmatprep.subr.mxu0 0.0
        %936 = vmatpush2.msra.mxu0 0.0
        %937 = vmatprep.mubr.f32.mxu0 0.0
        %938 = vmatmul.mubr.f32.gmra.mxu0 %v867
        %v939 = vpop.f32.mrf.mxu0
        %v940 = vadd.f32 0.0, %v939
        %v941 = vpop.f32.mrf.mxu0
        %v942 = vadd.f32 0.0, %v941
        %943 = vdwg.mxu0
        %v944 = vadd.f32 %v827, %v940
        %v945 = vadd.f32 %v828, %v942
        %v946 = vld [vmem:[#allocation2] sm:$0xff]
        %v947 = vld [vmem:[#allocation2 + $0x8] sm:$0xf]
        %s948 = scalar_lea.vmem %s7, 4
        %v949 = vld [vmem:[%s948] ss:$8 sm:$0x3]
        %v951 = vlaneseq
        %v952 = vshrl.u32 %v951, 7
        %v953 = vsub.s32 0, %v952
        %v954 = vrot.slane %v949, %v953
        %v955 = vlaneseq
        %v956 = vshrl.u32 %v955, 7
        %v957 = vsub.s32 1, %v956
        %v958 = vrot.slane %v949, %v957
        %v959 = vcombine.low %v954, %v958
        %960 = vrot.lane.b32.xlu0 %v959, 64
        %v961 = vpop.permute.xlu0 %960
        %v962 = vrot.slane %v961, 4
        %vm963 = vcmask 523264
        %v964 = vsel %vm963, %v962, %v961
        %v967 = vmul.f32 %v946, %v964
        %v968 = vmul.f32 %v947, %v962
        %s969 = scalar_lea.vmem %s5, 32
        %v970 = vld [vmem:[%s969] sm:$0xff]
        %v973 = vcombine.high %v967, %v967
        %974 = vrot.lane.b32.xlu0 %v967, 64
        %v975 = vpop.permute.xlu0 %974
        %976 = vrot.lane.b32.xlu0 %v973, 64
        %v977 = vpop.permute.xlu0 %976
        %978 = vrot.lane.b32.xlu0 %v968, 64
        %v979 = vpop.permute.xlu0 %978
        %v980 = vsel %vm963, %v975, %v977
        %v981 = vsel %vm963, %v977, %v979
        %v983 = vsel %vm406, %v970, 0
        %v985 = vsel %vm410, %v980, 0
        %v987 = vsel %vm410, %v981, 0
        %989 = vmatprep.subr.mxu0 0.0
        %990 = vmatpush1.msra.mxu0 0.0
        %991 = vmatprep.subr.mxu0 0.0
        %992 = vmatpush1.msra.mxu0 0.0
        %993 = vmatprep.subr.mxu0 0.0
        %994 = vmatpush1.msra.mxu0 0.0
        %995 = vmatprep.subr.mxu0 0.0
        %996 = vmatpush1.msra.mxu0 0.0
        %997 = vmatprep.subr.mxu0 0.0
        %998 = vmatpush1.msra.mxu0 0.0
        %999 = vmatprep.subr.mxu0 0.0
        %1000 = vmatpush1.msra.mxu0 0.0
        %1001 = vmatprep.subr.mxu0 0.0
        %1002 = vmatpush1.msra.mxu0 0.0
        %1003 = vmatprep.subr.mxu0 0.0
        %1004 = vmatpush1.msra.mxu0 0.0
        %1005 = vmatprep.subr.mxu0 0.0
        %1006 = vmatpush1.msra.mxu0 0.0
        %1007 = vmatprep.subr.mxu0 0.0
        %1008 = vmatpush1.msra.mxu0 0.0
        %1009 = vmatprep.subr.mxu0 0.0
        %1010 = vmatpush1.msra.mxu0 0.0
        %1011 = vmatprep.subr.mxu0 0.0
        %1012 = vmatpush1.msra.mxu0 0.0
        %1013 = vmatprep.subr.mxu0 0.0
        %1014 = vmatpush1.msra.mxu0 0.0
        %1015 = vmatprep.subr.mxu0 0.0
        %1016 = vmatpush1.msra.mxu0 0.0
        %1017 = vmatprep.subr.mxu0 0.0
        %1018 = vmatpush1.msra.mxu0 0.0
        %1019 = vmatprep.subr.mxu0 %v987
        %1020 = vmatpush1.msra.mxu0 %v985
        %1021 = vmatprep.subr.mxu0 0.0
        %1022 = vmatpush2.msra.mxu0 0.0
        %1023 = vmatprep.subr.mxu0 0.0
        %1024 = vmatpush2.msra.mxu0 0.0
        %1025 = vmatprep.subr.mxu0 0.0
        %1026 = vmatpush2.msra.mxu0 0.0
        %1027 = vmatprep.subr.mxu0 0.0
        %1028 = vmatpush2.msra.mxu0 0.0
        %1029 = vmatprep.subr.mxu0 0.0
        %1030 = vmatpush2.msra.mxu0 0.0
        %1031 = vmatprep.subr.mxu0 0.0
        %1032 = vmatpush2.msra.mxu0 0.0
        %1033 = vmatprep.subr.mxu0 0.0
        %1034 = vmatpush2.msra.mxu0 0.0
        %1035 = vmatprep.subr.mxu0 0.0
        %1036 = vmatpush2.msra.mxu0 0.0
        %1037 = vmatprep.subr.mxu0 0.0
        %1038 = vmatpush2.msra.mxu0 0.0
        %1039 = vmatprep.subr.mxu0 0.0
        %1040 = vmatpush2.msra.mxu0 0.0
        %1041 = vmatprep.subr.mxu0 0.0
        %1042 = vmatpush2.msra.mxu0 0.0
        %1043 = vmatprep.subr.mxu0 0.0
        %1044 = vmatpush2.msra.mxu0 0.0
        %1045 = vmatprep.subr.mxu0 0.0
        %1046 = vmatpush2.msra.mxu0 0.0
        %1047 = vmatprep.subr.mxu0 0.0
        %1048 = vmatpush2.msra.mxu0 0.0
        %1049 = vmatprep.subr.mxu0 0.0
        %1050 = vmatpush2.msra.mxu0 0.0
        %1051 = vmatprep.subr.mxu0 0.0
        %1052 = vmatpush2.msra.mxu0 0.0
        %1053 = vmatprep.mubr.f32.mxu0 0.0
        %1054 = vmatmul.mubr.f32.gmra.mxu0 %v983
        %v1055 = vpop.f32.mrf.mxu0
        %v1056 = vadd.f32 0.0, %v1055
        %v1057 = vpop.f32.mrf.mxu0
        %v1058 = vadd.f32 0.0, %v1057
        %1059 = vdwg.mxu0
        %v1060 = vadd.f32 %v944, %v1056
        %v1061 = vadd.f32 %v945, %v1058
        %v1062 = vld [vmem:[#allocation2] sm:$0xff]
        %v1063 = vld [vmem:[#allocation2 + $0x8] sm:$0xf]
        %s1064 = scalar_lea.vmem %s7, 5
        %v1065 = vld [vmem:[%s1064] ss:$8 sm:$0x3]
        %v1067 = vlaneseq
        %v1068 = vshrl.u32 %v1067, 7
        %v1069 = vsub.s32 0, %v1068
        %v1070 = vrot.slane %v1065, %v1069
        %v1071 = vlaneseq
        %v1072 = vshrl.u32 %v1071, 7
        %v1073 = vsub.s32 1, %v1072
        %v1074 = vrot.slane %v1065, %v1073
        %v1075 = vcombine.low %v1070, %v1074
        %1076 = vrot.lane.b32.xlu0 %v1075, 65
        %v1077 = vpop.permute.xlu0 %1076
        %v1078 = vrot.slane %v1077, 4
        %v1079 = vsel %vm863, %v1078, %v1077
        %v1082 = vmul.f32 %v1062, %v1079
        %v1083 = vmul.f32 %v1063, %v1078
        %s1084 = scalar_lea.vmem %s5, 40
        %v1085 = vld [vmem:[%s1084] sm:$0xff]
        %v1088 = vcombine.high %v1082, %v1082
        %1089 = vrot.lane.b32.xlu0 %v1082, 63
        %v1090 = vpop.permute.xlu0 %1089
        %1091 = vrot.lane.b32.xlu0 %v1088, 63
        %v1092 = vpop.permute.xlu0 %1091
        %1093 = vrot.lane.b32.xlu0 %v1083, 63
        %v1094 = vpop.permute.xlu0 %1093
        %v1095 = vsel %vm846, %v1090, %v1092
        %v1096 = vsel %vm846, %v1092, %v1094
        %v1098 = vsel %vm406, %v1085, 0
        %v1100 = vsel %vm410, %v1095, 0
        %v1102 = vsel %vm410, %v1096, 0
        %1104 = vmatprep.subr.mxu0 0.0
        %1105 = vmatpush1.msra.mxu0 0.0
        %1106 = vmatprep.subr.mxu0 0.0
        %1107 = vmatpush1.msra.mxu0 0.0
        %1108 = vmatprep.subr.mxu0 0.0
        %1109 = vmatpush1.msra.mxu0 0.0
        %1110 = vmatprep.subr.mxu0 0.0
        %1111 = vmatpush1.msra.mxu0 0.0
        %1112 = vmatprep.subr.mxu0 0.0
        %1113 = vmatpush1.msra.mxu0 0.0
        %1114 = vmatprep.subr.mxu0 0.0
        %1115 = vmatpush1.msra.mxu0 0.0
        %1116 = vmatprep.subr.mxu0 0.0
        %1117 = vmatpush1.msra.mxu0 0.0
        %1118 = vmatprep.subr.mxu0 0.0
        %1119 = vmatpush1.msra.mxu0 0.0
        %1120 = vmatprep.subr.mxu0 0.0
        %1121 = vmatpush1.msra.mxu0 0.0
        %1122 = vmatprep.subr.mxu0 0.0
        %1123 = vmatpush1.msra.mxu0 0.0
        %1124 = vmatprep.subr.mxu0 0.0
        %1125 = vmatpush1.msra.mxu0 0.0
        %1126 = vmatprep.subr.mxu0 0.0
        %1127 = vmatpush1.msra.mxu0 0.0
        %1128 = vmatprep.subr.mxu0 0.0
        %1129 = vmatpush1.msra.mxu0 0.0
        %1130 = vmatprep.subr.mxu0 0.0
        %1131 = vmatpush1.msra.mxu0 0.0
        %1132 = vmatprep.subr.mxu0 0.0
        %1133 = vmatpush1.msra.mxu0 0.0
        %1134 = vmatprep.subr.mxu0 %v1102
        %1135 = vmatpush1.msra.mxu0 %v1100
        %1136 = vmatprep.subr.mxu0 0.0
        %1137 = vmatpush2.msra.mxu0 0.0
        %1138 = vmatprep.subr.mxu0 0.0
        %1139 = vmatpush2.msra.mxu0 0.0
        %1140 = vmatprep.subr.mxu0 0.0
        %1141 = vmatpush2.msra.mxu0 0.0
        %1142 = vmatprep.subr.mxu0 0.0
        %1143 = vmatpush2.msra.mxu0 0.0
        %1144 = vmatprep.subr.mxu0 0.0
        %1145 = vmatpush2.msra.mxu0 0.0
        %1146 = vmatprep.subr.mxu0 0.0
        %1147 = vmatpush2.msra.mxu0 0.0
        %1148 = vmatprep.subr.mxu0 0.0
        %1149 = vmatpush2.msra.mxu0 0.0
        %1150 = vmatprep.subr.mxu0 0.0
        %1151 = vmatpush2.msra.mxu0 0.0
        %1152 = vmatprep.subr.mxu0 0.0
        %1153 = vmatpush2.msra.mxu0 0.0
        %1154 = vmatprep.subr.mxu0 0.0
        %1155 = vmatpush2.msra.mxu0 0.0
        %1156 = vmatprep.subr.mxu0 0.0
        %1157 = vmatpush2.msra.mxu0 0.0
        %1158 = vmatprep.subr.mxu0 0.0
        %1159 = vmatpush2.msra.mxu0 0.0
        %1160 = vmatprep.subr.mxu0 0.0
        %1161 = vmatpush2.msra.mxu0 0.0
        %1162 = vmatprep.subr.mxu0 0.0
        %1163 = vmatpush2.msra.mxu0 0.0
        %1164 = vmatprep.subr.mxu0 0.0
        %1165 = vmatpush2.msra.mxu0 0.0
        %1166 = vmatprep.subr.mxu0 0.0
        %1167 = vmatpush2.msra.mxu0 0.0
        %1168 = vmatprep.mubr.f32.mxu0 0.0
        %1169 = vmatmul.mubr.f32.gmra.mxu0 %v1098
        %v1170 = vpop.f32.mrf.mxu0
        %v1171 = vadd.f32 0.0, %v1170
        %v1172 = vpop.f32.mrf.mxu0
        %v1173 = vadd.f32 0.0, %v1172
        %1174 = vdwg.mxu0
        %v1175 = vadd.f32 %v1060, %v1171
        %v1176 = vadd.f32 %v1061, %v1173
        %v1177 = vld [vmem:[#allocation2] sm:$0xff]
        %v1178 = vld [vmem:[#allocation2 + $0x8] sm:$0xf]
        %s1179 = scalar_lea.vmem %s7, 6
        %v1180 = vld [vmem:[%s1179] ss:$8 sm:$0x3]
        %v1182 = vlaneseq
        %v1183 = vshrl.u32 %v1182, 7
        %v1184 = vsub.s32 0, %v1183
        %v1185 = vrot.slane %v1180, %v1184
        %v1186 = vlaneseq
        %v1187 = vshrl.u32 %v1186, 7
        %v1188 = vsub.s32 1, %v1187
        %v1189 = vrot.slane %v1180, %v1188
        %v1190 = vcombine.low %v1185, %v1189
        %1191 = vrot.lane.b32.xlu0 %v1190, 71
        %v1192 = vpop.permute.xlu0 %1191
        %v1193 = vrot.slane %v1192, 4
        %v1194 = vsel %vm746, %v1193, %v1192
        %v1197 = vmul.f32 %v1177, %v1194
        %v1198 = vmul.f32 %v1178, %v1193
        %s1199 = scalar_lea.vmem %s5, 48
        %v1200 = vld [vmem:[%s1199] sm:$0xff]
        %v1203 = vcombine.high %v1197, %v1197
        %1204 = vrot.lane.b32.xlu0 %v1197, 57
        %v1205 = vpop.permute.xlu0 %1204
        %1206 = vrot.lane.b32.xlu0 %v1203, 57
        %v1207 = vpop.permute.xlu0 %1206
        %1208 = vrot.lane.b32.xlu0 %v1198, 57
        %v1209 = vpop.permute.xlu0 %1208
        %v1210 = vsel %vm729, %v1205, %v1207
        %v1211 = vsel %vm729, %v1207, %v1209
        %v1213 = vsel %vm406, %v1200, 0
        %v1215 = vsel %vm410, %v1210, 0
        %v1217 = vsel %vm410, %v1211, 0
        %1219 = vmatprep.subr.mxu0 0.0
        %1220 = vmatpush1.msra.mxu0 0.0
        %1221 = vmatprep.subr.mxu0 0.0
        %1222 = vmatpush1.msra.mxu0 0.0
        %1223 = vmatprep.subr.mxu0 0.0
        %1224 = vmatpush1.msra.mxu0 0.0
        %1225 = vmatprep.subr.mxu0 0.0
        %1226 = vmatpush1.msra.mxu0 0.0
        %1227 = vmatprep.subr.mxu0 0.0
        %1228 = vmatpush1.msra.mxu0 0.0
        %1229 = vmatprep.subr.mxu0 0.0
        %1230 = vmatpush1.msra.mxu0 0.0
        %1231 = vmatprep.subr.mxu0 0.0
        %1232 = vmatpush1.msra.mxu0 0.0
        %1233 = vmatprep.subr.mxu0 0.0
        %1234 = vmatpush1.msra.mxu0 0.0
        %1235 = vmatprep.subr.mxu0 0.0
        %1236 = vmatpush1.msra.mxu0 0.0
        %1237 = vmatprep.subr.mxu0 0.0
        %1238 = vmatpush1.msra.mxu0 0.0
        %1239 = vmatprep.subr.mxu0 0.0
        %1240 = vmatpush1.msra.mxu0 0.0
        %1241 = vmatprep.subr.mxu0 0.0
        %1242 = vmatpush1.msra.mxu0 0.0
        %1243 = vmatprep.subr.mxu0 0.0
        %1244 = vmatpush1.msra.mxu0 0.0
        %1245 = vmatprep.subr.mxu0 0.0
        %1246 = vmatpush1.msra.mxu0 0.0
        %1247 = vmatprep.subr.mxu0 0.0
        %1248 = vmatpush1.msra.mxu0 0.0
        %1249 = vmatprep.subr.mxu0 %v1217
        %1250 = vmatpush1.msra.mxu0 %v1215
        %1251 = vmatprep.subr.mxu0 0.0
        %1252 = vmatpush2.msra.mxu0 0.0
        %1253 = vmatprep.subr.mxu0 0.0
        %1254 = vmatpush2.msra.mxu0 0.0
        %1255 = vmatprep.subr.mxu0 0.0
        %1256 = vmatpush2.msra.mxu0 0.0
        %1257 = vmatprep.subr.mxu0 0.0
        %1258 = vmatpush2.msra.mxu0 0.0
        %1259 = vmatprep.subr.mxu0 0.0
        %1260 = vmatpush2.msra.mxu0 0.0
        %1261 = vmatprep.subr.mxu0 0.0
        %1262 = vmatpush2.msra.mxu0 0.0
        %1263 = vmatprep.subr.mxu0 0.0
        %1264 = vmatpush2.msra.mxu0 0.0
        %1265 = vmatprep.subr.mxu0 0.0
        %1266 = vmatpush2.msra.mxu0 0.0
        %1267 = vmatprep.subr.mxu0 0.0
        %1268 = vmatpush2.msra.mxu0 0.0
        %1269 = vmatprep.subr.mxu0 0.0
        %1270 = vmatpush2.msra.mxu0 0.0
        %1271 = vmatprep.subr.mxu0 0.0
        %1272 = vmatpush2.msra.mxu0 0.0
        %1273 = vmatprep.subr.mxu0 0.0
        %1274 = vmatpush2.msra.mxu0 0.0
        %1275 = vmatprep.subr.mxu0 0.0
        %1276 = vmatpush2.msra.mxu0 0.0
        %1277 = vmatprep.subr.mxu0 0.0
        %1278 = vmatpush2.msra.mxu0 0.0
        %1279 = vmatprep.subr.mxu0 0.0
        %1280 = vmatpush2.msra.mxu0 0.0
        %1281 = vmatprep.subr.mxu0 0.0
        %1282 = vmatpush2.msra.mxu0 0.0
        %1283 = vmatprep.mubr.f32.mxu0 0.0
        %1284 = vmatmul.mubr.f32.gmra.mxu0 %v1213
        %v1285 = vpop.f32.mrf.mxu0
        %v1286 = vadd.f32 0.0, %v1285
        %v1287 = vpop.f32.mrf.mxu0
        %v1288 = vadd.f32 0.0, %v1287
        %1289 = vdwg.mxu0
        %v1290 = vadd.f32 %v1175, %v1286
        %v1291 = vadd.f32 %v1176, %v1288
        %v1292 = vld [vmem:[#allocation2] sm:$0xff]
        %v1293 = vld [vmem:[#allocation2 + $0x8] sm:$0xf]
        %s1294 = scalar_lea.vmem %s7, 7
        %v1295 = vld [vmem:[%s1294] ss:$8 sm:$0x3]
        %v1297 = vlaneseq
        %v1298 = vshrl.u32 %v1297, 7
        %v1299 = vsub.s32 0, %v1298
        %v1300 = vrot.slane %v1295, %v1299
        %v1301 = vlaneseq
        %v1302 = vshrl.u32 %v1301, 7
        %v1303 = vsub.s32 1, %v1302
        %v1304 = vrot.slane %v1295, %v1303
        %v1305 = vcombine.low %v1300, %v1304
        %1306 = vrot.lane.b32.xlu0 %v1305, 72
        %v1307 = vpop.permute.xlu0 %1306
        %v1308 = vrot.slane %v1307, 4
        %v1309 = vsel %vm541, %v1308, %v1307
        %v1312 = vmul.f32 %v1292, %v1309
        %v1313 = vmul.f32 %v1293, %v1308
        %s1314 = scalar_lea.vmem %s5, 56
        %v1315 = vld [vmem:[%s1314] sm:$0xff]
        %v1318 = vcombine.high %v1312, %v1312
        %1319 = vrot.lane.b32.xlu0 %v1312, 56
        %v1320 = vpop.permute.xlu0 %1319
        %1321 = vrot.lane.b32.xlu0 %v1318, 56
        %v1322 = vpop.permute.xlu0 %1321
        %1323 = vrot.lane.b32.xlu0 %v1313, 56
        %v1324 = vpop.permute.xlu0 %1323
        %v1325 = vsel %vm524, %v1320, %v1322
        %v1326 = vsel %vm524, %v1322, %v1324
        %v1328 = vsel %vm406, %v1315, 0
        %v1330 = vsel %vm410, %v1325, 0
        %v1332 = vsel %vm410, %v1326, 0
        %1334 = vmatprep.subr.mxu0 0.0
        %1335 = vmatpush1.msra.mxu0 0.0
        %1336 = vmatprep.subr.mxu0 0.0
        %1337 = vmatpush1.msra.mxu0 0.0
        %1338 = vmatprep.subr.mxu0 0.0
        %1339 = vmatpush1.msra.mxu0 0.0
        %1340 = vmatprep.subr.mxu0 0.0
        %1341 = vmatpush1.msra.mxu0 0.0
        %1342 = vmatprep.subr.mxu0 0.0
        %1343 = vmatpush1.msra.mxu0 0.0
        %1344 = vmatprep.subr.mxu0 0.0
        %1345 = vmatpush1.msra.mxu0 0.0
        %1346 = vmatprep.subr.mxu0 0.0
        %1347 = vmatpush1.msra.mxu0 0.0
        %1348 = vmatprep.subr.mxu0 0.0
        %1349 = vmatpush1.msra.mxu0 0.0
        %1350 = vmatprep.subr.mxu0 0.0
        %1351 = vmatpush1.msra.mxu0 0.0
        %1352 = vmatprep.subr.mxu0 0.0
        %1353 = vmatpush1.msra.mxu0 0.0
        %1354 = vmatprep.subr.mxu0 0.0
        %1355 = vmatpush1.msra.mxu0 0.0
        %1356 = vmatprep.subr.mxu0 0.0
        %1357 = vmatpush1.msra.mxu0 0.0
        %1358 = vmatprep.subr.mxu0 0.0
        %1359 = vmatpush1.msra.mxu0 0.0
        %1360 = vmatprep.subr.mxu0 0.0
        %1361 = vmatpush1.msra.mxu0 0.0
        %1362 = vmatprep.subr.mxu0 0.0
        %1363 = vmatpush1.msra.mxu0 0.0
        %1364 = vmatprep.subr.mxu0 %v1332
        %1365 = vmatpush1.msra.mxu0 %v1330
        %1366 = vmatprep.subr.mxu0 0.0
        %1367 = vmatpush2.msra.mxu0 0.0
        %1368 = vmatprep.subr.mxu0 0.0
        %1369 = vmatpush2.msra.mxu0 0.0
        %1370 = vmatprep.subr.mxu0 0.0
        %1371 = vmatpush2.msra.mxu0 0.0
        %1372 = vmatprep.subr.mxu0 0.0
        %1373 = vmatpush2.msra.mxu0 0.0
        %1374 = vmatprep.subr.mxu0 0.0
        %1375 = vmatpush2.msra.mxu0 0.0
        %1376 = vmatprep.subr.mxu0 0.0
        %1377 = vmatpush2.msra.mxu0 0.0
        %1378 = vmatprep.subr.mxu0 0.0
        %1379 = vmatpush2.msra.mxu0 0.0
        %1380 = vmatprep.subr.mxu0 0.0
        %1381 = vmatpush2.msra.mxu0 0.0
        %1382 = vmatprep.subr.mxu0 0.0
        %1383 = vmatpush2.msra.mxu0 0.0
        %1384 = vmatprep.subr.mxu0 0.0
        %1385 = vmatpush2.msra.mxu0 0.0
        %1386 = vmatprep.subr.mxu0 0.0
        %1387 = vmatpush2.msra.mxu0 0.0
        %1388 = vmatprep.subr.mxu0 0.0
        %1389 = vmatpush2.msra.mxu0 0.0
        %1390 = vmatprep.subr.mxu0 0.0
        %1391 = vmatpush2.msra.mxu0 0.0
        %1392 = vmatprep.subr.mxu0 0.0
        %1393 = vmatpush2.msra.mxu0 0.0
        %1394 = vmatprep.subr.mxu0 0.0
        %1395 = vmatpush2.msra.mxu0 0.0
        %1396 = vmatprep.subr.mxu0 0.0
        %1397 = vmatpush2.msra.mxu0 0.0
        %1398 = vmatprep.mubr.f32.mxu0 0.0
        %1399 = vmatmul.mubr.f32.gmra.mxu0 %v1328
        %v1400 = vpop.f32.mrf.mxu0
        %v1401 = vadd.f32 0.0, %v1400
        %v1402 = vpop.f32.mrf.mxu0
        %v1403 = vadd.f32 0.0, %v1402
        %1404 = vdwg.mxu0
        %v1405 = vadd.f32 %v1290, %v1401
        %v1406 = vadd.f32 %v1291, %v1403
        %v1407 = vld [vmem:[#allocation2] sm:$0xff]
        %v1408 = vld [vmem:[#allocation2 + $0x8] sm:$0xf]
        %s1409 = scalar_lea.vmem %s7, 16
        %v1410 = vld [vmem:[%s1409] ss:$8 sm:$0x3]
        %v1412 = vlaneseq
        %v1413 = vshrl.u32 %v1412, 7
        %v1414 = vsub.s32 0, %v1413
        %v1415 = vrot.slane %v1410, %v1414
        %v1416 = vlaneseq
        %v1417 = vshrl.u32 %v1416, 7
        %v1418 = vsub.s32 1, %v1417
        %v1419 = vrot.slane %v1410, %v1418
        %v1420 = vcombine.low %v1415, %v1419
        %1421 = vrot.lane.b32.xlu0 %v1420, 73
        %v1422 = vpop.permute.xlu0 %1421
        %v1423 = vrot.slane %v1422, 4
        %v1424 = vsel %vm631, %v1423, %v1422
        %v1427 = vmul.f32 %v1407, %v1424
        %v1428 = vmul.f32 %v1408, %v1423
        %s1429 = scalar_lea.vmem %s5, 64
        %v1430 = vld [vmem:[%s1429] sm:$0xff]
        %v1433 = vcombine.high %v1427, %v1427
        %1434 = vrot.lane.b32.xlu0 %v1427, 55
        %v1435 = vpop.permute.xlu0 %1434
        %1436 = vrot.lane.b32.xlu0 %v1433, 55
        %v1437 = vpop.permute.xlu0 %1436
        %1438 = vrot.lane.b32.xlu0 %v1428, 55
        %v1439 = vpop.permute.xlu0 %1438
        %v1440 = vsel %vm502, %v1435, %v1437
        %v1441 = vsel %vm502, %v1437, %v1439
        %v1443 = vsel %vm406, %v1430, 0
        %v1445 = vsel %vm410, %v1440, 0
        %v1447 = vsel %vm410, %v1441, 0
        %1449 = vmatprep.subr.mxu0 0.0
        %1450 = vmatpush1.msra.mxu0 0.0
        %1451 = vmatprep.subr.mxu0 0.0
        %1452 = vmatpush1.msra.mxu0 0.0
        %1453 = vmatprep.subr.mxu0 0.0
        %1454 = vmatpush1.msra.mxu0 0.0
        %1455 = vmatprep.subr.mxu0 0.0
        %1456 = vmatpush1.msra.mxu0 0.0
        %1457 = vmatprep.subr.mxu0 0.0
        %1458 = vmatpush1.msra.mxu0 0.0
        %1459 = vmatprep.subr.mxu0 0.0
        %1460 = vmatpush1.msra.mxu0 0.0
        %1461 = vmatprep.subr.mxu0 0.0
        %1462 = vmatpush1.msra.mxu0 0.0
        %1463 = vmatprep.subr.mxu0 0.0
        %1464 = vmatpush1.msra.mxu0 0.0
        %1465 = vmatprep.subr.mxu0 0.0
        %1466 = vmatpush1.msra.mxu0 0.0
        %1467 = vmatprep.subr.mxu0 0.0
        %1468 = vmatpush1.msra.mxu0 0.0
        %1469 = vmatprep.subr.mxu0 0.0
        %1470 = vmatpush1.msra.mxu0 0.0
        %1471 = vmatprep.subr.mxu0 0.0
        %1472 = vmatpush1.msra.mxu0 0.0
        %1473 = vmatprep.subr.mxu0 0.0
        %1474 = vmatpush1.msra.mxu0 0.0
        %1475 = vmatprep.subr.mxu0 0.0
        %1476 = vmatpush1.msra.mxu0 0.0
        %1477 = vmatprep.subr.mxu0 0.0
        %1478 = vmatpush1.msra.mxu0 0.0
        %1479 = vmatprep.subr.mxu0 %v1447
        %1480 = vmatpush1.msra.mxu0 %v1445
        %1481 = vmatprep.subr.mxu0 0.0
        %1482 = vmatpush2.msra.mxu0 0.0
        %1483 = vmatprep.subr.mxu0 0.0
        %1484 = vmatpush2.msra.mxu0 0.0
        %1485 = vmatprep.subr.mxu0 0.0
        %1486 = vmatpush2.msra.mxu0 0.0
        %1487 = vmatprep.subr.mxu0 0.0
        %1488 = vmatpush2.msra.mxu0 0.0
        %1489 = vmatprep.subr.mxu0 0.0
        %1490 = vmatpush2.msra.mxu0 0.0
        %1491 = vmatprep.subr.mxu0 0.0
        %1492 = vmatpush2.msra.mxu0 0.0
        %1493 = vmatprep.subr.mxu0 0.0
        %1494 = vmatpush2.msra.mxu0 0.0
        %1495 = vmatprep.subr.mxu0 0.0
        %1496 = vmatpush2.msra.mxu0 0.0
        %1497 = vmatprep.subr.mxu0 0.0
        %1498 = vmatpush2.msra.mxu0 0.0
        %1499 = vmatprep.subr.mxu0 0.0
        %1500 = vmatpush2.msra.mxu0 0.0
        %1501 = vmatprep.subr.mxu0 0.0
        %1502 = vmatpush2.msra.mxu0 0.0
        %1503 = vmatprep.subr.mxu0 0.0
        %1504 = vmatpush2.msra.mxu0 0.0
        %1505 = vmatprep.subr.mxu0 0.0
        %1506 = vmatpush2.msra.mxu0 0.0
        %1507 = vmatprep.subr.mxu0 0.0
        %1508 = vmatpush2.msra.mxu0 0.0
        %1509 = vmatprep.subr.mxu0 0.0
        %1510 = vmatpush2.msra.mxu0 0.0
        %1511 = vmatprep.subr.mxu0 0.0
        %1512 = vmatpush2.msra.mxu0 0.0
        %1513 = vmatprep.mubr.f32.mxu0 0.0
        %1514 = vmatmul.mubr.f32.gmra.mxu0 %v1443
        %v1515 = vpop.f32.mrf.mxu0
        %v1516 = vadd.f32 0.0, %v1515
        %v1517 = vpop.f32.mrf.mxu0
        %v1518 = vadd.f32 0.0, %v1517
        %1519 = vdwg.mxu0
        %v1520 = vadd.f32 %v1405, %v1516
        %v1521 = vadd.f32 %v1406, %v1518
        %v1522 = vld [vmem:[#allocation2] sm:$0xff]
        %v1523 = vld [vmem:[#allocation2 + $0x8] sm:$0xf]
        %s1524 = scalar_lea.vmem %s7, 17
        %v1525 = vld [vmem:[%s1524] ss:$8 sm:$0x3]
        %v1527 = vlaneseq
        %v1528 = vshrl.u32 %v1527, 7
        %v1529 = vsub.s32 0, %v1528
        %v1530 = vrot.slane %v1525, %v1529
        %v1531 = vlaneseq
        %v1532 = vshrl.u32 %v1531, 7
        %v1533 = vsub.s32 1, %v1532
        %v1534 = vrot.slane %v1525, %v1533
        %v1535 = vcombine.low %v1530, %v1534
        %1536 = vrot.lane.b32.xlu0 %v1535, 119
        %v1537 = vpop.permute.xlu0 %1536
        %v1538 = vrot.slane %v1537, 4
        %vm1539 = vcmask 973824
        %v1540 = vsel %vm1539, %v1538, %v1537
        %v1543 = vmul.f32 %v1522, %v1540
        %v1544 = vmul.f32 %v1523, %v1538
        %s1545 = scalar_lea.vmem %s5, 72
        %v1546 = vld [vmem:[%s1545] sm:$0xff]
        %v1549 = vcombine.high %v1543, %v1543
        %1550 = vrot.lane.b32.xlu0 %v1543, 9
        %v1551 = vpop.permute.xlu0 %1550
        %1552 = vrot.lane.b32.xlu0 %v1549, 9
        %v1553 = vpop.permute.xlu0 %1552
        %1554 = vrot.lane.b32.xlu0 %v1544, 9
        %v1555 = vpop.permute.xlu0 %1554
        %vm1556 = vcmask 72704
        %v1557 = vsel %vm1556, %v1551, %v1553
        %v1558 = vsel %vm1556, %v1553, %v1555
        %v1560 = vsel %vm406, %v1546, 0
        %v1562 = vsel %vm410, %v1557, 0
        %v1564 = vsel %vm410, %v1558, 0
        %1566 = vmatprep.subr.mxu0 0.0
        %1567 = vmatpush1.msra.mxu0 0.0
        %1568 = vmatprep.subr.mxu0 0.0
        %1569 = vmatpush1.msra.mxu0 0.0
        %1570 = vmatprep.subr.mxu0 0.0
        %1571 = vmatpush1.msra.mxu0 0.0
        %1572 = vmatprep.subr.mxu0 0.0
        %1573 = vmatpush1.msra.mxu0 0.0
        %1574 = vmatprep.subr.mxu0 0.0
        %1575 = vmatpush1.msra.mxu0 0.0
        %1576 = vmatprep.subr.mxu0 0.0
        %1577 = vmatpush1.msra.mxu0 0.0
        %1578 = vmatprep.subr.mxu0 0.0
        %1579 = vmatpush1.msra.mxu0 0.0
        %1580 = vmatprep.subr.mxu0 0.0
        %1581 = vmatpush1.msra.mxu0 0.0
        %1582 = vmatprep.subr.mxu0 0.0
        %1583 = vmatpush1.msra.mxu0 0.0
        %1584 = vmatprep.subr.mxu0 0.0
        %1585 = vmatpush1.msra.mxu0 0.0
        %1586 = vmatprep.subr.mxu0 0.0
        %1587 = vmatpush1.msra.mxu0 0.0
        %1588 = vmatprep.subr.mxu0 0.0
        %1589 = vmatpush1.msra.mxu0 0.0
        %1590 = vmatprep.subr.mxu0 0.0
        %1591 = vmatpush1.msra.mxu0 0.0
        %1592 = vmatprep.subr.mxu0 0.0
        %1593 = vmatpush1.msra.mxu0 0.0
        %1594 = vmatprep.subr.mxu0 0.0
        %1595 = vmatpush1.msra.mxu0 0.0
        %1596 = vmatprep.subr.mxu0 %v1564
        %1597 = vmatpush1.msra.mxu0 %v1562
        %1598 = vmatprep.subr.mxu0 0.0
        %1599 = vmatpush2.msra.mxu0 0.0
        %1600 = vmatprep.subr.mxu0 0.0
        %1601 = vmatpush2.msra.mxu0 0.0
        %1602 = vmatprep.subr.mxu0 0.0
        %1603 = vmatpush2.msra.mxu0 0.0
        %1604 = vmatprep.subr.mxu0 0.0
        %1605 = vmatpush2.msra.mxu0 0.0
        %1606 = vmatprep.subr.mxu0 0.0
        %1607 = vmatpush2.msra.mxu0 0.0
        %1608 = vmatprep.subr.mxu0 0.0
        %1609 = vmatpush2.msra.mxu0 0.0
        %1610 = vmatprep.subr.mxu0 0.0
        %1611 = vmatpush2.msra.mxu0 0.0
        %1612 = vmatprep.subr.mxu0 0.0
        %1613 = vmatpush2.msra.mxu0 0.0
        %1614 = vmatprep.subr.mxu0 0.0
        %1615 = vmatpush2.msra.mxu0 0.0
        %1616 = vmatprep.subr.mxu0 0.0
        %1617 = vmatpush2.msra.mxu0 0.0
        %1618 = vmatprep.subr.mxu0 0.0
        %1619 = vmatpush2.msra.mxu0 0.0
        %1620 = vmatprep.subr.mxu0 0.0
        %1621 = vmatpush2.msra.mxu0 0.0
        %1622 = vmatprep.subr.mxu0 0.0
        %1623 = vmatpush2.msra.mxu0 0.0
        %1624 = vmatprep.subr.mxu0 0.0
        %1625 = vmatpush2.msra.mxu0 0.0
        %1626 = vmatprep.subr.mxu0 0.0
        %1627 = vmatpush2.msra.mxu0 0.0
        %1628 = vmatprep.subr.mxu0 0.0
        %1629 = vmatpush2.msra.mxu0 0.0
        %1630 = vmatprep.mubr.f32.mxu0 0.0
        %1631 = vmatmul.mubr.f32.gmra.mxu0 %v1560
        %v1632 = vpop.f32.mrf.mxu0
        %v1633 = vadd.f32 0.0, %v1632
        %v1634 = vpop.f32.mrf.mxu0
        %v1635 = vadd.f32 0.0, %v1634
        %1636 = vdwg.mxu0
        %v1637 = vadd.f32 %v1520, %v1633
        %v1638 = vadd.f32 %v1521, %v1635
        %v1639 = vld [vmem:[#allocation2] sm:$0xff]
        %v1640 = vld [vmem:[#allocation2 + $0x8] sm:$0xf]
        %s1641 = scalar_lea.vmem %s7, 18
        %v1642 = vld [vmem:[%s1641] ss:$8 sm:$0x3]
        %v1644 = vlaneseq
        %v1645 = vshrl.u32 %v1644, 7
        %v1646 = vsub.s32 0, %v1645
        %v1647 = vrot.slane %v1642, %v1646
        %v1648 = vlaneseq
        %v1649 = vshrl.u32 %v1648, 7
        %v1650 = vsub.s32 1, %v1649
        %v1651 = vrot.slane %v1642, %v1650
        %v1652 = vcombine.low %v1647, %v1651
        %1653 = vrot.lane.b32.xlu0 %v1652, 120
        %v1654 = vpop.permute.xlu0 %1653
        %v1655 = vrot.slane %v1654, 4
        %vm1656 = vcmask 982016
        %v1657 = vsel %vm1656, %v1655, %v1654
        %v1660 = vmul.f32 %v1639, %v1657
        %v1661 = vmul.f32 %v1640, %v1655
        %s1662 = scalar_lea.vmem %s5, 80
        %v1663 = vld [vmem:[%s1662] sm:$0xff]
        %v1666 = vcombine.high %v1660, %v1660
        %1667 = vrot.lane.b32.xlu0 %v1660, 8
        %v1668 = vpop.permute.xlu0 %1667
        %1669 = vrot.lane.b32.xlu0 %v1666, 8
        %v1670 = vpop.permute.xlu0 %1669
        %1671 = vrot.lane.b32.xlu0 %v1661, 8
        %v1672 = vpop.permute.xlu0 %1671
        %vm1673 = vcmask 64512
        %v1674 = vsel %vm1673, %v1668, %v1670
        %v1675 = vsel %vm1673, %v1670, %v1672
        %v1677 = vsel %vm406, %v1663, 0
        %v1679 = vsel %vm410, %v1674, 0
        %v1681 = vsel %vm410, %v1675, 0
        %1683 = vmatprep.subr.mxu0 0.0
        %1684 = vmatpush1.msra.mxu0 0.0
        %1685 = vmatprep.subr.mxu0 0.0
        %1686 = vmatpush1.msra.mxu0 0.0
        %1687 = vmatprep.subr.mxu0 0.0
        %1688 = vmatpush1.msra.mxu0 0.0
        %1689 = vmatprep.subr.mxu0 0.0
        %1690 = vmatpush1.msra.mxu0 0.0
        %1691 = vmatprep.subr.mxu0 0.0
        %1692 = vmatpush1.msra.mxu0 0.0
        %1693 = vmatprep.subr.mxu0 0.0
        %1694 = vmatpush1.msra.mxu0 0.0
        %1695 = vmatprep.subr.mxu0 0.0
        %1696 = vmatpush1.msra.mxu0 0.0
        %1697 = vmatprep.subr.mxu0 0.0
        %1698 = vmatpush1.msra.mxu0 0.0
        %1699 = vmatprep.subr.mxu0 0.0
        %1700 = vmatpush1.msra.mxu0 0.0
        %1701 = vmatprep.subr.mxu0 0.0
        %1702 = vmatpush1.msra.mxu0 0.0
        %1703 = vmatprep.subr.mxu0 0.0
        %1704 = vmatpush1.msra.mxu0 0.0
        %1705 = vmatprep.subr.mxu0 0.0
        %1706 = vmatpush1.msra.mxu0 0.0
        %1707 = vmatprep.subr.mxu0 0.0
        %1708 = vmatpush1.msra.mxu0 0.0
        %1709 = vmatprep.subr.mxu0 0.0
        %1710 = vmatpush1.msra.mxu0 0.0
        %1711 = vmatprep.subr.mxu0 0.0
        %1712 = vmatpush1.msra.mxu0 0.0
        %1713 = vmatprep.subr.mxu0 %v1681
        %1714 = vmatpush1.msra.mxu0 %v1679
        %1715 = vmatprep.subr.mxu0 0.0
        %1716 = vmatpush2.msra.mxu0 0.0
        %1717 = vmatprep.subr.mxu0 0.0
        %1718 = vmatpush2.msra.mxu0 0.0
        %1719 = vmatprep.subr.mxu0 0.0
        %1720 = vmatpush2.msra.mxu0 0.0
        %1721 = vmatprep.subr.mxu0 0.0
        %1722 = vmatpush2.msra.mxu0 0.0
        %1723 = vmatprep.subr.mxu0 0.0
        %1724 = vmatpush2.msra.mxu0 0.0
        %1725 = vmatprep.subr.mxu0 0.0
        %1726 = vmatpush2.msra.mxu0 0.0
        %1727 = vmatprep.subr.mxu0 0.0
        %1728 = vmatpush2.msra.mxu0 0.0
        %1729 = vmatprep.subr.mxu0 0.0
        %1730 = vmatpush2.msra.mxu0 0.0
        %1731 = vmatprep.subr.mxu0 0.0
        %1732 = vmatpush2.msra.mxu0 0.0
        %1733 = vmatprep.subr.mxu0 0.0
        %1734 = vmatpush2.msra.mxu0 0.0
        %1735 = vmatprep.subr.mxu0 0.0
        %1736 = vmatpush2.msra.mxu0 0.0
        %1737 = vmatprep.subr.mxu0 0.0
        %1738 = vmatpush2.msra.mxu0 0.0
        %1739 = vmatprep.subr.mxu0 0.0
        %1740 = vmatpush2.msra.mxu0 0.0
        %1741 = vmatprep.subr.mxu0 0.0
        %1742 = vmatpush2.msra.mxu0 0.0
        %1743 = vmatprep.subr.mxu0 0.0
        %1744 = vmatpush2.msra.mxu0 0.0
        %1745 = vmatprep.subr.mxu0 0.0
        %1746 = vmatpush2.msra.mxu0 0.0
        %1747 = vmatprep.mubr.f32.mxu0 0.0
        %1748 = vmatmul.mubr.f32.gmra.mxu0 %v1677
        %v1749 = vpop.f32.mrf.mxu0
        %v1750 = vadd.f32 0.0, %v1749
        %v1751 = vpop.f32.mrf.mxu0
        %v1752 = vadd.f32 0.0, %v1751
        %1753 = vdwg.mxu0
        %v1754 = vadd.f32 %v1637, %v1750
        %v1755 = vadd.f32 %v1638, %v1752
        %v1756 = vld [vmem:[#allocation2] sm:$0xff]
        %v1757 = vld [vmem:[#allocation2 + $0x8] sm:$0xf]
        %s1758 = scalar_lea.vmem %s7, 19
        %v1759 = vld [vmem:[%s1758] ss:$8 sm:$0x3]
        %v1761 = vlaneseq
        %v1762 = vshrl.u32 %v1761, 7
        %v1763 = vsub.s32 0, %v1762
        %v1764 = vrot.slane %v1759, %v1763
        %v1765 = vlaneseq
        %v1766 = vshrl.u32 %v1765, 7
        %v1767 = vsub.s32 1, %v1766
        %v1768 = vrot.slane %v1759, %v1767
        %v1769 = vcombine.low %v1764, %v1768
        %1770 = vrot.lane.b32.xlu0 %v1769, 121
        %v1771 = vpop.permute.xlu0 %1770
        %v1772 = vrot.slane %v1771, 4
        %vm1773 = vcmask 990208
        %v1774 = vsel %vm1773, %v1772, %v1771
        %v1777 = vmul.f32 %v1756, %v1774
        %v1778 = vmul.f32 %v1757, %v1772
        %s1779 = scalar_lea.vmem %s5, 88
        %v1780 = vld [vmem:[%s1779] sm:$0xff]
        %v1783 = vcombine.high %v1777, %v1777
        %1784 = vrot.lane.b32.xlu0 %v1777, 7
        %v1785 = vpop.permute.xlu0 %1784
        %1786 = vrot.lane.b32.xlu0 %v1783, 7
        %v1787 = vpop.permute.xlu0 %1786
        %1788 = vrot.lane.b32.xlu0 %v1778, 7
        %v1789 = vpop.permute.xlu0 %1788
        %vm1790 = vcmask 56320
        %v1791 = vsel %vm1790, %v1785, %v1787
        %v1792 = vsel %vm1790, %v1787, %v1789
        %v1794 = vsel %vm406, %v1780, 0
        %v1796 = vsel %vm410, %v1791, 0
        %v1798 = vsel %vm410, %v1792, 0
        %1800 = vmatprep.subr.mxu0 0.0
        %1801 = vmatpush1.msra.mxu0 0.0
        %1802 = vmatprep.subr.mxu0 0.0
        %1803 = vmatpush1.msra.mxu0 0.0
        %1804 = vmatprep.subr.mxu0 0.0
        %1805 = vmatpush1.msra.mxu0 0.0
        %1806 = vmatprep.subr.mxu0 0.0
        %1807 = vmatpush1.msra.mxu0 0.0
        %1808 = vmatprep.subr.mxu0 0.0
        %1809 = vmatpush1.msra.mxu0 0.0
        %1810 = vmatprep.subr.mxu0 0.0
        %1811 = vmatpush1.msra.mxu0 0.0
        %1812 = vmatprep.subr.mxu0 0.0
        %1813 = vmatpush1.msra.mxu0 0.0
        %1814 = vmatprep.subr.mxu0 0.0
        %1815 = vmatpush1.msra.mxu0 0.0
        %1816 = vmatprep.subr.mxu0 0.0
        %1817 = vmatpush1.msra.mxu0 0.0
        %1818 = vmatprep.subr.mxu0 0.0
        %1819 = vmatpush1.msra.mxu0 0.0
        %1820 = vmatprep.subr.mxu0 0.0
        %1821 = vmatpush1.msra.mxu0 0.0
        %1822 = vmatprep.subr.mxu0 0.0
        %1823 = vmatpush1.msra.mxu0 0.0
        %1824 = vmatprep.subr.mxu0 0.0
        %1825 = vmatpush1.msra.mxu0 0.0
        %1826 = vmatprep.subr.mxu0 0.0
        %1827 = vmatpush1.msra.mxu0 0.0
        %1828 = vmatprep.subr.mxu0 0.0
        %1829 = vmatpush1.msra.mxu0 0.0
        %1830 = vmatprep.subr.mxu0 %v1798
        %1831 = vmatpush1.msra.mxu0 %v1796
        %1832 = vmatprep.subr.mxu0 0.0
        %1833 = vmatpush2.msra.mxu0 0.0
        %1834 = vmatprep.subr.mxu0 0.0
        %1835 = vmatpush2.msra.mxu0 0.0
        %1836 = vmatprep.subr.mxu0 0.0
        %1837 = vmatpush2.msra.mxu0 0.0
        %1838 = vmatprep.subr.mxu0 0.0
        %1839 = vmatpush2.msra.mxu0 0.0
        %1840 = vmatprep.subr.mxu0 0.0
        %1841 = vmatpush2.msra.mxu0 0.0
        %1842 = vmatprep.subr.mxu0 0.0
        %1843 = vmatpush2.msra.mxu0 0.0
        %1844 = vmatprep.subr.mxu0 0.0
        %1845 = vmatpush2.msra.mxu0 0.0
        %1846 = vmatprep.subr.mxu0 0.0
        %1847 = vmatpush2.msra.mxu0 0.0
        %1848 = vmatprep.subr.mxu0 0.0
        %1849 = vmatpush2.msra.mxu0 0.0
        %1850 = vmatprep.subr.mxu0 0.0
        %1851 = vmatpush2.msra.mxu0 0.0
        %1852 = vmatprep.subr.mxu0 0.0
        %1853 = vmatpush2.msra.mxu0 0.0
        %1854 = vmatprep.subr.mxu0 0.0
        %1855 = vmatpush2.msra.mxu0 0.0
        %1856 = vmatprep.subr.mxu0 0.0
        %1857 = vmatpush2.msra.mxu0 0.0
        %1858 = vmatprep.subr.mxu0 0.0
        %1859 = vmatpush2.msra.mxu0 0.0
        %1860 = vmatprep.subr.mxu0 0.0
        %1861 = vmatpush2.msra.mxu0 0.0
        %1862 = vmatprep.subr.mxu0 0.0
        %1863 = vmatpush2.msra.mxu0 0.0
        %1864 = vmatprep.mubr.f32.mxu0 0.0
        %1865 = vmatmul.mubr.f32.gmra.mxu0 %v1794
        %v1866 = vpop.f32.mrf.mxu0
        %v1867 = vadd.f32 0.0, %v1866
        %v1868 = vpop.f32.mrf.mxu0
        %v1869 = vadd.f32 0.0, %v1868
        %1870 = vdwg.mxu0
        %v1871 = vadd.f32 %v1754, %v1867
        %v1872 = vadd.f32 %v1755, %v1869
        %v1873 = vld [vmem:[#allocation2] sm:$0xff]
        %v1874 = vld [vmem:[#allocation2 + $0x8] sm:$0xf]
        %s1875 = scalar_lea.vmem %s7, 20
        %v1876 = vld [vmem:[%s1875] ss:$8 sm:$0x3]
        %v1878 = vlaneseq
        %v1879 = vshrl.u32 %v1878, 7
        %v1880 = vsub.s32 0, %v1879
        %v1881 = vrot.slane %v1876, %v1880
        %v1882 = vlaneseq
        %v1883 = vshrl.u32 %v1882, 7
        %v1884 = vsub.s32 1, %v1883
        %v1885 = vrot.slane %v1876, %v1884
        %v1886 = vcombine.low %v1881, %v1885
        %1887 = vrot.lane.b32.xlu0 %v1886, 127
        %v1888 = vpop.permute.xlu0 %1887
        %v1889 = vrot.slane %v1888, 4
        %vm1890 = vcmask 1039360
        %v1891 = vsel %vm1890, %v1889, %v1888
        %v1894 = vmul.f32 %v1873, %v1891
        %v1895 = vmul.f32 %v1874, %v1889
        %s1896 = scalar_lea.vmem %s5, 96
        %v1897 = vld [vmem:[%s1896] sm:$0xff]
        %v1900 = vcombine.high %v1894, %v1894
        %1901 = vrot.lane.b32.xlu0 %v1894, 1
        %v1902 = vpop.permute.xlu0 %1901
        %1903 = vrot.lane.b32.xlu0 %v1900, 1
        %v1904 = vpop.permute.xlu0 %1903
        %1905 = vrot.lane.b32.xlu0 %v1895, 1
        %v1906 = vpop.permute.xlu0 %1905
        %vm1907 = vcmask 7168
        %v1908 = vsel %vm1907, %v1902, %v1904
        %v1909 = vsel %vm1907, %v1904, %v1906
        %v1911 = vsel %vm406, %v1897, 0
        %v1913 = vsel %vm410, %v1908, 0
        %v1915 = vsel %vm410, %v1909, 0
        %1917 = vmatprep.subr.mxu0 0.0
        %1918 = vmatpush1.msra.mxu0 0.0
        %1919 = vmatprep.subr.mxu0 0.0
        %1920 = vmatpush1.msra.mxu0 0.0
        %1921 = vmatprep.subr.mxu0 0.0
        %1922 = vmatpush1.msra.mxu0 0.0
        %1923 = vmatprep.subr.mxu0 0.0
        %1924 = vmatpush1.msra.mxu0 0.0
        %1925 = vmatprep.subr.mxu0 0.0
        %1926 = vmatpush1.msra.mxu0 0.0
        %1927 = vmatprep.subr.mxu0 0.0
        %1928 = vmatpush1.msra.mxu0 0.0
        %1929 = vmatprep.subr.mxu0 0.0
        %1930 = vmatpush1.msra.mxu0 0.0
        %1931 = vmatprep.subr.mxu0 0.0
        %1932 = vmatpush1.msra.mxu0 0.0
        %1933 = vmatprep.subr.mxu0 0.0
        %1934 = vmatpush1.msra.mxu0 0.0
        %1935 = vmatprep.subr.mxu0 0.0
        %1936 = vmatpush1.msra.mxu0 0.0
        %1937 = vmatprep.subr.mxu0 0.0
        %1938 = vmatpush1.msra.mxu0 0.0
        %1939 = vmatprep.subr.mxu0 0.0
        %1940 = vmatpush1.msra.mxu0 0.0
        %1941 = vmatprep.subr.mxu0 0.0
        %1942 = vmatpush1.msra.mxu0 0.0
        %1943 = vmatprep.subr.mxu0 0.0
        %1944 = vmatpush1.msra.mxu0 0.0
        %1945 = vmatprep.subr.mxu0 0.0
        %1946 = vmatpush1.msra.mxu0 0.0
        %1947 = vmatprep.subr.mxu0 %v1915
        %1948 = vmatpush1.msra.mxu0 %v1913
        %1949 = vmatprep.subr.mxu0 0.0
        %1950 = vmatpush2.msra.mxu0 0.0
        %1951 = vmatprep.subr.mxu0 0.0
        %1952 = vmatpush2.msra.mxu0 0.0
        %1953 = vmatprep.subr.mxu0 0.0
        %1954 = vmatpush2.msra.mxu0 0.0
        %1955 = vmatprep.subr.mxu0 0.0
        %1956 = vmatpush2.msra.mxu0 0.0
        %1957 = vmatprep.subr.mxu0 0.0
        %1958 = vmatpush2.msra.mxu0 0.0
        %1959 = vmatprep.subr.mxu0 0.0
        %1960 = vmatpush2.msra.mxu0 0.0
        %1961 = vmatprep.subr.mxu0 0.0
        %1962 = vmatpush2.msra.mxu0 0.0
        %1963 = vmatprep.subr.mxu0 0.0
        %1964 = vmatpush2.msra.mxu0 0.0
        %1965 = vmatprep.subr.mxu0 0.0
        %1966 = vmatpush2.msra.mxu0 0.0
        %1967 = vmatprep.subr.mxu0 0.0
        %1968 = vmatpush2.msra.mxu0 0.0
        %1969 = vmatprep.subr.mxu0 0.0
        %1970 = vmatpush2.msra.mxu0 0.0
        %1971 = vmatprep.subr.mxu0 0.0
        %1972 = vmatpush2.msra.mxu0 0.0
        %1973 = vmatprep.subr.mxu0 0.0
        %1974 = vmatpush2.msra.mxu0 0.0
        %1975 = vmatprep.subr.mxu0 0.0
        %1976 = vmatpush2.msra.mxu0 0.0
        %1977 = vmatprep.subr.mxu0 0.0
        %1978 = vmatpush2.msra.mxu0 0.0
        %1979 = vmatprep.subr.mxu0 0.0
        %1980 = vmatpush2.msra.mxu0 0.0
        %1981 = vmatprep.mubr.f32.mxu0 0.0
        %1982 = vmatmul.mubr.f32.gmra.mxu0 %v1911
        %v1983 = vpop.f32.mrf.mxu0
        %v1984 = vadd.f32 0.0, %v1983
        %v1985 = vpop.f32.mrf.mxu0
        %v1986 = vadd.f32 0.0, %v1985
        %1987 = vdwg.mxu0
        %v1988 = vadd.f32 %v1871, %v1984
        %v1989 = vadd.f32 %v1872, %v1986
        %s1990 = scalar_lea.vmem %s5, 104
        %v1991 = vld [vmem:[%s1990] sm:$0xff]
        %v1993 = vsel %vm406, %v1991, 0
        %1995 = vmatprep.subr.mxu0 0.0
        %1996 = vmatpush1.msra.mxu0 0.0
        %1997 = vmatprep.subr.mxu0 0.0
        %1998 = vmatpush1.msra.mxu0 0.0
        %1999 = vmatprep.subr.mxu0 0.0
        %2000 = vmatpush1.msra.mxu0 0.0
        %2001 = vmatprep.subr.mxu0 0.0
        %2002 = vmatpush1.msra.mxu0 0.0
        %2003 = vmatprep.subr.mxu0 0.0
        %2004 = vmatpush1.msra.mxu0 0.0
        %2005 = vmatprep.subr.mxu0 0.0
        %2006 = vmatpush1.msra.mxu0 0.0
        %2007 = vmatprep.subr.mxu0 0.0
        %2008 = vmatpush1.msra.mxu0 0.0
        %2009 = vmatprep.subr.mxu0 0.0
        %2010 = vmatpush1.msra.mxu0 0.0
        %2011 = vmatprep.subr.mxu0 0.0
        %2012 = vmatpush1.msra.mxu0 0.0
        %2013 = vmatprep.subr.mxu0 0.0
        %2014 = vmatpush1.msra.mxu0 0.0
        %2015 = vmatprep.subr.mxu0 0.0
        %2016 = vmatpush1.msra.mxu0 0.0
        %2017 = vmatprep.subr.mxu0 0.0
        %2018 = vmatpush1.msra.mxu0 0.0
        %2019 = vmatprep.subr.mxu0 0.0
        %2020 = vmatpush1.msra.mxu0 0.0
        %2021 = vmatprep.subr.mxu0 0.0
        %2022 = vmatpush1.msra.mxu0 0.0
        %2023 = vmatprep.subr.mxu0 0.0
        %2024 = vmatpush1.msra.mxu0 0.0
        %2025 = vmatprep.subr.mxu0 %v413
        %2026 = vmatpush1.msra.mxu0 %v411
        %2027 = vmatprep.subr.mxu0 0.0
        %2028 = vmatpush2.msra.mxu0 0.0
        %2029 = vmatprep.subr.mxu0 0.0
        %2030 = vmatpush2.msra.mxu0 0.0
        %2031 = vmatprep.subr.mxu0 0.0
        %2032 = vmatpush2.msra.mxu0 0.0
        %2033 = vmatprep.subr.mxu0 0.0
        %2034 = vmatpush2.msra.mxu0 0.0
        %2035 = vmatprep.subr.mxu0 0.0
        %2036 = vmatpush2.msra.mxu0 0.0
        %2037 = vmatprep.subr.mxu0 0.0
        %2038 = vmatpush2.msra.mxu0 0.0
        %2039 = vmatprep.subr.mxu0 0.0
        %2040 = vmatpush2.msra.mxu0 0.0
        %2041 = vmatprep.subr.mxu0 0.0
        %2042 = vmatpush2.msra.mxu0 0.0
        %2043 = vmatprep.subr.mxu0 0.0
        %2044 = vmatpush2.msra.mxu0 0.0
        %2045 = vmatprep.subr.mxu0 0.0
        %2046 = vmatpush2.msra.mxu0 0.0
        %2047 = vmatprep.subr.mxu0 0.0
        %2048 = vmatpush2.msra.mxu0 0.0
        %2049 = vmatprep.subr.mxu0 0.0
        %2050 = vmatpush2.msra.mxu0 0.0
        %2051 = vmatprep.subr.mxu0 0.0
        %2052 = vmatpush2.msra.mxu0 0.0
        %2053 = vmatprep.subr.mxu0 0.0
        %2054 = vmatpush2.msra.mxu0 0.0
        %2055 = vmatprep.subr.mxu0 0.0
        %2056 = vmatpush2.msra.mxu0 0.0
        %2057 = vmatprep.subr.mxu0 0.0
        %2058 = vmatpush2.msra.mxu0 0.0
        %2059 = vmatprep.mubr.f32.mxu0 0.0
        %2060 = vmatmul.mubr.f32.gmra.mxu0 %v1993
        %v2061 = vpop.f32.mrf.mxu0
        %v2062 = vadd.f32 0.0, %v2061
        %v2063 = vpop.f32.mrf.mxu0
        %v2064 = vadd.f32 0.0, %v2063
        %2065 = vdwg.mxu0
        %v2066 = vadd.f32 %v1988, %v2062
        %v2067 = vadd.f32 %v1989, %v2064
        %v2068 = vld [vmem:[#allocation2 + $0x4] sm:$0xff]
        %v2069 = vld [vmem:[#allocation2 + $0xc] sm:$0xf]
        %s2070 = scalar_lea.vmem %s7, 22
        %v2071 = vld [vmem:[%s2070] ss:$8 sm:$0x3]
        %v2073 = vlaneseq
        %v2074 = vshrl.u32 %v2073, 7
        %v2075 = vsub.s32 0, %v2074
        %v2076 = vrot.slane %v2071, %v2075
        %v2077 = vlaneseq
        %v2078 = vshrl.u32 %v2077, 7
        %v2079 = vsub.s32 1, %v2078
        %v2080 = vrot.slane %v2071, %v2079
        %v2081 = vcombine.low %v2076, %v2080
        %2082 = vrot.lane.b32.xlu0 %v2081, 1
        %v2083 = vpop.permute.xlu0 %2082
        %v2084 = vrot.slane %v2083, 4
        %v2085 = vsel %vm1907, %v2084, %v2083
        %v2088 = vmul.f32 %v2068, %v2085
        %v2089 = vmul.f32 %v2069, %v2084
        %s2090 = scalar_lea.vmem %s5, 112
        %v2091 = vld [vmem:[%s2090] sm:$0xff]
        %v2094 = vcombine.high %v2088, %v2088
        %2095 = vrot.lane.b32.xlu0 %v2088, 127
        %v2096 = vpop.permute.xlu0 %2095
        %2097 = vrot.lane.b32.xlu0 %v2094, 127
        %v2098 = vpop.permute.xlu0 %2097
        %2099 = vrot.lane.b32.xlu0 %v2089, 127
        %v2100 = vpop.permute.xlu0 %2099
        %v2101 = vsel %vm1890, %v2096, %v2098
        %v2102 = vsel %vm1890, %v2098, %v2100
        %v2104 = vsel %vm406, %v2091, 0
        %v2106 = vsel %vm410, %v2101, 0
        %v2108 = vsel %vm410, %v2102, 0
        %2110 = vmatprep.subr.mxu0 0.0
        %2111 = vmatpush1.msra.mxu0 0.0
        %2112 = vmatprep.subr.mxu0 0.0
        %2113 = vmatpush1.msra.mxu0 0.0
        %2114 = vmatprep.subr.mxu0 0.0
        %2115 = vmatpush1.msra.mxu0 0.0
        %2116 = vmatprep.subr.mxu0 0.0
        %2117 = vmatpush1.msra.mxu0 0.0
        %2118 = vmatprep.subr.mxu0 0.0
        %2119 = vmatpush1.msra.mxu0 0.0
        %2120 = vmatprep.subr.mxu0 0.0
        %2121 = vmatpush1.msra.mxu0 0.0
        %2122 = vmatprep.subr.mxu0 0.0
        %2123 = vmatpush1.msra.mxu0 0.0
        %2124 = vmatprep.subr.mxu0 0.0
        %2125 = vmatpush1.msra.mxu0 0.0
        %2126 = vmatprep.subr.mxu0 0.0
        %2127 = vmatpush1.msra.mxu0 0.0
        %2128 = vmatprep.subr.mxu0 0.0
        %2129 = vmatpush1.msra.mxu0 0.0
        %2130 = vmatprep.subr.mxu0 0.0
        %2131 = vmatpush1.msra.mxu0 0.0
        %2132 = vmatprep.subr.mxu0 0.0
        %2133 = vmatpush1.msra.mxu0 0.0
        %2134 = vmatprep.subr.mxu0 0.0
        %2135 = vmatpush1.msra.mxu0 0.0
        %2136 = vmatprep.subr.mxu0 0.0
        %2137 = vmatpush1.msra.mxu0 0.0
        %2138 = vmatprep.subr.mxu0 0.0
        %2139 = vmatpush1.msra.mxu0 0.0
        %2140 = vmatprep.subr.mxu0 %v2108
        %2141 = vmatpush1.msra.mxu0 %v2106
        %2142 = vmatprep.subr.mxu0 0.0
        %2143 = vmatpush2.msra.mxu0 0.0
        %2144 = vmatprep.subr.mxu0 0.0
        %2145 = vmatpush2.msra.mxu0 0.0
        %2146 = vmatprep.subr.mxu0 0.0
        %2147 = vmatpush2.msra.mxu0 0.0
        %2148 = vmatprep.subr.mxu0 0.0
        %2149 = vmatpush2.msra.mxu0 0.0
        %2150 = vmatprep.subr.mxu0 0.0
        %2151 = vmatpush2.msra.mxu0 0.0
        %2152 = vmatprep.subr.mxu0 0.0
        %2153 = vmatpush2.msra.mxu0 0.0
        %2154 = vmatprep.subr.mxu0 0.0
        %2155 = vmatpush2.msra.mxu0 0.0
        %2156 = vmatprep.subr.mxu0 0.0
        %2157 = vmatpush2.msra.mxu0 0.0
        %2158 = vmatprep.subr.mxu0 0.0
        %2159 = vmatpush2.msra.mxu0 0.0
        %2160 = vmatprep.subr.mxu0 0.0
        %2161 = vmatpush2.msra.mxu0 0.0
        %2162 = vmatprep.subr.mxu0 0.0
        %2163 = vmatpush2.msra.mxu0 0.0
        %2164 = vmatprep.subr.mxu0 0.0
        %2165 = vmatpush2.msra.mxu0 0.0
        %2166 = vmatprep.subr.mxu0 0.0
        %2167 = vmatpush2.msra.mxu0 0.0
        %2168 = vmatprep.subr.mxu0 0.0
        %2169 = vmatpush2.msra.mxu0 0.0
        %2170 = vmatprep.subr.mxu0 0.0
        %2171 = vmatpush2.msra.mxu0 0.0
        %2172 = vmatprep.subr.mxu0 0.0
        %2173 = vmatpush2.msra.mxu0 0.0
        %2174 = vmatprep.mubr.f32.mxu0 0.0
        %2175 = vmatmul.mubr.f32.gmra.mxu0 %v2104
        %v2176 = vpop.f32.mrf.mxu0
        %v2177 = vadd.f32 0.0, %v2176
        %v2178 = vpop.f32.mrf.mxu0
        %v2179 = vadd.f32 0.0, %v2178
        %2180 = vdwg.mxu0
        %v2181 = vadd.f32 %v2066, %v2177
        %v2182 = vadd.f32 %v2067, %v2179
        %v2183 = vld [vmem:[#allocation2 + $0x4] sm:$0xff]
        %v2184 = vld [vmem:[#allocation2 + $0xc] sm:$0xf]
        %s2185 = scalar_lea.vmem %s7, 23
        %v2186 = vld [vmem:[%s2185] ss:$8 sm:$0x3]
        %v2188 = vlaneseq
        %v2189 = vshrl.u32 %v2188, 7
        %v2190 = vsub.s32 0, %v2189
        %v2191 = vrot.slane %v2186, %v2190
        %v2192 = vlaneseq
        %v2193 = vshrl.u32 %v2192, 7
        %v2194 = vsub.s32 1, %v2193
        %v2195 = vrot.slane %v2186, %v2194
        %v2196 = vcombine.low %v2191, %v2195
        %2197 = vrot.lane.b32.xlu0 %v2196, 7
        %v2198 = vpop.permute.xlu0 %2197
        %v2199 = vrot.slane %v2198, 4
        %v2200 = vsel %vm1790, %v2199, %v2198
        %v2203 = vmul.f32 %v2183, %v2200
        %v2204 = vmul.f32 %v2184, %v2199
        %s2205 = scalar_lea.vmem %s5, 120
        %v2206 = vld [vmem:[%s2205] sm:$0xff]
        %v2209 = vcombine.high %v2203, %v2203
        %2210 = vrot.lane.b32.xlu0 %v2203, 121
        %v2211 = vpop.permute.xlu0 %2210
        %2212 = vrot.lane.b32.xlu0 %v2209, 121
        %v2213 = vpop.permute.xlu0 %2212
        %2214 = vrot.lane.b32.xlu0 %v2204, 121
        %v2215 = vpop.permute.xlu0 %2214
        %v2216 = vsel %vm1773, %v2211, %v2213
        %v2217 = vsel %vm1773, %v2213, %v2215
        %v2219 = vsel %vm406, %v2206, 0
        %v2221 = vsel %vm410, %v2216, 0
        %v2223 = vsel %vm410, %v2217, 0
        %2225 = vmatprep.subr.mxu0 0.0
        %2226 = vmatpush1.msra.mxu0 0.0
        %2227 = vmatprep.subr.mxu0 0.0
        %2228 = vmatpush1.msra.mxu0 0.0
        %2229 = vmatprep.subr.mxu0 0.0
        %2230 = vmatpush1.msra.mxu0 0.0
        %2231 = vmatprep.subr.mxu0 0.0
        %2232 = vmatpush1.msra.mxu0 0.0
        %2233 = vmatprep.subr.mxu0 0.0
        %2234 = vmatpush1.msra.mxu0 0.0
        %2235 = vmatprep.subr.mxu0 0.0
        %2236 = vmatpush1.msra.mxu0 0.0
        %2237 = vmatprep.subr.mxu0 0.0
        %2238 = vmatpush1.msra.mxu0 0.0
        %2239 = vmatprep.subr.mxu0 0.0
        %2240 = vmatpush1.msra.mxu0 0.0
        %2241 = vmatprep.subr.mxu0 0.0
        %2242 = vmatpush1.msra.mxu0 0.0
        %2243 = vmatprep.subr.mxu0 0.0
        %2244 = vmatpush1.msra.mxu0 0.0
        %2245 = vmatprep.subr.mxu0 0.0
        %2246 = vmatpush1.msra.mxu0 0.0
        %2247 = vmatprep.subr.mxu0 0.0
        %2248 = vmatpush1.msra.mxu0 0.0
        %2249 = vmatprep.subr.mxu0 0.0
        %2250 = vmatpush1.msra.mxu0 0.0
        %2251 = vmatprep.subr.mxu0 0.0
        %2252 = vmatpush1.msra.mxu0 0.0
        %2253 = vmatprep.subr.mxu0 0.0
        %2254 = vmatpush1.msra.mxu0 0.0
        %2255 = vmatprep.subr.mxu0 %v2223
        %2256 = vmatpush1.msra.mxu0 %v2221
        %2257 = vmatprep.subr.mxu0 0.0
        %2258 = vmatpush2.msra.mxu0 0.0
        %2259 = vmatprep.subr.mxu0 0.0
        %2260 = vmatpush2.msra.mxu0 0.0
        %2261 = vmatprep.subr.mxu0 0.0
        %2262 = vmatpush2.msra.mxu0 0.0
        %2263 = vmatprep.subr.mxu0 0.0
        %2264 = vmatpush2.msra.mxu0 0.0
        %2265 = vmatprep.subr.mxu0 0.0
        %2266 = vmatpush2.msra.mxu0 0.0
        %2267 = vmatprep.subr.mxu0 0.0
        %2268 = vmatpush2.msra.mxu0 0.0
        %2269 = vmatprep.subr.mxu0 0.0
        %2270 = vmatpush2.msra.mxu0 0.0
        %2271 = vmatprep.subr.mxu0 0.0
        %2272 = vmatpush2.msra.mxu0 0.0
        %2273 = vmatprep.subr.mxu0 0.0
        %2274 = vmatpush2.msra.mxu0 0.0
        %2275 = vmatprep.subr.mxu0 0.0
        %2276 = vmatpush2.msra.mxu0 0.0
        %2277 = vmatprep.subr.mxu0 0.0
        %2278 = vmatpush2.msra.mxu0 0.0
        %2279 = vmatprep.subr.mxu0 0.0
        %2280 = vmatpush2.msra.mxu0 0.0
        %2281 = vmatprep.subr.mxu0 0.0
        %2282 = vmatpush2.msra.mxu0 0.0
        %2283 = vmatprep.subr.mxu0 0.0
        %2284 = vmatpush2.msra.mxu0 0.0
        %2285 = vmatprep.subr.mxu0 0.0
        %2286 = vmatpush2.msra.mxu0 0.0
        %2287 = vmatprep.subr.mxu0 0.0
        %2288 = vmatpush2.msra.mxu0 0.0
        %2289 = vmatprep.mubr.f32.mxu0 0.0
        %2290 = vmatmul.mubr.f32.gmra.mxu0 %v2219
        %v2291 = vpop.f32.mrf.mxu0
        %v2292 = vadd.f32 0.0, %v2291
        %v2293 = vpop.f32.mrf.mxu0
        %v2294 = vadd.f32 0.0, %v2293
        %2295 = vdwg.mxu0
        %v2296 = vadd.f32 %v2181, %v2292
        %v2297 = vadd.f32 %v2182, %v2294
        %v2298 = vld [vmem:[#allocation2 + $0x4] sm:$0xff]
        %v2299 = vld [vmem:[#allocation2 + $0xc] sm:$0xf]
        %s2300 = scalar_lea.vmem %s7, 32
        %v2301 = vld [vmem:[%s2300] ss:$8 sm:$0x3]
        %v2303 = vlaneseq
        %v2304 = vshrl.u32 %v2303, 7
        %v2305 = vsub.s32 0, %v2304
        %v2306 = vrot.slane %v2301, %v2305
        %v2307 = vlaneseq
        %v2308 = vshrl.u32 %v2307, 7
        %v2309 = vsub.s32 1, %v2308
        %v2310 = vrot.slane %v2301, %v2309
        %v2311 = vcombine.low %v2306, %v2310
        %2312 = vrot.lane.b32.xlu0 %v2311, 8
        %v2313 = vpop.permute.xlu0 %2312
        %v2314 = vrot.slane %v2313, 4
        %v2315 = vsel %vm1673, %v2314, %v2313
        %v2318 = vmul.f32 %v2298, %v2315
        %v2319 = vmul.f32 %v2299, %v2314
        %s2320 = scalar_lea.vmem %s5, 128
        %v2321 = vld [vmem:[%s2320] sm:$0xff]
        %v2324 = vcombine.high %v2318, %v2318
        %2325 = vrot.lane.b32.xlu0 %v2318, 120
        %v2326 = vpop.permute.xlu0 %2325
        %2327 = vrot.lane.b32.xlu0 %v2324, 120
        %v2328 = vpop.permute.xlu0 %2327
        %2329 = vrot.lane.b32.xlu0 %v2319, 120
        %v2330 = vpop.permute.xlu0 %2329
        %v2331 = vsel %vm1656, %v2326, %v2328
        %v2332 = vsel %vm1656, %v2328, %v2330
        %v2334 = vsel %vm406, %v2321, 0
        %v2336 = vsel %vm410, %v2331, 0
        %v2338 = vsel %vm410, %v2332, 0
        %2340 = vmatprep.subr.mxu0 0.0
        %2341 = vmatpush1.msra.mxu0 0.0
        %2342 = vmatprep.subr.mxu0 0.0
        %2343 = vmatpush1.msra.mxu0 0.0
        %2344 = vmatprep.subr.mxu0 0.0
        %2345 = vmatpush1.msra.mxu0 0.0
        %2346 = vmatprep.subr.mxu0 0.0
        %2347 = vmatpush1.msra.mxu0 0.0
        %2348 = vmatprep.subr.mxu0 0.0
        %2349 = vmatpush1.msra.mxu0 0.0
        %2350 = vmatprep.subr.mxu0 0.0
        %2351 = vmatpush1.msra.mxu0 0.0
        %2352 = vmatprep.subr.mxu0 0.0
        %2353 = vmatpush1.msra.mxu0 0.0
        %2354 = vmatprep.subr.mxu0 0.0
        %2355 = vmatpush1.msra.mxu0 0.0
        %2356 = vmatprep.subr.mxu0 0.0
        %2357 = vmatpush1.msra.mxu0 0.0
        %2358 = vmatprep.subr.mxu0 0.0
        %2359 = vmatpush1.msra.mxu0 0.0
        %2360 = vmatprep.subr.mxu0 0.0
        %2361 = vmatpush1.msra.mxu0 0.0
        %2362 = vmatprep.subr.mxu0 0.0
        %2363 = vmatpush1.msra.mxu0 0.0
        %2364 = vmatprep.subr.mxu0 0.0
        %2365 = vmatpush1.msra.mxu0 0.0
        %2366 = vmatprep.subr.mxu0 0.0
        %2367 = vmatpush1.msra.mxu0 0.0
        %2368 = vmatprep.subr.mxu0 0.0
        %2369 = vmatpush1.msra.mxu0 0.0
        %2370 = vmatprep.subr.mxu0 %v2338
        %2371 = vmatpush1.msra.mxu0 %v2336
        %2372 = vmatprep.subr.mxu0 0.0
        %2373 = vmatpush2.msra.mxu0 0.0
        %2374 = vmatprep.subr.mxu0 0.0
        %2375 = vmatpush2.msra.mxu0 0.0
        %2376 = vmatprep.subr.mxu0 0.0
        %2377 = vmatpush2.msra.mxu0 0.0
        %2378 = vmatprep.subr.mxu0 0.0
        %2379 = vmatpush2.msra.mxu0 0.0
        %2380 = vmatprep.subr.mxu0 0.0
        %2381 = vmatpush2.msra.mxu0 0.0
        %2382 = vmatprep.subr.mxu0 0.0
        %2383 = vmatpush2.msra.mxu0 0.0
        %2384 = vmatprep.subr.mxu0 0.0
        %2385 = vmatpush2.msra.mxu0 0.0
        %2386 = vmatprep.subr.mxu0 0.0
        %2387 = vmatpush2.msra.mxu0 0.0
        %2388 = vmatprep.subr.mxu0 0.0
        %2389 = vmatpush2.msra.mxu0 0.0
        %2390 = vmatprep.subr.mxu0 0.0
        %2391 = vmatpush2.msra.mxu0 0.0
        %2392 = vmatprep.subr.mxu0 0.0
        %2393 = vmatpush2.msra.mxu0 0.0
        %2394 = vmatprep.subr.mxu0 0.0
        %2395 = vmatpush2.msra.mxu0 0.0
        %2396 = vmatprep.subr.mxu0 0.0
        %2397 = vmatpush2.msra.mxu0 0.0
        %2398 = vmatprep.subr.mxu0 0.0
        %2399 = vmatpush2.msra.mxu0 0.0
        %2400 = vmatprep.subr.mxu0 0.0
        %2401 = vmatpush2.msra.mxu0 0.0
        %2402 = vmatprep.subr.mxu0 0.0
        %2403 = vmatpush2.msra.mxu0 0.0
        %2404 = vmatprep.mubr.f32.mxu0 0.0
        %2405 = vmatmul.mubr.f32.gmra.mxu0 %v2334
        %v2406 = vpop.f32.mrf.mxu0
        %v2407 = vadd.f32 0.0, %v2406
        %v2408 = vpop.f32.mrf.mxu0
        %v2409 = vadd.f32 0.0, %v2408
        %2410 = vdwg.mxu0
        %v2411 = vadd.f32 %v2296, %v2407
        %v2412 = vadd.f32 %v2297, %v2409
        %v2413 = vld [vmem:[#allocation2 + $0x4] sm:$0xff]
        %v2414 = vld [vmem:[#allocation2 + $0xc] sm:$0xf]
        %s2415 = scalar_lea.vmem %s7, 33
        %v2416 = vld [vmem:[%s2415] ss:$8 sm:$0x3]
        %v2418 = vlaneseq
        %v2419 = vshrl.u32 %v2418, 7
        %v2420 = vsub.s32 0, %v2419
        %v2421 = vrot.slane %v2416, %v2420
        %v2422 = vlaneseq
        %v2423 = vshrl.u32 %v2422, 7
        %v2424 = vsub.s32 1, %v2423
        %v2425 = vrot.slane %v2416, %v2424
        %v2426 = vcombine.low %v2421, %v2425
        %2427 = vrot.lane.b32.xlu0 %v2426, 9
        %v2428 = vpop.permute.xlu0 %2427
        %v2429 = vrot.slane %v2428, 4
        %v2430 = vsel %vm1556, %v2429, %v2428
        %v2433 = vmul.f32 %v2413, %v2430
        %v2434 = vmul.f32 %v2414, %v2429
        %s2435 = scalar_lea.vmem %s5, 136
        %v2436 = vld [vmem:[%s2435] sm:$0xff]
        %v2439 = vcombine.high %v2433, %v2433
        %2440 = vrot.lane.b32.xlu0 %v2433, 119
        %v2441 = vpop.permute.xlu0 %2440
        %2442 = vrot.lane.b32.xlu0 %v2439, 119
        %v2443 = vpop.permute.xlu0 %2442
        %2444 = vrot.lane.b32.xlu0 %v2434, 119
        %v2445 = vpop.permute.xlu0 %2444
        %v2446 = vsel %vm1539, %v2441, %v2443
        %v2447 = vsel %vm1539, %v2443, %v2445
        %v2449 = vsel %vm406, %v2436, 0
        %v2451 = vsel %vm410, %v2446, 0
        %v2453 = vsel %vm410, %v2447, 0
        %2455 = vmatprep.subr.mxu0 0.0
        %2456 = vmatpush1.msra.mxu0 0.0
        %2457 = vmatprep.subr.mxu0 0.0
        %2458 = vmatpush1.msra.mxu0 0.0
        %2459 = vmatprep.subr.mxu0 0.0
        %2460 = vmatpush1.msra.mxu0 0.0
        %2461 = vmatprep.subr.mxu0 0.0
        %2462 = vmatpush1.msra.mxu0 0.0
        %2463 = vmatprep.subr.mxu0 0.0
        %2464 = vmatpush1.msra.mxu0 0.0
        %2465 = vmatprep.subr.mxu0 0.0
        %2466 = vmatpush1.msra.mxu0 0.0
        %2467 = vmatprep.subr.mxu0 0.0
        %2468 = vmatpush1.msra.mxu0 0.0
        %2469 = vmatprep.subr.mxu0 0.0
        %2470 = vmatpush1.msra.mxu0 0.0
        %2471 = vmatprep.subr.mxu0 0.0
        %2472 = vmatpush1.msra.mxu0 0.0
        %2473 = vmatprep.subr.mxu0 0.0
        %2474 = vmatpush1.msra.mxu0 0.0
        %2475 = vmatprep.subr.mxu0 0.0
        %2476 = vmatpush1.msra.mxu0 0.0
        %2477 = vmatprep.subr.mxu0 0.0
        %2478 = vmatpush1.msra.mxu0 0.0
        %2479 = vmatprep.subr.mxu0 0.0
        %2480 = vmatpush1.msra.mxu0 0.0
        %2481 = vmatprep.subr.mxu0 0.0
        %2482 = vmatpush1.msra.mxu0 0.0
        %2483 = vmatprep.subr.mxu0 0.0
        %2484 = vmatpush1.msra.mxu0 0.0
        %2485 = vmatprep.subr.mxu0 %v2453
        %2486 = vmatpush1.msra.mxu0 %v2451
        %2487 = vmatprep.subr.mxu0 0.0
        %2488 = vmatpush2.msra.mxu0 0.0
        %2489 = vmatprep.subr.mxu0 0.0
        %2490 = vmatpush2.msra.mxu0 0.0
        %2491 = vmatprep.subr.mxu0 0.0
        %2492 = vmatpush2.msra.mxu0 0.0
        %2493 = vmatprep.subr.mxu0 0.0
        %2494 = vmatpush2.msra.mxu0 0.0
        %2495 = vmatprep.subr.mxu0 0.0
        %2496 = vmatpush2.msra.mxu0 0.0
        %2497 = vmatprep.subr.mxu0 0.0
        %2498 = vmatpush2.msra.mxu0 0.0
        %2499 = vmatprep.subr.mxu0 0.0
        %2500 = vmatpush2.msra.mxu0 0.0
        %2501 = vmatprep.subr.mxu0 0.0
        %2502 = vmatpush2.msra.mxu0 0.0
        %2503 = vmatprep.subr.mxu0 0.0
        %2504 = vmatpush2.msra.mxu0 0.0
        %2505 = vmatprep.subr.mxu0 0.0
        %2506 = vmatpush2.msra.mxu0 0.0
        %2507 = vmatprep.subr.mxu0 0.0
        %2508 = vmatpush2.msra.mxu0 0.0
        %2509 = vmatprep.subr.mxu0 0.0
        %2510 = vmatpush2.msra.mxu0 0.0
        %2511 = vmatprep.subr.mxu0 0.0
        %2512 = vmatpush2.msra.mxu0 0.0
        %2513 = vmatprep.subr.mxu0 0.0
        %2514 = vmatpush2.msra.mxu0 0.0
        %2515 = vmatprep.subr.mxu0 0.0
        %2516 = vmatpush2.msra.mxu0 0.0
        %2517 = vmatprep.subr.mxu0 0.0
        %2518 = vmatpush2.msra.mxu0 0.0
        %2519 = vmatprep.mubr.f32.mxu0 0.0
        %2520 = vmatmul.mubr.f32.gmra.mxu0 %v2449
        %v2521 = vpop.f32.mrf.mxu0
        %v2522 = vadd.f32 0.0, %v2521
        %v2523 = vpop.f32.mrf.mxu0
        %v2524 = vadd.f32 0.0, %v2523
        %2525 = vdwg.mxu0
        %v2526 = vadd.f32 %v2411, %v2522
        %v2527 = vadd.f32 %v2412, %v2524
        %v2528 = vld [vmem:[#allocation2 + $0x4] sm:$0xff]
        %v2529 = vld [vmem:[#allocation2 + $0xc] sm:$0xf]
        %s2530 = scalar_lea.vmem %s7, 34
        %v2531 = vld [vmem:[%s2530] ss:$8 sm:$0x3]
        %v2533 = vlaneseq
        %v2534 = vshrl.u32 %v2533, 7
        %v2535 = vsub.s32 0, %v2534
        %v2536 = vrot.slane %v2531, %v2535
        %v2537 = vlaneseq
        %v2538 = vshrl.u32 %v2537, 7
        %v2539 = vsub.s32 1, %v2538
        %v2540 = vrot.slane %v2531, %v2539
        %v2541 = vcombine.low %v2536, %v2540
        %2542 = vrot.lane.b32.xlu0 %v2541, 55
        %v2543 = vpop.permute.xlu0 %2542
        %v2544 = vrot.slane %v2543, 4
        %v2545 = vsel %vm502, %v2544, %v2543
        %v2548 = vmul.f32 %v2528, %v2545
        %v2549 = vmul.f32 %v2529, %v2544
        %s2550 = scalar_lea.vmem %s5, 144
        %v2551 = vld [vmem:[%s2550] sm:$0xff]
        %v2554 = vcombine.high %v2548, %v2548
        %2555 = vrot.lane.b32.xlu0 %v2548, 73
        %v2556 = vpop.permute.xlu0 %2555
        %2557 = vrot.lane.b32.xlu0 %v2554, 73
        %v2558 = vpop.permute.xlu0 %2557
        %2559 = vrot.lane.b32.xlu0 %v2549, 73
        %v2560 = vpop.permute.xlu0 %2559
        %v2561 = vsel %vm631, %v2556, %v2558
        %v2562 = vsel %vm631, %v2558, %v2560
        %v2564 = vsel %vm406, %v2551, 0
        %v2566 = vsel %vm410, %v2561, 0
        %v2568 = vsel %vm410, %v2562, 0
        %2570 = vmatprep.subr.mxu0 0.0
        %2571 = vmatpush1.msra.mxu0 0.0
        %2572 = vmatprep.subr.mxu0 0.0
        %2573 = vmatpush1.msra.mxu0 0.0
        %2574 = vmatprep.subr.mxu0 0.0
        %2575 = vmatpush1.msra.mxu0 0.0
        %2576 = vmatprep.subr.mxu0 0.0
        %2577 = vmatpush1.msra.mxu0 0.0
        %2578 = vmatprep.subr.mxu0 0.0
        %2579 = vmatpush1.msra.mxu0 0.0
        %2580 = vmatprep.subr.mxu0 0.0
        %2581 = vmatpush1.msra.mxu0 0.0
        %2582 = vmatprep.subr.mxu0 0.0
        %2583 = vmatpush1.msra.mxu0 0.0
        %2584 = vmatprep.subr.mxu0 0.0
        %2585 = vmatpush1.msra.mxu0 0.0
        %2586 = vmatprep.subr.mxu0 0.0
        %2587 = vmatpush1.msra.mxu0 0.0
        %2588 = vmatprep.subr.mxu0 0.0
        %2589 = vmatpush1.msra.mxu0 0.0
        %2590 = vmatprep.subr.mxu0 0.0
        %2591 = vmatpush1.msra.mxu0 0.0
        %2592 = vmatprep.subr.mxu0 0.0
        %2593 = vmatpush1.msra.mxu0 0.0
        %2594 = vmatprep.subr.mxu0 0.0
        %2595 = vmatpush1.msra.mxu0 0.0
        %2596 = vmatprep.subr.mxu0 0.0
        %2597 = vmatpush1.msra.mxu0 0.0
        %2598 = vmatprep.subr.mxu0 0.0
        %2599 = vmatpush1.msra.mxu0 0.0
        %2600 = vmatprep.subr.mxu0 %v2568
        %2601 = vmatpush1.msra.mxu0 %v2566
        %2602 = vmatprep.subr.mxu0 0.0
        %2603 = vmatpush2.msra.mxu0 0.0
        %2604 = vmatprep.subr.mxu0 0.0
        %2605 = vmatpush2.msra.mxu0 0.0
        %2606 = vmatprep.subr.mxu0 0.0
        %2607 = vmatpush2.msra.mxu0 0.0
        %2608 = vmatprep.subr.mxu0 0.0
        %2609 = vmatpush2.msra.mxu0 0.0
        %2610 = vmatprep.subr.mxu0 0.0
        %2611 = vmatpush2.msra.mxu0 0.0
        %2612 = vmatprep.subr.mxu0 0.0
        %2613 = vmatpush2.msra.mxu0 0.0
        %2614 = vmatprep.subr.mxu0 0.0
        %2615 = vmatpush2.msra.mxu0 0.0
        %2616 = vmatprep.subr.mxu0 0.0
        %2617 = vmatpush2.msra.mxu0 0.0
        %2618 = vmatprep.subr.mxu0 0.0
        %2619 = vmatpush2.msra.mxu0 0.0
        %2620 = vmatprep.subr.mxu0 0.0
        %2621 = vmatpush2.msra.mxu0 0.0
        %2622 = vmatprep.subr.mxu0 0.0
        %2623 = vmatpush2.msra.mxu0 0.0
        %2624 = vmatprep.subr.mxu0 0.0
        %2625 = vmatpush2.msra.mxu0 0.0
        %2626 = vmatprep.subr.mxu0 0.0
        %2627 = vmatpush2.msra.mxu0 0.0
        %2628 = vmatprep.subr.mxu0 0.0
        %2629 = vmatpush2.msra.mxu0 0.0
        %2630 = vmatprep.subr.mxu0 0.0
        %2631 = vmatpush2.msra.mxu0 0.0
        %2632 = vmatprep.subr.mxu0 0.0
        %2633 = vmatpush2.msra.mxu0 0.0
        %2634 = vmatprep.mubr.f32.mxu0 0.0
        %2635 = vmatmul.mubr.f32.gmra.mxu0 %v2564
        %v2636 = vpop.f32.mrf.mxu0
        %v2637 = vadd.f32 0.0, %v2636
        %v2638 = vpop.f32.mrf.mxu0
        %v2639 = vadd.f32 0.0, %v2638
        %2640 = vdwg.mxu0
        %v2641 = vadd.f32 %v2526, %v2637
        %v2642 = vadd.f32 %v2527, %v2639
        %v2643 = vld [vmem:[#allocation2 + $0x4] sm:$0xff]
        %v2644 = vld [vmem:[#allocation2 + $0xc] sm:$0xf]
        %s2645 = scalar_lea.vmem %s7, 35
        %v2646 = vld [vmem:[%s2645] ss:$8 sm:$0x3]
        %v2648 = vlaneseq
        %v2649 = vshrl.u32 %v2648, 7
        %v2650 = vsub.s32 0, %v2649
        %v2651 = vrot.slane %v2646, %v2650
        %v2652 = vlaneseq
        %v2653 = vshrl.u32 %v2652, 7
        %v2654 = vsub.s32 1, %v2653
        %v2655 = vrot.slane %v2646, %v2654
        %v2656 = vcombine.low %v2651, %v2655
        %2657 = vrot.lane.b32.xlu0 %v2656, 56
        %v2658 = vpop.permute.xlu0 %2657
        %v2659 = vrot.slane %v2658, 4
        %v2660 = vsel %vm524, %v2659, %v2658
        %v2663 = vmul.f32 %v2643, %v2660
        %v2664 = vmul.f32 %v2644, %v2659
        %s2665 = scalar_lea.vmem %s5, 152
        %v2666 = vld [vmem:[%s2665] sm:$0xff]
        %v2669 = vcombine.high %v2663, %v2663
        %2670 = vrot.lane.b32.xlu0 %v2663, 72
        %v2671 = vpop.permute.xlu0 %2670
        %2672 = vrot.lane.b32.xlu0 %v2669, 72
        %v2673 = vpop.permute.xlu0 %2672
        %2674 = vrot.lane.b32.xlu0 %v2664, 72
        %v2675 = vpop.permute.xlu0 %2674
        %v2676 = vsel %vm541, %v2671, %v2673
        %v2677 = vsel %vm541, %v2673, %v2675
        %v2679 = vsel %vm406, %v2666, 0
        %v2681 = vsel %vm410, %v2676, 0
        %v2683 = vsel %vm410, %v2677, 0
        %2685 = vmatprep.subr.mxu0 0.0
        %2686 = vmatpush1.msra.mxu0 0.0
        %2687 = vmatprep.subr.mxu0 0.0
        %2688 = vmatpush1.msra.mxu0 0.0
        %2689 = vmatprep.subr.mxu0 0.0
        %2690 = vmatpush1.msra.mxu0 0.0
        %2691 = vmatprep.subr.mxu0 0.0
        %2692 = vmatpush1.msra.mxu0 0.0
        %2693 = vmatprep.subr.mxu0 0.0
        %2694 = vmatpush1.msra.mxu0 0.0
        %2695 = vmatprep.subr.mxu0 0.0
        %2696 = vmatpush1.msra.mxu0 0.0
        %2697 = vmatprep.subr.mxu0 0.0
        %2698 = vmatpush1.msra.mxu0 0.0
        %2699 = vmatprep.subr.mxu0 0.0
        %2700 = vmatpush1.msra.mxu0 0.0
        %2701 = vmatprep.subr.mxu0 0.0
        %2702 = vmatpush1.msra.mxu0 0.0
        %2703 = vmatprep.subr.mxu0 0.0
        %2704 = vmatpush1.msra.mxu0 0.0
        %2705 = vmatprep.subr.mxu0 0.0
        %2706 = vmatpush1.msra.mxu0 0.0
        %2707 = vmatprep.subr.mxu0 0.0
        %2708 = vmatpush1.msra.mxu0 0.0
        %2709 = vmatprep.subr.mxu0 0.0
        %2710 = vmatpush1.msra.mxu0 0.0
        %2711 = vmatprep.subr.mxu0 0.0
        %2712 = vmatpush1.msra.mxu0 0.0
        %2713 = vmatprep.subr.mxu0 0.0
        %2714 = vmatpush1.msra.mxu0 0.0
        %2715 = vmatprep.subr.mxu0 %v2683
        %2716 = vmatpush1.msra.mxu0 %v2681
        %2717 = vmatprep.subr.mxu0 0.0
        %2718 = vmatpush2.msra.mxu0 0.0
        %2719 = vmatprep.subr.mxu0 0.0
        %2720 = vmatpush2.msra.mxu0 0.0
        %2721 = vmatprep.subr.mxu0 0.0
        %2722 = vmatpush2.msra.mxu0 0.0
        %2723 = vmatprep.subr.mxu0 0.0
        %2724 = vmatpush2.msra.mxu0 0.0
        %2725 = vmatprep.subr.mxu0 0.0
        %2726 = vmatpush2.msra.mxu0 0.0
        %2727 = vmatprep.subr.mxu0 0.0
        %2728 = vmatpush2.msra.mxu0 0.0
        %2729 = vmatprep.subr.mxu0 0.0
        %2730 = vmatpush2.msra.mxu0 0.0
        %2731 = vmatprep.subr.mxu0 0.0
        %2732 = vmatpush2.msra.mxu0 0.0
        %2733 = vmatprep.subr.mxu0 0.0
        %2734 = vmatpush2.msra.mxu0 0.0
        %2735 = vmatprep.subr.mxu0 0.0
        %2736 = vmatpush2.msra.mxu0 0.0
        %2737 = vmatprep.subr.mxu0 0.0
        %2738 = vmatpush2.msra.mxu0 0.0
        %2739 = vmatprep.subr.mxu0 0.0
        %2740 = vmatpush2.msra.mxu0 0.0
        %2741 = vmatprep.subr.mxu0 0.0
        %2742 = vmatpush2.msra.mxu0 0.0
        %2743 = vmatprep.subr.mxu0 0.0
        %2744 = vmatpush2.msra.mxu0 0.0
        %2745 = vmatprep.subr.mxu0 0.0
        %2746 = vmatpush2.msra.mxu0 0.0
        %2747 = vmatprep.subr.mxu0 0.0
        %2748 = vmatpush2.msra.mxu0 0.0
        %2749 = vmatprep.mubr.f32.mxu0 0.0
        %2750 = vmatmul.mubr.f32.gmra.mxu0 %v2679
        %v2751 = vpop.f32.mrf.mxu0
        %v2752 = vadd.f32 0.0, %v2751
        %v2753 = vpop.f32.mrf.mxu0
        %v2754 = vadd.f32 0.0, %v2753
        %2755 = vdwg.mxu0
        %v2756 = vadd.f32 %v2641, %v2752
        %v2757 = vadd.f32 %v2642, %v2754
        %v2758 = vld [vmem:[#allocation2 + $0x4] sm:$0xff]
        %v2759 = vld [vmem:[#allocation2 + $0xc] sm:$0xf]
        %s2760 = scalar_lea.vmem %s7, 36
        %v2761 = vld [vmem:[%s2760] ss:$8 sm:$0x3]
        %v2763 = vlaneseq
        %v2764 = vshrl.u32 %v2763, 7
        %v2765 = vsub.s32 0, %v2764
        %v2766 = vrot.slane %v2761, %v2765
        %v2767 = vlaneseq
        %v2768 = vshrl.u32 %v2767, 7
        %v2769 = vsub.s32 1, %v2768
        %v2770 = vrot.slane %v2761, %v2769
        %v2771 = vcombine.low %v2766, %v2770
        %2772 = vrot.lane.b32.xlu0 %v2771, 57
        %v2773 = vpop.permute.xlu0 %2772
        %v2774 = vrot.slane %v2773, 4
        %v2775 = vsel %vm729, %v2774, %v2773
        %v2778 = vmul.f32 %v2758, %v2775
        %v2779 = vmul.f32 %v2759, %v2774
        %s2780 = scalar_lea.vmem %s5, 160
        %v2781 = vld [vmem:[%s2780] sm:$0xff]
        %v2784 = vcombine.high %v2778, %v2778
        %2785 = vrot.lane.b32.xlu0 %v2778, 71
        %v2786 = vpop.permute.xlu0 %2785
        %2787 = vrot.lane.b32.xlu0 %v2784, 71
        %v2788 = vpop.permute.xlu0 %2787
        %2789 = vrot.lane.b32.xlu0 %v2779, 71
        %v2790 = vpop.permute.xlu0 %2789
        %v2791 = vsel %vm746, %v2786, %v2788
        %v2792 = vsel %vm746, %v2788, %v2790
        %v2794 = vsel %vm406, %v2781, 0
        %v2796 = vsel %vm410, %v2791, 0
        %v2798 = vsel %vm410, %v2792, 0
        %2800 = vmatprep.subr.mxu0 0.0
        %2801 = vmatpush1.msra.mxu0 0.0
        %2802 = vmatprep.subr.mxu0 0.0
        %2803 = vmatpush1.msra.mxu0 0.0
        %2804 = vmatprep.subr.mxu0 0.0
        %2805 = vmatpush1.msra.mxu0 0.0
        %2806 = vmatprep.subr.mxu0 0.0
        %2807 = vmatpush1.msra.mxu0 0.0
        %2808 = vmatprep.subr.mxu0 0.0
        %2809 = vmatpush1.msra.mxu0 0.0
        %2810 = vmatprep.subr.mxu0 0.0
        %2811 = vmatpush1.msra.mxu0 0.0
        %2812 = vmatprep.subr.mxu0 0.0
        %2813 = vmatpush1.msra.mxu0 0.0
        %2814 = vmatprep.subr.mxu0 0.0
        %2815 = vmatpush1.msra.mxu0 0.0
        %2816 = vmatprep.subr.mxu0 0.0
        %2817 = vmatpush1.msra.mxu0 0.0
        %2818 = vmatprep.subr.mxu0 0.0
        %2819 = vmatpush1.msra.mxu0 0.0
        %2820 = vmatprep.subr.mxu0 0.0
        %2821 = vmatpush1.msra.mxu0 0.0
        %2822 = vmatprep.subr.mxu0 0.0
        %2823 = vmatpush1.msra.mxu0 0.0
        %2824 = vmatprep.subr.mxu0 0.0
        %2825 = vmatpush1.msra.mxu0 0.0
        %2826 = vmatprep.subr.mxu0 0.0
        %2827 = vmatpush1.msra.mxu0 0.0
        %2828 = vmatprep.subr.mxu0 0.0
        %2829 = vmatpush1.msra.mxu0 0.0
        %2830 = vmatprep.subr.mxu0 %v2798
        %2831 = vmatpush1.msra.mxu0 %v2796
        %2832 = vmatprep.subr.mxu0 0.0
        %2833 = vmatpush2.msra.mxu0 0.0
        %2834 = vmatprep.subr.mxu0 0.0
        %2835 = vmatpush2.msra.mxu0 0.0
        %2836 = vmatprep.subr.mxu0 0.0
        %2837 = vmatpush2.msra.mxu0 0.0
        %2838 = vmatprep.subr.mxu0 0.0
        %2839 = vmatpush2.msra.mxu0 0.0
        %2840 = vmatprep.subr.mxu0 0.0
        %2841 = vmatpush2.msra.mxu0 0.0
        %2842 = vmatprep.subr.mxu0 0.0
        %2843 = vmatpush2.msra.mxu0 0.0
        %2844 = vmatprep.subr.mxu0 0.0
        %2845 = vmatpush2.msra.mxu0 0.0
        %2846 = vmatprep.subr.mxu0 0.0
        %2847 = vmatpush2.msra.mxu0 0.0
        %2848 = vmatprep.subr.mxu0 0.0
        %2849 = vmatpush2.msra.mxu0 0.0
        %2850 = vmatprep.subr.mxu0 0.0
        %2851 = vmatpush2.msra.mxu0 0.0
        %2852 = vmatprep.subr.mxu0 0.0
        %2853 = vmatpush2.msra.mxu0 0.0
        %2854 = vmatprep.subr.mxu0 0.0
        %2855 = vmatpush2.msra.mxu0 0.0
        %2856 = vmatprep.subr.mxu0 0.0
        %2857 = vmatpush2.msra.mxu0 0.0
        %2858 = vmatprep.subr.mxu0 0.0
        %2859 = vmatpush2.msra.mxu0 0.0
        %2860 = vmatprep.subr.mxu0 0.0
        %2861 = vmatpush2.msra.mxu0 0.0
        %2862 = vmatprep.subr.mxu0 0.0
        %2863 = vmatpush2.msra.mxu0 0.0
        %2864 = vmatprep.mubr.f32.mxu0 0.0
        %2865 = vmatmul.mubr.f32.gmra.mxu0 %v2794
        %v2866 = vpop.f32.mrf.mxu0
        %v2867 = vadd.f32 0.0, %v2866
        %v2868 = vpop.f32.mrf.mxu0
        %v2869 = vadd.f32 0.0, %v2868
        %2870 = vdwg.mxu0
        %v2871 = vadd.f32 %v2756, %v2867
        %v2872 = vadd.f32 %v2757, %v2869
        %v2873 = vld [vmem:[#allocation2 + $0x4] sm:$0xff]
        %v2874 = vld [vmem:[#allocation2 + $0xc] sm:$0xf]
        %s2875 = scalar_lea.vmem %s7, 37
        %v2876 = vld [vmem:[%s2875] ss:$8 sm:$0x3]
        %v2878 = vlaneseq
        %v2879 = vshrl.u32 %v2878, 7
        %v2880 = vsub.s32 0, %v2879
        %v2881 = vrot.slane %v2876, %v2880
        %v2882 = vlaneseq
        %v2883 = vshrl.u32 %v2882, 7
        %v2884 = vsub.s32 1, %v2883
        %v2885 = vrot.slane %v2876, %v2884
        %v2886 = vcombine.low %v2881, %v2885
        %2887 = vrot.lane.b32.xlu0 %v2886, 63
        %v2888 = vpop.permute.xlu0 %2887
        %v2889 = vrot.slane %v2888, 4
        %v2890 = vsel %vm846, %v2889, %v2888
        %v2893 = vmul.f32 %v2873, %v2890
        %v2894 = vmul.f32 %v2874, %v2889
        %s2895 = scalar_lea.vmem %s5, 168
        %v2896 = vld [vmem:[%s2895] sm:$0xff]
        %v2899 = vcombine.high %v2893, %v2893
        %2900 = vrot.lane.b32.xlu0 %v2893, 65
        %v2901 = vpop.permute.xlu0 %2900
        %2902 = vrot.lane.b32.xlu0 %v2899, 65
        %v2903 = vpop.permute.xlu0 %2902
        %2904 = vrot.lane.b32.xlu0 %v2894, 65
        %v2905 = vpop.permute.xlu0 %2904
        %v2906 = vsel %vm863, %v2901, %v2903
        %v2907 = vsel %vm863, %v2903, %v2905
        %v2909 = vsel %vm406, %v2896, 0
        %v2911 = vsel %vm410, %v2906, 0
        %v2913 = vsel %vm410, %v2907, 0
        %2915 = vmatprep.subr.mxu0 0.0
        %2916 = vmatpush1.msra.mxu0 0.0
        %2917 = vmatprep.subr.mxu0 0.0
        %2918 = vmatpush1.msra.mxu0 0.0
        %2919 = vmatprep.subr.mxu0 0.0
        %2920 = vmatpush1.msra.mxu0 0.0
        %2921 = vmatprep.subr.mxu0 0.0
        %2922 = vmatpush1.msra.mxu0 0.0
        %2923 = vmatprep.subr.mxu0 0.0
        %2924 = vmatpush1.msra.mxu0 0.0
        %2925 = vmatprep.subr.mxu0 0.0
        %2926 = vmatpush1.msra.mxu0 0.0
        %2927 = vmatprep.subr.mxu0 0.0
        %2928 = vmatpush1.msra.mxu0 0.0
        %2929 = vmatprep.subr.mxu0 0.0
        %2930 = vmatpush1.msra.mxu0 0.0
        %2931 = vmatprep.subr.mxu0 0.0
        %2932 = vmatpush1.msra.mxu0 0.0
        %2933 = vmatprep.subr.mxu0 0.0
        %2934 = vmatpush1.msra.mxu0 0.0
        %2935 = vmatprep.subr.mxu0 0.0
        %2936 = vmatpush1.msra.mxu0 0.0
        %2937 = vmatprep.subr.mxu0 0.0
        %2938 = vmatpush1.msra.mxu0 0.0
        %2939 = vmatprep.subr.mxu0 0.0
        %2940 = vmatpush1.msra.mxu0 0.0
        %2941 = vmatprep.subr.mxu0 0.0
        %2942 = vmatpush1.msra.mxu0 0.0
        %2943 = vmatprep.subr.mxu0 0.0
        %2944 = vmatpush1.msra.mxu0 0.0
        %2945 = vmatprep.subr.mxu0 %v2913
        %2946 = vmatpush1.msra.mxu0 %v2911
        %2947 = vmatprep.subr.mxu0 0.0
        %2948 = vmatpush2.msra.mxu0 0.0
        %2949 = vmatprep.subr.mxu0 0.0
        %2950 = vmatpush2.msra.mxu0 0.0
        %2951 = vmatprep.subr.mxu0 0.0
        %2952 = vmatpush2.msra.mxu0 0.0
        %2953 = vmatprep.subr.mxu0 0.0
        %2954 = vmatpush2.msra.mxu0 0.0
        %2955 = vmatprep.subr.mxu0 0.0
        %2956 = vmatpush2.msra.mxu0 0.0
        %2957 = vmatprep.subr.mxu0 0.0
        %2958 = vmatpush2.msra.mxu0 0.0
        %2959 = vmatprep.subr.mxu0 0.0
        %2960 = vmatpush2.msra.mxu0 0.0
        %2961 = vmatprep.subr.mxu0 0.0
        %2962 = vmatpush2.msra.mxu0 0.0
        %2963 = vmatprep.subr.mxu0 0.0
        %2964 = vmatpush2.msra.mxu0 0.0
        %2965 = vmatprep.subr.mxu0 0.0
        %2966 = vmatpush2.msra.mxu0 0.0
        %2967 = vmatprep.subr.mxu0 0.0
        %2968 = vmatpush2.msra.mxu0 0.0
        %2969 = vmatprep.subr.mxu0 0.0
        %2970 = vmatpush2.msra.mxu0 0.0
        %2971 = vmatprep.subr.mxu0 0.0
        %2972 = vmatpush2.msra.mxu0 0.0
        %2973 = vmatprep.subr.mxu0 0.0
        %2974 = vmatpush2.msra.mxu0 0.0
        %2975 = vmatprep.subr.mxu0 0.0
        %2976 = vmatpush2.msra.mxu0 0.0
        %2977 = vmatprep.subr.mxu0 0.0
        %2978 = vmatpush2.msra.mxu0 0.0
        %2979 = vmatprep.mubr.f32.mxu0 0.0
        %2980 = vmatmul.mubr.f32.gmra.mxu0 %v2909
        %v2981 = vpop.f32.mrf.mxu0
        %v2982 = vadd.f32 0.0, %v2981
        %v2983 = vpop.f32.mrf.mxu0
        %v2984 = vadd.f32 0.0, %v2983
        %2985 = vdwg.mxu0
        %v2986 = vadd.f32 %v2871, %v2982
        %v2987 = vadd.f32 %v2872, %v2984
        %v2988 = vld [vmem:[#allocation2 + $0x4] sm:$0xff]
        %v2989 = vld [vmem:[#allocation2 + $0xc] sm:$0xf]
        %s2990 = scalar_lea.vmem %s7, 38
        %v2991 = vld [vmem:[%s2990] ss:$8 sm:$0x3]
        %v2993 = vlaneseq
        %v2994 = vshrl.u32 %v2993, 7
        %v2995 = vsub.s32 0, %v2994
        %v2996 = vrot.slane %v2991, %v2995
        %v2997 = vlaneseq
        %v2998 = vshrl.u32 %v2997, 7
        %v2999 = vsub.s32 1, %v2998
        %v3000 = vrot.slane %v2991, %v2999
        %v3001 = vcombine.low %v2996, %v3000
        %3002 = vrot.lane.b32.xlu0 %v3001, 64
        %v3003 = vpop.permute.xlu0 %3002
        %v3004 = vrot.slane %v3003, 4
        %v3005 = vsel %vm963, %v3004, %v3003
        %v3008 = vmul.f32 %v2988, %v3005
        %v3009 = vmul.f32 %v2989, %v3004
        %s3010 = scalar_lea.vmem %s5, 176
        %v3011 = vld [vmem:[%s3010] sm:$0xff]
        %v3014 = vcombine.high %v3008, %v3008
        %3015 = vrot.lane.b32.xlu0 %v3008, 64
        %v3016 = vpop.permute.xlu0 %3015
        %3017 = vrot.lane.b32.xlu0 %v3014, 64
        %v3018 = vpop.permute.xlu0 %3017
        %3019 = vrot.lane.b32.xlu0 %v3009, 64
        %v3020 = vpop.permute.xlu0 %3019
        %v3021 = vsel %vm963, %v3016, %v3018
        %v3022 = vsel %vm963, %v3018, %v3020
        %v3024 = vsel %vm406, %v3011, 0
        %v3026 = vsel %vm410, %v3021, 0
        %v3028 = vsel %vm410, %v3022, 0
        %3030 = vmatprep.subr.mxu0 0.0
        %3031 = vmatpush1.msra.mxu0 0.0
        %3032 = vmatprep.subr.mxu0 0.0
        %3033 = vmatpush1.msra.mxu0 0.0
        %3034 = vmatprep.subr.mxu0 0.0
        %3035 = vmatpush1.msra.mxu0 0.0
        %3036 = vmatprep.subr.mxu0 0.0
        %3037 = vmatpush1.msra.mxu0 0.0
        %3038 = vmatprep.subr.mxu0 0.0
        %3039 = vmatpush1.msra.mxu0 0.0
        %3040 = vmatprep.subr.mxu0 0.0
        %3041 = vmatpush1.msra.mxu0 0.0
        %3042 = vmatprep.subr.mxu0 0.0
        %3043 = vmatpush1.msra.mxu0 0.0
        %3044 = vmatprep.subr.mxu0 0.0
        %3045 = vmatpush1.msra.mxu0 0.0
        %3046 = vmatprep.subr.mxu0 0.0
        %3047 = vmatpush1.msra.mxu0 0.0
        %3048 = vmatprep.subr.mxu0 0.0
        %3049 = vmatpush1.msra.mxu0 0.0
        %3050 = vmatprep.subr.mxu0 0.0
        %3051 = vmatpush1.msra.mxu0 0.0
        %3052 = vmatprep.subr.mxu0 0.0
        %3053 = vmatpush1.msra.mxu0 0.0
        %3054 = vmatprep.subr.mxu0 0.0
        %3055 = vmatpush1.msra.mxu0 0.0
        %3056 = vmatprep.subr.mxu0 0.0
        %3057 = vmatpush1.msra.mxu0 0.0
        %3058 = vmatprep.subr.mxu0 0.0
        %3059 = vmatpush1.msra.mxu0 0.0
        %3060 = vmatprep.subr.mxu0 %v3028
        %3061 = vmatpush1.msra.mxu0 %v3026
        %3062 = vmatprep.subr.mxu0 0.0
        %3063 = vmatpush2.msra.mxu0 0.0
        %3064 = vmatprep.subr.mxu0 0.0
        %3065 = vmatpush2.msra.mxu0 0.0
        %3066 = vmatprep.subr.mxu0 0.0
        %3067 = vmatpush2.msra.mxu0 0.0
        %3068 = vmatprep.subr.mxu0 0.0
        %3069 = vmatpush2.msra.mxu0 0.0
        %3070 = vmatprep.subr.mxu0 0.0
        %3071 = vmatpush2.msra.mxu0 0.0
        %3072 = vmatprep.subr.mxu0 0.0
        %3073 = vmatpush2.msra.mxu0 0.0
        %3074 = vmatprep.subr.mxu0 0.0
        %3075 = vmatpush2.msra.mxu0 0.0
        %3076 = vmatprep.subr.mxu0 0.0
        %3077 = vmatpush2.msra.mxu0 0.0
        %3078 = vmatprep.subr.mxu0 0.0
        %3079 = vmatpush2.msra.mxu0 0.0
        %3080 = vmatprep.subr.mxu0 0.0
        %3081 = vmatpush2.msra.mxu0 0.0
        %3082 = vmatprep.subr.mxu0 0.0
        %3083 = vmatpush2.msra.mxu0 0.0
        %3084 = vmatprep.subr.mxu0 0.0
        %3085 = vmatpush2.msra.mxu0 0.0
        %3086 = vmatprep.subr.mxu0 0.0
        %3087 = vmatpush2.msra.mxu0 0.0
        %3088 = vmatprep.subr.mxu0 0.0
        %3089 = vmatpush2.msra.mxu0 0.0
        %3090 = vmatprep.subr.mxu0 0.0
        %3091 = vmatpush2.msra.mxu0 0.0
        %3092 = vmatprep.subr.mxu0 0.0
        %3093 = vmatpush2.msra.mxu0 0.0
        %3094 = vmatprep.mubr.f32.mxu0 0.0
        %3095 = vmatmul.mubr.f32.gmra.mxu0 %v3024
        %v3096 = vpop.f32.mrf.mxu0
        %v3097 = vadd.f32 0.0, %v3096
        %v3098 = vpop.f32.mrf.mxu0
        %v3099 = vadd.f32 0.0, %v3098
        %3100 = vdwg.mxu0
        %v3101 = vadd.f32 %v2986, %v3097
        %v3102 = vadd.f32 %v2987, %v3099
        %v3103 = vld [vmem:[#allocation2 + $0x4] sm:$0xff]
        %v3104 = vld [vmem:[#allocation2 + $0xc] sm:$0xf]
        %s3105 = scalar_lea.vmem %s7, 39
        %v3106 = vld [vmem:[%s3105] ss:$8 sm:$0x3]
        %v3108 = vlaneseq
        %v3109 = vshrl.u32 %v3108, 7
        %v3110 = vsub.s32 0, %v3109
        %v3111 = vrot.slane %v3106, %v3110
        %v3112 = vlaneseq
        %v3113 = vshrl.u32 %v3112, 7
        %v3114 = vsub.s32 1, %v3113
        %v3115 = vrot.slane %v3106, %v3114
        %v3116 = vcombine.low %v3111, %v3115
        %3117 = vrot.lane.b32.xlu0 %v3116, 65
        %v3118 = vpop.permute.xlu0 %3117
        %v3119 = vrot.slane %v3118, 4
        %v3120 = vsel %vm863, %v3119, %v3118
        %v3123 = vmul.f32 %v3103, %v3120
        %v3124 = vmul.f32 %v3104, %v3119
        %s3125 = scalar_lea.vmem %s5, 184
        %v3126 = vld [vmem:[%s3125] sm:$0xff]
        %v3129 = vcombine.high %v3123, %v3123
        %3130 = vrot.lane.b32.xlu0 %v3123, 63
        %v3131 = vpop.permute.xlu0 %3130
        %3132 = vrot.lane.b32.xlu0 %v3129, 63
        %v3133 = vpop.permute.xlu0 %3132
        %3134 = vrot.lane.b32.xlu0 %v3124, 63
        %v3135 = vpop.permute.xlu0 %3134
        %v3136 = vsel %vm846, %v3131, %v3133
        %v3137 = vsel %vm846, %v3133, %v3135
        %v3139 = vsel %vm406, %v3126, 0
        %v3141 = vsel %vm410, %v3136, 0
        %v3143 = vsel %vm410, %v3137, 0
        %3145 = vmatprep.subr.mxu0 0.0
        %3146 = vmatpush1.msra.mxu0 0.0
        %3147 = vmatprep.subr.mxu0 0.0
        %3148 = vmatpush1.msra.mxu0 0.0
        %3149 = vmatprep.subr.mxu0 0.0
        %3150 = vmatpush1.msra.mxu0 0.0
        %3151 = vmatprep.subr.mxu0 0.0
        %3152 = vmatpush1.msra.mxu0 0.0
        %3153 = vmatprep.subr.mxu0 0.0
        %3154 = vmatpush1.msra.mxu0 0.0
        %3155 = vmatprep.subr.mxu0 0.0
        %3156 = vmatpush1.msra.mxu0 0.0
        %3157 = vmatprep.subr.mxu0 0.0
        %3158 = vmatpush1.msra.mxu0 0.0
        %3159 = vmatprep.subr.mxu0 0.0
        %3160 = vmatpush1.msra.mxu0 0.0
        %3161 = vmatprep.subr.mxu0 0.0
        %3162 = vmatpush1.msra.mxu0 0.0
        %3163 = vmatprep.subr.mxu0 0.0
        %3164 = vmatpush1.msra.mxu0 0.0
        %3165 = vmatprep.subr.mxu0 0.0
        %3166 = vmatpush1.msra.mxu0 0.0
        %3167 = vmatprep.subr.mxu0 0.0
        %3168 = vmatpush1.msra.mxu0 0.0
        %3169 = vmatprep.subr.mxu0 0.0
        %3170 = vmatpush1.msra.mxu0 0.0
        %3171 = vmatprep.subr.mxu0 0.0
        %3172 = vmatpush1.msra.mxu0 0.0
        %3173 = vmatprep.subr.mxu0 0.0
        %3174 = vmatpush1.msra.mxu0 0.0
        %3175 = vmatprep.subr.mxu0 %v3143
        %3176 = vmatpush1.msra.mxu0 %v3141
        %3177 = vmatprep.subr.mxu0 0.0
        %3178 = vmatpush2.msra.mxu0 0.0
        %3179 = vmatprep.subr.mxu0 0.0
        %3180 = vmatpush2.msra.mxu0 0.0
        %3181 = vmatprep.subr.mxu0 0.0
        %3182 = vmatpush2.msra.mxu0 0.0
        %3183 = vmatprep.subr.mxu0 0.0
        %3184 = vmatpush2.msra.mxu0 0.0
        %3185 = vmatprep.subr.mxu0 0.0
        %3186 = vmatpush2.msra.mxu0 0.0
        %3187 = vmatprep.subr.mxu0 0.0
        %3188 = vmatpush2.msra.mxu0 0.0
        %3189 = vmatprep.subr.mxu0 0.0
        %3190 = vmatpush2.msra.mxu0 0.0
        %3191 = vmatprep.subr.mxu0 0.0
        %3192 = vmatpush2.msra.mxu0 0.0
        %3193 = vmatprep.subr.mxu0 0.0
        %3194 = vmatpush2.msra.mxu0 0.0
        %3195 = vmatprep.subr.mxu0 0.0
        %3196 = vmatpush2.msra.mxu0 0.0
        %3197 = vmatprep.subr.mxu0 0.0
        %3198 = vmatpush2.msra.mxu0 0.0
        %3199 = vmatprep.subr.mxu0 0.0
        %3200 = vmatpush2.msra.mxu0 0.0
        %3201 = vmatprep.subr.mxu0 0.0
        %3202 = vmatpush2.msra.mxu0 0.0
        %3203 = vmatprep.subr.mxu0 0.0
        %3204 = vmatpush2.msra.mxu0 0.0
        %3205 = vmatprep.subr.mxu0 0.0
        %3206 = vmatpush2.msra.mxu0 0.0
        %3207 = vmatprep.subr.mxu0 0.0
        %3208 = vmatpush2.msra.mxu0 0.0
        %3209 = vmatprep.mubr.f32.mxu0 0.0
        %3210 = vmatmul.mubr.f32.gmra.mxu0 %v3139
        %v3211 = vpop.f32.mrf.mxu0
        %v3212 = vadd.f32 0.0, %v3211
        %v3213 = vpop.f32.mrf.mxu0
        %v3214 = vadd.f32 0.0, %v3213
        %3215 = vdwg.mxu0
        %v3216 = vadd.f32 %v3101, %v3212
        %v3217 = vadd.f32 %v3102, %v3214
        %v3218 = vld [vmem:[#allocation2 + $0x4] sm:$0xff]
        %v3219 = vld [vmem:[#allocation2 + $0xc] sm:$0xf]
        %s3220 = scalar_lea.vmem %s7, 48
        %v3221 = vld [vmem:[%s3220] ss:$8 sm:$0x3]
        %v3223 = vlaneseq
        %v3224 = vshrl.u32 %v3223, 7
        %v3225 = vsub.s32 0, %v3224
        %v3226 = vrot.slane %v3221, %v3225
        %v3227 = vlaneseq
        %v3228 = vshrl.u32 %v3227, 7
        %v3229 = vsub.s32 1, %v3228
        %v3230 = vrot.slane %v3221, %v3229
        %v3231 = vcombine.low %v3226, %v3230
        %3232 = vrot.lane.b32.xlu0 %v3231, 71
        %v3233 = vpop.permute.xlu0 %3232
        %v3234 = vrot.slane %v3233, 4
        %v3235 = vsel %vm746, %v3234, %v3233
        %v3238 = vmul.f32 %v3218, %v3235
        %v3239 = vmul.f32 %v3219, %v3234
        %s3240 = scalar_lea.vmem %s5, 192
        %v3241 = vld [vmem:[%s3240] sm:$0xff]
        %v3244 = vcombine.high %v3238, %v3238
        %3245 = vrot.lane.b32.xlu0 %v3238, 57
        %v3246 = vpop.permute.xlu0 %3245
        %3247 = vrot.lane.b32.xlu0 %v3244, 57
        %v3248 = vpop.permute.xlu0 %3247
        %3249 = vrot.lane.b32.xlu0 %v3239, 57
        %v3250 = vpop.permute.xlu0 %3249
        %v3251 = vsel %vm729, %v3246, %v3248
        %v3252 = vsel %vm729, %v3248, %v3250
        %v3254 = vsel %vm406, %v3241, 0
        %v3256 = vsel %vm410, %v3251, 0
        %v3258 = vsel %vm410, %v3252, 0
        %3260 = vmatprep.subr.mxu0 0.0
        %3261 = vmatpush1.msra.mxu0 0.0
        %3262 = vmatprep.subr.mxu0 0.0
        %3263 = vmatpush1.msra.mxu0 0.0
        %3264 = vmatprep.subr.mxu0 0.0
        %3265 = vmatpush1.msra.mxu0 0.0
        %3266 = vmatprep.subr.mxu0 0.0
        %3267 = vmatpush1.msra.mxu0 0.0
        %3268 = vmatprep.subr.mxu0 0.0
        %3269 = vmatpush1.msra.mxu0 0.0
        %3270 = vmatprep.subr.mxu0 0.0
        %3271 = vmatpush1.msra.mxu0 0.0
        %3272 = vmatprep.subr.mxu0 0.0
        %3273 = vmatpush1.msra.mxu0 0.0
        %3274 = vmatprep.subr.mxu0 0.0
        %3275 = vmatpush1.msra.mxu0 0.0
        %3276 = vmatprep.subr.mxu0 0.0
        %3277 = vmatpush1.msra.mxu0 0.0
        %3278 = vmatprep.subr.mxu0 0.0
        %3279 = vmatpush1.msra.mxu0 0.0
        %3280 = vmatprep.subr.mxu0 0.0
        %3281 = vmatpush1.msra.mxu0 0.0
        %3282 = vmatprep.subr.mxu0 0.0
        %3283 = vmatpush1.msra.mxu0 0.0
        %3284 = vmatprep.subr.mxu0 0.0
        %3285 = vmatpush1.msra.mxu0 0.0
        %3286 = vmatprep.subr.mxu0 0.0
        %3287 = vmatpush1.msra.mxu0 0.0
        %3288 = vmatprep.subr.mxu0 0.0
        %3289 = vmatpush1.msra.mxu0 0.0
        %3290 = vmatprep.subr.mxu0 %v3258
        %3291 = vmatpush1.msra.mxu0 %v3256
        %3292 = vmatprep.subr.mxu0 0.0
        %3293 = vmatpush2.msra.mxu0 0.0
        %3294 = vmatprep.subr.mxu0 0.0
        %3295 = vmatpush2.msra.mxu0 0.0
        %3296 = vmatprep.subr.mxu0 0.0
        %3297 = vmatpush2.msra.mxu0 0.0
        %3298 = vmatprep.subr.mxu0 0.0
        %3299 = vmatpush2.msra.mxu0 0.0
        %3300 = vmatprep.subr.mxu0 0.0
        %3301 = vmatpush2.msra.mxu0 0.0
        %3302 = vmatprep.subr.mxu0 0.0
        %3303 = vmatpush2.msra.mxu0 0.0
        %3304 = vmatprep.subr.mxu0 0.0
        %3305 = vmatpush2.msra.mxu0 0.0
        %3306 = vmatprep.subr.mxu0 0.0
        %3307 = vmatpush2.msra.mxu0 0.0
        %3308 = vmatprep.subr.mxu0 0.0
        %3309 = vmatpush2.msra.mxu0 0.0
        %3310 = vmatprep.subr.mxu0 0.0
        %3311 = vmatpush2.msra.mxu0 0.0
        %3312 = vmatprep.subr.mxu0 0.0
        %3313 = vmatpush2.msra.mxu0 0.0
        %3314 = vmatprep.subr.mxu0 0.0
        %3315 = vmatpush2.msra.mxu0 0.0
        %3316 = vmatprep.subr.mxu0 0.0
        %3317 = vmatpush2.msra.mxu0 0.0
        %3318 = vmatprep.subr.mxu0 0.0
        %3319 = vmatpush2.msra.mxu0 0.0
        %3320 = vmatprep.subr.mxu0 0.0
        %3321 = vmatpush2.msra.mxu0 0.0
        %3322 = vmatprep.subr.mxu0 0.0
        %3323 = vmatpush2.msra.mxu0 0.0
        %3324 = vmatprep.mubr.f32.mxu0 0.0
        %3325 = vmatmul.mubr.f32.gmra.mxu0 %v3254
        %v3326 = vpop.f32.mrf.mxu0
        %v3327 = vadd.f32 0.0, %v3326
        %v3328 = vpop.f32.mrf.mxu0
        %v3329 = vadd.f32 0.0, %v3328
        %3330 = vdwg.mxu0
        %v3331 = vadd.f32 %v3216, %v3327
        %v3332 = vadd.f32 %v3217, %v3329
        %v3333 = vld [vmem:[#allocation2 + $0x4] sm:$0xff]
        %v3334 = vld [vmem:[#allocation2 + $0xc] sm:$0xf]
        %s3335 = scalar_lea.vmem %s7, 49
        %v3336 = vld [vmem:[%s3335] ss:$8 sm:$0x3]
        %v3338 = vlaneseq
        %v3339 = vshrl.u32 %v3338, 7
        %v3340 = vsub.s32 0, %v3339
        %v3341 = vrot.slane %v3336, %v3340
        %v3342 = vlaneseq
        %v3343 = vshrl.u32 %v3342, 7
        %v3344 = vsub.s32 1, %v3343
        %v3345 = vrot.slane %v3336, %v3344
        %v3346 = vcombine.low %v3341, %v3345
        %3347 = vrot.lane.b32.xlu0 %v3346, 72
        %v3348 = vpop.permute.xlu0 %3347
        %v3349 = vrot.slane %v3348, 4
        %v3350 = vsel %vm541, %v3349, %v3348
        %v3353 = vmul.f32 %v3333, %v3350
        %v3354 = vmul.f32 %v3334, %v3349
        %s3355 = scalar_lea.vmem %s5, 200
        %v3356 = vld [vmem:[%s3355] sm:$0xff]
        %v3359 = vcombine.high %v3353, %v3353
        %3360 = vrot.lane.b32.xlu0 %v3353, 56
        %v3361 = vpop.permute.xlu0 %3360
        %3362 = vrot.lane.b32.xlu0 %v3359, 56
        %v3363 = vpop.permute.xlu0 %3362
        %3364 = vrot.lane.b32.xlu0 %v3354, 56
        %v3365 = vpop.permute.xlu0 %3364
        %v3366 = vsel %vm524, %v3361, %v3363
        %v3367 = vsel %vm524, %v3363, %v3365
        %v3369 = vsel %vm406, %v3356, 0
        %v3371 = vsel %vm410, %v3366, 0
        %v3373 = vsel %vm410, %v3367, 0
        %3375 = vmatprep.subr.mxu0 0.0
        %3376 = vmatpush1.msra.mxu0 0.0
        %3377 = vmatprep.subr.mxu0 0.0
        %3378 = vmatpush1.msra.mxu0 0.0
        %3379 = vmatprep.subr.mxu0 0.0
        %3380 = vmatpush1.msra.mxu0 0.0
        %3381 = vmatprep.subr.mxu0 0.0
        %3382 = vmatpush1.msra.mxu0 0.0
        %3383 = vmatprep.subr.mxu0 0.0
        %3384 = vmatpush1.msra.mxu0 0.0
        %3385 = vmatprep.subr.mxu0 0.0
        %3386 = vmatpush1.msra.mxu0 0.0
        %3387 = vmatprep.subr.mxu0 0.0
        %3388 = vmatpush1.msra.mxu0 0.0
        %3389 = vmatprep.subr.mxu0 0.0
        %3390 = vmatpush1.msra.mxu0 0.0
        %3391 = vmatprep.subr.mxu0 0.0
        %3392 = vmatpush1.msra.mxu0 0.0
        %3393 = vmatprep.subr.mxu0 0.0
        %3394 = vmatpush1.msra.mxu0 0.0
        %3395 = vmatprep.subr.mxu0 0.0
        %3396 = vmatpush1.msra.mxu0 0.0
        %3397 = vmatprep.subr.mxu0 0.0
        %3398 = vmatpush1.msra.mxu0 0.0
        %3399 = vmatprep.subr.mxu0 0.0
        %3400 = vmatpush1.msra.mxu0 0.0
        %3401 = vmatprep.subr.mxu0 0.0
        %3402 = vmatpush1.msra.mxu0 0.0
        %3403 = vmatprep.subr.mxu0 0.0
        %3404 = vmatpush1.msra.mxu0 0.0
        %3405 = vmatprep.subr.mxu0 %v3373
        %3406 = vmatpush1.msra.mxu0 %v3371
        %3407 = vmatprep.subr.mxu0 0.0
        %3408 = vmatpush2.msra.mxu0 0.0
        %3409 = vmatprep.subr.mxu0 0.0
        %3410 = vmatpush2.msra.mxu0 0.0
        %3411 = vmatprep.subr.mxu0 0.0
        %3412 = vmatpush2.msra.mxu0 0.0
        %3413 = vmatprep.subr.mxu0 0.0
        %3414 = vmatpush2.msra.mxu0 0.0
        %3415 = vmatprep.subr.mxu0 0.0
        %3416 = vmatpush2.msra.mxu0 0.0
        %3417 = vmatprep.subr.mxu0 0.0
        %3418 = vmatpush2.msra.mxu0 0.0
        %3419 = vmatprep.subr.mxu0 0.0
        %3420 = vmatpush2.msra.mxu0 0.0
        %3421 = vmatprep.subr.mxu0 0.0
        %3422 = vmatpush2.msra.mxu0 0.0
        %3423 = vmatprep.subr.mxu0 0.0
        %3424 = vmatpush2.msra.mxu0 0.0
        %3425 = vmatprep.subr.mxu0 0.0
        %3426 = vmatpush2.msra.mxu0 0.0
        %3427 = vmatprep.subr.mxu0 0.0
        %3428 = vmatpush2.msra.mxu0 0.0
        %3429 = vmatprep.subr.mxu0 0.0
        %3430 = vmatpush2.msra.mxu0 0.0
        %3431 = vmatprep.subr.mxu0 0.0
        %3432 = vmatpush2.msra.mxu0 0.0
        %3433 = vmatprep.subr.mxu0 0.0
        %3434 = vmatpush2.msra.mxu0 0.0
        %3435 = vmatprep.subr.mxu0 0.0
        %3436 = vmatpush2.msra.mxu0 0.0
        %3437 = vmatprep.subr.mxu0 0.0
        %3438 = vmatpush2.msra.mxu0 0.0
        %3439 = vmatprep.mubr.f32.mxu0 0.0
        %3440 = vmatmul.mubr.f32.gmra.mxu0 %v3369
        %v3441 = vpop.f32.mrf.mxu0
        %v3442 = vadd.f32 0.0, %v3441
        %v3443 = vpop.f32.mrf.mxu0
        %v3444 = vadd.f32 0.0, %v3443
        %3445 = vdwg.mxu0
        %v3446 = vadd.f32 %v3331, %v3442
        %v3447 = vadd.f32 %v3332, %v3444
        %v3448 = vld [vmem:[#allocation2 + $0x4] sm:$0xff]
        %v3449 = vld [vmem:[#allocation2 + $0xc] sm:$0xf]
        %s3450 = scalar_lea.vmem %s7, 50
        %v3451 = vld [vmem:[%s3450] ss:$8 sm:$0x3]
        %v3453 = vlaneseq
        %v3454 = vshrl.u32 %v3453, 7
        %v3455 = vsub.s32 0, %v3454
        %v3456 = vrot.slane %v3451, %v3455
        %v3457 = vlaneseq
        %v3458 = vshrl.u32 %v3457, 7
        %v3459 = vsub.s32 1, %v3458
        %v3460 = vrot.slane %v3451, %v3459
        %v3461 = vcombine.low %v3456, %v3460
        %3462 = vrot.lane.b32.xlu0 %v3461, 73
        %v3463 = vpop.permute.xlu0 %3462
        %v3464 = vrot.slane %v3463, 4
        %v3465 = vsel %vm631, %v3464, %v3463
        %v3468 = vmul.f32 %v3448, %v3465
        %v3469 = vmul.f32 %v3449, %v3464
        %s3470 = scalar_lea.vmem %s5, 208
        %v3471 = vld [vmem:[%s3470] sm:$0xff]
        %v3474 = vcombine.high %v3468, %v3468
        %3475 = vrot.lane.b32.xlu0 %v3468, 55
        %v3476 = vpop.permute.xlu0 %3475
        %3477 = vrot.lane.b32.xlu0 %v3474, 55
        %v3478 = vpop.permute.xlu0 %3477
        %3479 = vrot.lane.b32.xlu0 %v3469, 55
        %v3480 = vpop.permute.xlu0 %3479
        %v3481 = vsel %vm502, %v3476, %v3478
        %v3482 = vsel %vm502, %v3478, %v3480
        %v3484 = vsel %vm406, %v3471, 0
        %v3486 = vsel %vm410, %v3481, 0
        %v3488 = vsel %vm410, %v3482, 0
        %3490 = vmatprep.subr.mxu0 0.0
        %3491 = vmatpush1.msra.mxu0 0.0
        %3492 = vmatprep.subr.mxu0 0.0
        %3493 = vmatpush1.msra.mxu0 0.0
        %3494 = vmatprep.subr.mxu0 0.0
        %3495 = vmatpush1.msra.mxu0 0.0
        %3496 = vmatprep.subr.mxu0 0.0
        %3497 = vmatpush1.msra.mxu0 0.0
        %3498 = vmatprep.subr.mxu0 0.0
        %3499 = vmatpush1.msra.mxu0 0.0
        %3500 = vmatprep.subr.mxu0 0.0
        %3501 = vmatpush1.msra.mxu0 0.0
        %3502 = vmatprep.subr.mxu0 0.0
        %3503 = vmatpush1.msra.mxu0 0.0
        %3504 = vmatprep.subr.mxu0 0.0
        %3505 = vmatpush1.msra.mxu0 0.0
        %3506 = vmatprep.subr.mxu0 0.0
        %3507 = vmatpush1.msra.mxu0 0.0
        %3508 = vmatprep.subr.mxu0 0.0
        %3509 = vmatpush1.msra.mxu0 0.0
        %3510 = vmatprep.subr.mxu0 0.0
        %3511 = vmatpush1.msra.mxu0 0.0
        %3512 = vmatprep.subr.mxu0 0.0
        %3513 = vmatpush1.msra.mxu0 0.0
        %3514 = vmatprep.subr.mxu0 0.0
        %3515 = vmatpush1.msra.mxu0 0.0
        %3516 = vmatprep.subr.mxu0 0.0
        %3517 = vmatpush1.msra.mxu0 0.0
        %3518 = vmatprep.subr.mxu0 0.0
        %3519 = vmatpush1.msra.mxu0 0.0
        %3520 = vmatprep.subr.mxu0 %v3488
        %3521 = vmatpush1.msra.mxu0 %v3486
        %3522 = vmatprep.subr.mxu0 0.0
        %3523 = vmatpush2.msra.mxu0 0.0
        %3524 = vmatprep.subr.mxu0 0.0
        %3525 = vmatpush2.msra.mxu0 0.0
        %3526 = vmatprep.subr.mxu0 0.0
        %3527 = vmatpush2.msra.mxu0 0.0
        %3528 = vmatprep.subr.mxu0 0.0
        %3529 = vmatpush2.msra.mxu0 0.0
        %3530 = vmatprep.subr.mxu0 0.0
        %3531 = vmatpush2.msra.mxu0 0.0
        %3532 = vmatprep.subr.mxu0 0.0
        %3533 = vmatpush2.msra.mxu0 0.0
        %3534 = vmatprep.subr.mxu0 0.0
        %3535 = vmatpush2.msra.mxu0 0.0
        %3536 = vmatprep.subr.mxu0 0.0
        %3537 = vmatpush2.msra.mxu0 0.0
        %3538 = vmatprep.subr.mxu0 0.0
        %3539 = vmatpush2.msra.mxu0 0.0
        %3540 = vmatprep.subr.mxu0 0.0
        %3541 = vmatpush2.msra.mxu0 0.0
        %3542 = vmatprep.subr.mxu0 0.0
        %3543 = vmatpush2.msra.mxu0 0.0
        %3544 = vmatprep.subr.mxu0 0.0
        %3545 = vmatpush2.msra.mxu0 0.0
        %3546 = vmatprep.subr.mxu0 0.0
        %3547 = vmatpush2.msra.mxu0 0.0
        %3548 = vmatprep.subr.mxu0 0.0
        %3549 = vmatpush2.msra.mxu0 0.0
        %3550 = vmatprep.subr.mxu0 0.0
        %3551 = vmatpush2.msra.mxu0 0.0
        %3552 = vmatprep.subr.mxu0 0.0
        %3553 = vmatpush2.msra.mxu0 0.0
        %3554 = vmatprep.mubr.f32.mxu0 0.0
        %3555 = vmatmul.mubr.f32.gmra.mxu0 %v3484
        %v3556 = vpop.f32.mrf.mxu0
        %v3557 = vadd.f32 0.0, %v3556
        %v3558 = vpop.f32.mrf.mxu0
        %v3559 = vadd.f32 0.0, %v3558
        %3560 = vdwg.mxu0
        %v3561 = vadd.f32 %v3446, %v3557
        %v3562 = vadd.f32 %v3447, %v3559
        %v3563 = vld [vmem:[%s6] sm:$0xff]
        %3565 = vset.pattern.permute.xlu0 0
        %3566 = vperm.xlu0 %3565, %v3563
        %v3567 = vpop.permute.xlu0 %3566
        %v3569 = vadd.f32 %v3561, %v3567
        %v3570 = vadd.f32 %v3562, %v3567
        %v3571 = vadd.f32 %v482, %v304
        %v3572 = vadd.f32 %v484, %v305
        %v3573 = vadd.f32 %v3569, %v306
        %v3574 = vadd.f32 %v3570, %v307
        %v3575 = vmax.f32 %v3571, 0.0
        %v3576 = vmax.f32 %v3572, 0.0
        %v3577 = vmax.f32 %v3573, 0.0
        %v3578 = vmax.f32 %v3574, 0.0
        %3579 = vst [vmem:[%s298] sm:$0xff] %v3575
        %3580 = vst [vmem:[%s298 + $0x8] sm:$0xff] %v3576
        %3581 = vst [vmem:[%s298 + $0x10] sm:$0xff] %v3577
        %3582 = vst [vmem:[%s298 + $0x18] sm:$0xff] %v3578
        %s3583 = sand.u32 %s203, 1
        %s3584 = scalar_lea.sflag [#allocation4], %s3583
        %s3585 = sand.u32 %s203, 1
        %s3586 = smul.addr %s3585, 32
        %s3587 = scalar_lea.vmem [#allocation3], %s3586
        // Predicated region
        $region53: #{tpu_custom_call.1} parent=51 // pred_check
          %p3588 = pneg %p213
        $region54: #{tpu_custom_call.1} parent=51 // pred_check_branch
          %3590 = sbr.rel (%p3588) target = $region56
        $region55: #{tpu_custom_call.1} parent=51 // pred_region
          %s3592 = ssub.s32 512, 512
          %3593 = vsyncadd %s3584, %s3592
          %s3594 = smul.addr %s22, 4
          %s3595 = smul.addr %s3594, 128
          %s3596 = scalar_lea.hbm %s8, %s3595
          %s3597 = sshll.u32 %s3587, 4
          %s3598 = int_to_ptr.vmem [resolvable:$true] %s3597
          %3603 = dma.vmem_to_hbm [thread:$0]  %s3598, 512, %s3596, %s3584, 256, 256, 16
        $region56: #{tpu_custom_call.1} parent=51 // pred_fallthru
          _
      $region52: #{tpu_custom_call.1} parent=5 // pred_fallthru
        _
      %p3604 = scmp.le.s32.totalorder 2, %s17
      // Predicated region
      $region57: #{tpu_custom_call.1} parent=5 // pred_check
        %p3605 = pneg %p3604
      $region58: #{tpu_custom_call.1} parent=5 // pred_check_branch
        %3607 = sbr.rel (%p3605) target = $region60
      $region59: #{tpu_custom_call.1} parent=5 // pred_region
        %s3608 = ssub.s32 %s17, 2
        // Predicated region
        $region61: #{tpu_custom_call.1} parent=59 // pred_check
          %p3609 = pneg %p219
        $region62: #{tpu_custom_call.1} parent=59 // pred_check_branch
          %3611 = sbr.rel (%p3609) target = $region64
        $region63: #{tpu_custom_call.1} parent=59 // pred_region
          %s3612 = sand.u32 %s204, 1
          %s3613 = scalar_lea.sflag [#allocation4], %s3612
          %s3614 = sand.u32 %s204, 1
          %s3615 = smul.addr %s3614, 32
          %s3616 = scalar_lea.vmem [#allocation3], %s3615
          %3617 = dma.done %s3613, 512
        $region64: #{tpu_custom_call.1} parent=59 // pred_fallthru
          _
      $region60: #{tpu_custom_call.1} parent=5 // pred_fallthru
        _
    $region6: #{tpu_custom_call.1} parent=1 // loop_footer
      %s21 = sadd.s32 1, %s17
    $region7: #{tpu_custom_call.1} parent=1 // loop_footer_branch
      %16 = sbr.rel target = $region3
    $region8: #{tpu_custom_call.1} parent=1 // loop_exit
      _
    %3618 = vsyncpa [#allocation4], 1
    %s3619 = scalar_lea.sflag [#allocation4], 1
    %3620 = vsyncpa %s3619, 1

</llo_original>
